<compile_context>
chip_gen: v7x
topology: tpu7x:2x2x1
jax: 0.10.0
libtpu: 0.0.40
codegen_flags: <defaults>
</compile_context>

<pallas_src>
import functools

import jax
import jax.numpy as jnp
from jax.experimental import pallas as pl
from jax.experimental.pallas import tpu as pltpu

_SQRT1_2 = 0.7071067811865476


def _round_up(n, m):
    return ((n + m - 1) // m) * m


def _pick_block_bs(bs, max_block=16):
    # Largest divisor of bs that keeps >= 2 grid steps (feeds both v7x TCs).
    # On single-core v5e/v6e a bigger block (fewer steps) is slightly better --
    # pass block_bs explicitly there if desired.
    divs = [d for d in range(1, min(bs, max_block) + 1) if bs % d == 0]
    multi = [d for d in divs if bs // d >= 2]
    return max(multi) if multi else max(divs)


def _default_vmem_limit():
    # Generation-aware scoped-VMEM limit: ~75% of per-core capacity
    # (~96 MiB on v5e/v6e, ~48 MiB on v7x).  Fall back to compiler default.
    try:
        info = pltpu.get_tpu_info()
        cap = getattr(info, "vmem_capacity_bytes", None)
        if cap:
            return int(cap * 0.75)
    except Exception:
        pass
    return None


def _erf_approx(x):
    # Abramowitz & Stegun 7.1.26 polynomial, |err| < 1.5e-7 vs exact erf.
    a1, a2, a3, a4, a5 = 0.254829592, -0.284496736, 1.421413741, -1.453152027, 1.061405429
    p = 0.3275911
    ax = jnp.abs(x)
    t = pl.reciprocal(1.0 + p * ax, approx=True)          # EUP, frees VALU
    poly = ((((a5 * t + a4) * t + a3) * t + a2) * t + a1) * t
    res = 1.0 - poly * jnp.exp(-ax * ax)
    return jnp.where(x >= 0, res, -res)


def _gelu(x):
    return 0.5 * x * (1.0 + _erf_approx(x * _SQRT1_2))


def _layernorm(x, gamma, beta, eps=1e-5):
    m = jnp.mean(x, axis=-1, keepdims=True)
    v = jnp.mean((x - m) ** 2, axis=-1, keepdims=True)
    return (x - m) * jax.lax.rsqrt(v + eps) * gamma + beta


def token_learner_kernel(
    x_ref,                       # [Bblk, seq_pad, feat_dim]  (cls first, zero-padded rows)
    ap_w1, ap_w2,                # att_proj linears           [feat_dim,C], [C,C]
    cv1_w, cv2_w,                # attn-map 1x1 convs         [C,C] blockdiag or [G,Cg,Cg]; [C,T]
    ch_w1, ch_w2,                # channel-mix FFN            [C,8C], [8C,C]
    tok_w1t, tok_w2t,            # token-mix FFN (pre-transposed, padded) [td_pad,P_pad],[P_pad,td_pad]
    vec_c,                       # packed per-channel vectors [9, C]
    ch_b1,                       # channel-mix hidden bias    [1, 8C]
    tok_b,                       # packed token-mix col bias  [td_pad+P_pad, 1]
    out_ref,                     # [Bblk, P_pad, C]
    *, seq_real, num_groups, split_groups,
):
    f32 = jnp.float32
    Bblk, seq_pad, feat_dim = x_ref.shape
    P_pad, C = out_ref.shape[1], out_ref.shape[2]
    T = cv2_w.shape[1]
    P = T + 1
    td_pad = tok_w1t.shape[0]
    Cg = C // num_groups

    # --- unpack the packed small vectors (one load each) ---
    vc = vec_c[...]
    ap_b1 = vc[0:1, :]; ap_b2 = vc[1:2, :]
    nrm_g = vc[2:3, :]; nrm_b = vc[3:4, :]
    ln1_g = vc[4:5, :]; ln1_b = vc[5:6, :]
    ln2_g = vc[6:7, :]; ln2_b = vc[7:8, :]
    ch_b2 = vc[8:9, :]
    tb = tok_b[...]
    tok_b1c = tb[0:td_pad, :]                  # [td_pad, 1]  (padded rows zero)
    tok_b2c = tb[td_pad:td_pad + P_pad, :]     # [P_pad, 1]   (padded rows zero)

    def mm(a, w_ref):
        w = w_ref[...]
        return jnp.dot(a.astype(w.dtype), w, preferred_element_type=f32)

    # --- att_proj on the whole (batch*seq_pad) slab (free reshape: seq_pad % 8 == 0) ---
    x_all = x_ref[...].reshape(Bblk * seq_pad, feat_dim)
    h = jnp.maximum(mm(x_all, ap_w1) + ap_b1, 0.0)            # ReLU (dropout = id)
    proj = mm(h, ap_w2) + ap_b2                               # [Bblk*seq_pad, C] f32

    # --- spatial attention logits (per-pixel channel mixes, batch-folded) ---
    sel = _layernorm(proj, nrm_g, nrm_b)
    if split_groups:
        # production path (Cg % 128 == 0): per-group lane-aligned matmuls, no zeros on the MXU
        cw = cv1_w[...]                                       # [G, Cg, Cg]
        parts = [jnp.dot(sel[:, g * Cg:(g + 1) * Cg].astype(cw.dtype), cw[g],
                         preferred_element_type=f32) for g in range(num_groups)]
        sel2 = jnp.concatenate(parts, axis=-1)
    else:
        sel2 = mm(sel, cv1_w)                                 # block-diagonal [C, C]
    amap = mm(sel2, cv2_w)                                    # [Bblk*seq_pad, T]

    proj3 = proj.reshape(Bblk, seq_pad, C)
    amap3 = amap.reshape(Bblk, seq_pad, T)

    # mask the cls row (position 0) AND the zero-padded spatial rows, softmax over seq
    srow = jax.lax.broadcasted_iota(jnp.int32, (seq_pad, T), 0)
    invalid = ((srow == 0) | (srow >= seq_real))[None, :, :]
    amap3 = jnp.where(invalid, f32(-1e30), amap3)
    amax = jnp.max(amap3, axis=1, keepdims=True)
    aexp = jnp.exp(amap3 - amax)
    attn = aexp * pl.reciprocal(jnp.sum(aexp, axis=1, keepdims=True), approx=True)

    # --- batched token aggregation: [Bblk,seq,T] x [Bblk,seq,C] -> [Bblk,T,C] ---
    toks = jax.lax.dot_general(attn, proj3, (((1,), (1,)), ((0,), (0,))),
                               preferred_element_type=f32)

    # --- assemble [cls, tokens, zero-pad] along the patch axis (single concat) ---
    pieces = [proj3[:, 0:1, :], toks]
    if P_pad > P:
        pieces.append(jnp.zeros((Bblk, P_pad - P, C), f32))
    y0_3 = jnp.concatenate(pieces, axis=1)                    # [Bblk, P_pad, C]
    y0 = y0_3.reshape(Bblk * P_pad, C)

    # --- MixerBlock: token mixing, batch-folded to N = Bblk*C ---
    yn1 = _layernorm(y0, ln1_g, ln1_b)
    ynT = jnp.transpose(yn1.reshape(Bblk, P_pad, C), (1, 0, 2)).reshape(P_pad, Bblk * C)
    w1t = tok_w1t[...]
    w2t = tok_w2t[...]
    t1t = jnp.dot(w1t, ynT.astype(w1t.dtype), preferred_element_type=f32) + tok_b1c
    t1t = _gelu(t1t)                                          # padded rows stay exactly 0
    t2t = jnp.dot(w2t, t1t.astype(w2t.dtype), preferred_element_type=f32) + tok_b2c
    t2 = jnp.transpose(t2t.reshape(P_pad, Bblk, C), (1, 0, 2)).reshape(Bblk * P_pad, C)
    y1 = y0 + t2                                              # padded rows remain zero

    # --- MixerBlock: channel mixing (batch folded into M).  NOTE: the P_pad-P
    # all-zero rows per image also flow through here (ln2 output = beta) and are
    # discarded by the wrapper slice -- accepted waste, numerically safe. ---
    yn2 = _layernorm(y1, ln2_g, ln2_b)
    c1 = _gelu(mm(yn2, ch_w1) + ch_b1[...])
    c2 = mm(c1, ch_w2) + ch_b2
    y = y1 + c2

    out_ref[...] = y.reshape(Bblk, P_pad, C).astype(out_ref.dtype)


def _prepare_kernel_weights(p, num_groups, weight_dtype):
    """One-time layout plumbing: grouped-conv weight (split or block-diag),
    pre-transposed / zero-padded token-mix weights, packed bias slabs, bf16 cast."""
    C = p["ap_w2"].shape[1]
    T = p["conv2_w"].shape[0]
    P = T + 1
    P_pad = _round_up(P, 8)
    token_dim = p["tok_w1"].shape[1]
    td_pad = _round_up(token_dim, 8)
    G = num_groups
    Cg = C // G

    # grouped 1x1 conv: split into per-group [Cg,Cg] blocks when lane-aligned,
    # else a block-diagonal [C_in, C_out] matmul weight
    split_groups = (G > 1) and (Cg % 128 == 0)
    if split_groups:
        cv1 = jnp.stack([p["conv1_w"][g * Cg:(g + 1) * Cg, :].T for g in range(G)], axis=0)
    else:
        cv1 = jnp.zeros((C, C), jnp.float32)
        for g in range(G):
            blk = p["conv1_w"][g * Cg:(g + 1) * Cg, :]        # [out_local, in_local]
            cv1 = cv1.at[g * Cg:(g + 1) * Cg, g * Cg:(g + 1) * Cg].set(blk.T)
    cv2 = p["conv2_w"].T                                      # [C, T]

    # token-mix weights: pre-transposed + zero-padded on both axes (all 8-aligned)
    w1t = jnp.zeros((td_pad, P_pad), jnp.float32).at[:token_dim, :P].set(p["tok_w1"].T)
    w2t = jnp.zeros((P_pad, td_pad), jnp.float32).at[:P, :token_dim].set(p["tok_w2"].T)

    # packed per-channel vectors [9, C] (kept f32: added to f32 accumulators)
    vec_c = jnp.stack([p["ap_b1"], p["ap_b2"], p["nrm_g"], p["nrm_b"],
                       p["ln1_g"], p["ln1_b"], p["ln2_g"], p["ln2_b"],
                       p["ch_b2"]], axis=0)
    ch_b1 = p["ch_b1"][None, :]

    # packed column biases for the (transposed) token mix
    tok_b = jnp.zeros((td_pad + P_pad, 1), jnp.float32)
    tok_b = tok_b.at[:token_dim, 0].set(p["tok_b1"])
    tok_b = tok_b.at[td_pad:td_pad + P, 0].set(p["tok_b2"])

    def cast(w):  # matmul weights stored narrow (MXU rounds operands anyway)
        return w.astype(weight_dtype)

    weights = (cast(p["ap_w1"]), cast(p["ap_w2"]), cast(cv1), cast(cv2),
               cast(p["ch_w1"]), cast(p["ch_w2"]), cast(w1t), cast(w2t),
               vec_c, ch_b1, tok_b)
    return weights, P, P_pad, split_groups


def token_learner_forward(x, params, num_groups, *, block_bs=None,
                          weight_dtype=jnp.bfloat16, x_dtype=jnp.bfloat16,
                          vmem_limit_bytes=None):
    bs, seq, feat_dim = x.shape
    C = params["ap_w2"].shape[1]
    weights, P, P_pad, split_groups = _prepare_kernel_weights(params, num_groups, weight_dtype)

    # pad seq to a multiple of 8 so the in-kernel batch-fold reshapes are free views
    seq_pad = _round_up(seq, 8)
    if seq_pad != seq:
        x = jnp.pad(x, ((0, 0), (0, seq_pad - seq), (0, 0)))
    x = x.astype(x_dtype)

    if block_bs is None:
        block_bs = _pick_block_bs(bs)
    assert bs % block_bs == 0, (bs, block_bs)
    grid = (bs // block_bs,)

    if vmem_limit_bytes is None:
        vmem_limit_bytes = _default_vmem_limit()

    kernel = functools.partial(token_learner_kernel, seq_real=seq,
                               num_groups=num_groups, split_groups=split_groups)

    def build(single_buffer_weights):
        def const_spec(arr):
            if single_buffer_weights:
                return pl.BlockSpec(arr.shape, lambda g: (0,) * arr.ndim,
                                    pipeline_mode=pl.Buffered(1))
            return pl.BlockSpec(arr.shape, lambda g: (0,) * arr.ndim)

        return pl.pallas_call(
            kernel,
            out_shape=jax.ShapeDtypeStruct((bs, P_pad, C), jnp.float32),
            grid_spec=pltpu.PrefetchScalarGridSpec(
                num_scalar_prefetch=0,
                grid=grid,
                in_specs=[pl.BlockSpec((block_bs, seq_pad, feat_dim), lambda g: (g, 0, 0))]
                         + [const_spec(wt) for wt in weights],
                out_specs=pl.BlockSpec((block_bs, P_pad, C), lambda g: (g, 0, 0)),
            ),
            compiler_params=pltpu.CompilerParams(
                dimension_semantics=("parallel",),
                vmem_limit_bytes=vmem_limit_bytes),
        )

    try:
        out = build(single_buffer_weights=True)(x, *weights)
    except Exception:
        # fallback if this JAX build rejects Buffered(1) on pallas_call inputs
        out = build(single_buffer_weights=False)(x, *weights)
    return out[:, :P, :]


def init_params(key, feat_dim, C, T, G):
    """Parameters in their natural (PyTorch-equivalent, x @ W) layout."""
    P = T + 1
    token_dim = P * 4
    channel_dim = C * 8
    ks = jax.random.split(key, 20)

    def w(k, shape, scale=0.05):
        return jax.random.normal(k, shape, jnp.float32) * scale

    p = {}
    p["ap_w1"] = w(ks[0], (feat_dim, C)); p["ap_b1"] = w(ks[1], (C,))
    p["ap_w2"] = w(ks[2], (C, C));        p["ap_b2"] = w(ks[3], (C,))
    p["nrm_g"] = 1.0 + w(ks[4], (C,), 0.1); p["nrm_b"] = w(ks[5], (C,), 0.1)
    p["conv1_w"] = w(ks[6], (C, C // G))    # Conv2d(C,C,1,groups=G): [out_c, in_per_group]
    p["conv2_w"] = w(ks[7], (T, C))         # Conv2d(C,T,1): [out_c, in_c]
    p["ln1_g"] = 1.0 + w(ks[8], (C,), 0.1); p["ln1_b"] = w(ks[9], (C,), 0.1)
    p["tok_w1"] = w(ks[10], (P, token_dim)); p["tok_b1"] = w(ks[11], (token_dim,))
    p["tok_w2"] = w(ks[12], (token_dim, P)); p["tok_b2"] = w(ks[13], (P,))
    p["ln2_g"] = 1.0 + w(ks[14], (C,), 0.1); p["ln2_b"] = w(ks[15], (C,), 0.1)
    p["ch_w1"] = w(ks[16], (C, channel_dim)); p["ch_b1"] = w(ks[17], (channel_dim,))
    p["ch_w2"] = w(ks[18], (channel_dim, C)); p["ch_b2"] = w(ks[19], (C,))
    return p


def reference_forward(x, p, num_groups):
    # Plain-JAX mirror of the PyTorch forward (eval mode).
    def ln(z, g, b):
        m = z.mean(-1, keepdims=True)
        v = ((z - m) ** 2).mean(-1, keepdims=True)
        return (z - m) / jnp.sqrt(v + 1e-5) * g + b

    h = jax.nn.relu(x @ p["ap_w1"] + p["ap_b1"])
    proj = h @ p["ap_w2"] + p["ap_b2"]
    cls_emb = proj[:, :1, :]
    feat = proj[:, 1:, :]                                    # [bs, hw, C]
    bs, hw, C = feat.shape
    G = num_groups
    Cg = C // G

    sel = ln(feat, p["nrm_g"], p["nrm_b"])
    wg = p["conv1_w"].reshape(G, Cg, Cg)                     # [G, out_local, in_local]
    sel = jnp.einsum("bhgi,goi->bhgo", sel.reshape(bs, hw, G, Cg), wg).reshape(bs, hw, C)
    amap = sel @ p["conv2_w"].T                              # [bs, hw, T]

    attn = jax.nn.softmax(jnp.swapaxes(amap, 1, 2), axis=-1)  # [bs, T, hw]
    toks = jnp.einsum("bti,bic->btc", attn, feat)
    y = jnp.concatenate([cls_emb, toks], axis=1)             # [bs, P, C]

    # MixerBlock
    yn = ln(y, p["ln1_g"], p["ln1_b"])
    yt = jnp.swapaxes(yn, 1, 2)                              # [bs, C, P]
    t1 = jax.nn.gelu(yt @ p["tok_w1"] + p["tok_b1"], approximate=False)
    t2 = t1 @ p["tok_w2"] + p["tok_b2"]
    y = y + jnp.swapaxes(t2, 1, 2)
    yn2 = ln(y, p["ln2_g"], p["ln2_b"])
    c1 = jax.nn.gelu(yn2 @ p["ch_w1"] + p["ch_b1"], approximate=False)
    c2 = c1 @ p["ch_w2"] + p["ch_b2"]
    return y + c2


if __name__ == "__main__":
    bs, feat_dim, C, T, G = 2, 32, 16, 8, 4
    h = w = 4
    seq = 1 + h * w                                          # cls token + spatial grid

    key = jax.random.PRNGKey(0)
    kx, kp = jax.random.split(key)
    x = jax.random.normal(kx, (bs, seq, feat_dim), jnp.float32)
    params = init_params(kp, feat_dim, C, T, G)

    out = token_learner_forward(x, params, num_groups=G)
    out = jax.block_until_ready(out)
    assert out.shape == (bs, T + 1, C), out.shape

    ref = reference_forward(x, params, num_groups=G)
    err = float(jnp.max(jnp.abs(out - ref)))
    # bf16 input/weight storage + default MXU precision + EUP approx reciprocal +
    # erf polynomial: expect O(1e-3) deviation from the f32 plain-JAX reference.
    assert bool(jnp.allclose(out, ref, atol=1e-2, rtol=2e-2)), err

    print("KERNEL_OK")
</pallas_src>

<mosaic_0001>
module attributes {stable_mosaic.version = 11 : i64} {
  func.func @token_learner_kernel(%arg0: i32, %arg1: memref<1x24x32xbf16, #tpu.memory_space<vmem>>, %arg2: memref<32x16xbf16, #tpu.memory_space<vmem>>, %arg3: memref<16x16xbf16, #tpu.memory_space<vmem>>, %arg4: memref<16x16xbf16, #tpu.memory_space<vmem>>, %arg5: memref<16x8xbf16, #tpu.memory_space<vmem>>, %arg6: memref<16x128xbf16, #tpu.memory_space<vmem>>, %arg7: memref<128x16xbf16, #tpu.memory_space<vmem>>, %arg8: memref<40x16xbf16, #tpu.memory_space<vmem>>, %arg9: memref<16x40xbf16, #tpu.memory_space<vmem>>, %arg10: memref<9x16xf32, #tpu.memory_space<vmem>>, %arg11: memref<1x128xf32, #tpu.memory_space<vmem>>, %arg12: memref<56x1xf32, #tpu.memory_space<vmem>>, %arg13: memref<1x16x16xf32, #tpu.memory_space<vmem>>) attributes {dimension_semantics = [#tpu.dimension_semantics<parallel>], iteration_bounds = array<i64: 2>, scalar_prefetch = 0 : i64, scratch_operands = 0 : i64, tpu.core_type = #tpu.core_type<tc>, window_params = [{transform_indices = @transform_0, window_bounds = array<i64: 1, 24, 32>}, {pipeline_mode = #tpu.pipeline_mode<synchronous>, transform_indices = @transform_1, window_bounds = array<i64: 32, 16>}, {pipeline_mode = #tpu.pipeline_mode<synchronous>, transform_indices = @transform_2, window_bounds = array<i64: 16, 16>}, {pipeline_mode = #tpu.pipeline_mode<synchronous>, transform_indices = @transform_3, window_bounds = array<i64: 16, 16>}, {pipeline_mode = #tpu.pipeline_mode<synchronous>, transform_indices = @transform_4, window_bounds = array<i64: 16, 8>}, {pipeline_mode = #tpu.pipeline_mode<synchronous>, transform_indices = @transform_5, window_bounds = array<i64: 16, 128>}, {pipeline_mode = #tpu.pipeline_mode<synchronous>, transform_indices = @transform_6, window_bounds = array<i64: 128, 16>}, {pipeline_mode = #tpu.pipeline_mode<synchronous>, transform_indices = @transform_7, window_bounds = array<i64: 40, 16>}, {pipeline_mode = #tpu.pipeline_mode<synchronous>, transform_indices = @transform_8, window_bounds = array<i64: 16, 40>}, {pipeline_mode = #tpu.pipeline_mode<synchronous>, transform_indices = @transform_9, window_bounds = array<i64: 9, 16>}, {pipeline_mode = #tpu.pipeline_mode<synchronous>, transform_indices = @transform_10, window_bounds = array<i64: 1, 128>}, {pipeline_mode = #tpu.pipeline_mode<synchronous>, transform_indices = @transform_11, window_bounds = array<i64: 56, 1>}, {transform_indices = @transform_12, window_bounds = array<i64: 1, 16, 16>}]} {
    %c0 = arith.constant 0 : index
    %c0_0 = arith.constant 0 : index
    %0 = vector.load %arg10[%c0, %c0_0] : memref<9x16xf32, #tpu.memory_space<vmem>>, vector<9x16xf32>
    %1 = vector.extract_strided_slice %0 {offsets = [0, 0], sizes = [1, 16], strides = [1, 1]} : vector<9x16xf32> to vector<1x16xf32>
    %2 = vector.extract_strided_slice %0 {offsets = [1, 0], sizes = [1, 16], strides = [1, 1]} : vector<9x16xf32> to vector<1x16xf32>
    %3 = vector.extract_strided_slice %0 {offsets = [2, 0], sizes = [1, 16], strides = [1, 1]} : vector<9x16xf32> to vector<1x16xf32>
    %4 = vector.extract_strided_slice %0 {offsets = [3, 0], sizes = [1, 16], strides = [1, 1]} : vector<9x16xf32> to vector<1x16xf32>
    %5 = vector.extract_strided_slice %0 {offsets = [4, 0], sizes = [1, 16], strides = [1, 1]} : vector<9x16xf32> to vector<1x16xf32>
    %6 = vector.extract_strided_slice %0 {offsets = [5, 0], sizes = [1, 16], strides = [1, 1]} : vector<9x16xf32> to vector<1x16xf32>
    %7 = vector.extract_strided_slice %0 {offsets = [6, 0], sizes = [1, 16], strides = [1, 1]} : vector<9x16xf32> to vector<1x16xf32>
    %8 = vector.extract_strided_slice %0 {offsets = [7, 0], sizes = [1, 16], strides = [1, 1]} : vector<9x16xf32> to vector<1x16xf32>
    %9 = vector.extract_strided_slice %0 {offsets = [8, 0], sizes = [1, 16], strides = [1, 1]} : vector<9x16xf32> to vector<1x16xf32>
    %c0_1 = arith.constant 0 : index
    %c0_2 = arith.constant 0 : index
    %10 = vector.load %arg12[%c0_1, %c0_2] : memref<56x1xf32, #tpu.memory_space<vmem>>, vector<56x1xf32>
    %11 = vector.extract_strided_slice %10 {offsets = [0, 0], sizes = [40, 1], strides = [1, 1]} : vector<56x1xf32> to vector<40x1xf32>
    %12 = vector.extract_strided_slice %10 {offsets = [40, 0], sizes = [16, 1], strides = [1, 1]} : vector<56x1xf32> to vector<16x1xf32>
    %c0_3 = arith.constant 0 : index
    %c0_4 = arith.constant 0 : index
    %c0_5 = arith.constant 0 : index
    %13 = vector.load %arg1[%c0_3, %c0_4, %c0_5] : memref<1x24x32xbf16, #tpu.memory_space<vmem>>, vector<1x24x32xbf16>
    %14 = vector.shape_cast %13 : vector<1x24x32xbf16> to vector<24x32xbf16>
    %c0_6 = arith.constant 0 : index
    %c0_7 = arith.constant 0 : index
    %15 = vector.load %arg2[%c0_6, %c0_7] : memref<32x16xbf16, #tpu.memory_space<vmem>>, vector<32x16xbf16>
    %cst = arith.constant dense<0.000000e+00> : vector<24x16xf32>
    %16 = tpu.matmul %14, %15, %cst {dimension_numbers = #tpu.dot_dimension_numbers<[1], [0], [0], [1], [0, 0, 1, 1], [], []>} : vector<24x32xbf16>, vector<32x16xbf16>, vector<24x16xf32> -> vector<24x16xf32>
    %17 = vector.broadcast %1 : vector<1x16xf32> to vector<24x16xf32>
    %18 = arith.addf %16, %17 : vector<24x16xf32>
    %cst_8 = arith.constant 0.000000e+00 : f32
    %19 = vector.broadcast %cst_8 : f32 to vector<24x16xf32>
    %20 = arith.maximumf %18, %19 : vector<24x16xf32>
    %c0_9 = arith.constant 0 : index
    %c0_10 = arith.constant 0 : index
    %21 = vector.load %arg3[%c0_9, %c0_10] : memref<16x16xbf16, #tpu.memory_space<vmem>>, vector<16x16xbf16>
    %22 = arith.truncf %20 : vector<24x16xf32> to vector<24x16xbf16>
    %cst_11 = arith.constant dense<0.000000e+00> : vector<24x16xf32>
    %23 = tpu.matmul %22, %21, %cst_11 {dimension_numbers = #tpu.dot_dimension_numbers<[1], [0], [0], [1], [0, 0, 1, 1], [], []>} : vector<24x16xbf16>, vector<16x16xbf16>, vector<24x16xf32> -> vector<24x16xf32>
    %24 = vector.broadcast %2 : vector<1x16xf32> to vector<24x16xf32>
    %25 = arith.addf %23, %24 : vector<24x16xf32>
    %cst_12 = arith.constant dense<0.000000e+00> : vector<24xf32>
    %26 = vector.multi_reduction <add>, %25, %cst_12 [1] : vector<24x16xf32> to vector<24xf32>
    %27 = vector.shape_cast %26 : vector<24xf32> to vector<24x1xf32>
    %cst_13 = arith.constant 1.600000e+01 : f32
    %28 = vector.broadcast %cst_13 : f32 to vector<24x1xf32>
    %29 = arith.divf %27, %28 : vector<24x1xf32>
    %30 = vector.broadcast %29 : vector<24x1xf32> to vector<24x16xf32>
    %31 = arith.subf %25, %30 : vector<24x16xf32>
    %32 = arith.mulf %31, %31 : vector<24x16xf32>
    %cst_14 = arith.constant dense<0.000000e+00> : vector<24xf32>
    %33 = vector.multi_reduction <add>, %32, %cst_14 [1] : vector<24x16xf32> to vector<24xf32>
    %34 = vector.shape_cast %33 : vector<24xf32> to vector<24x1xf32>
    %cst_15 = arith.constant 1.600000e+01 : f32
    %35 = vector.broadcast %cst_15 : f32 to vector<24x1xf32>
    %36 = arith.divf %34, %35 : vector<24x1xf32>
    %37 = vector.broadcast %29 : vector<24x1xf32> to vector<24x16xf32>
    %38 = arith.subf %25, %37 : vector<24x16xf32>
    %cst_16 = arith.constant 9.99999974E-6 : f32
    %39 = vector.broadcast %cst_16 : f32 to vector<24x1xf32>
    %40 = arith.addf %36, %39 : vector<24x1xf32>
    %41 = math.rsqrt %40 : vector<24x1xf32>
    %42 = vector.broadcast %41 : vector<24x1xf32> to vector<24x16xf32>
    %43 = arith.mulf %38, %42 : vector<24x16xf32>
    %44 = vector.broadcast %3 : vector<1x16xf32> to vector<24x16xf32>
    %45 = arith.mulf %43, %44 : vector<24x16xf32>
    %46 = vector.broadcast %4 : vector<1x16xf32> to vector<24x16xf32>
    %47 = arith.addf %45, %46 : vector<24x16xf32>
    %c0_17 = arith.constant 0 : index
    %c0_18 = arith.constant 0 : index
    %48 = vector.load %arg4[%c0_17, %c0_18] : memref<16x16xbf16, #tpu.memory_space<vmem>>, vector<16x16xbf16>
    %49 = arith.truncf %47 : vector<24x16xf32> to vector<24x16xbf16>
    %cst_19 = arith.constant dense<0.000000e+00> : vector<24x16xf32>
    %50 = tpu.matmul %49, %48, %cst_19 {dimension_numbers = #tpu.dot_dimension_numbers<[1], [0], [0], [1], [0, 0, 1, 1], [], []>} : vector<24x16xbf16>, vector<16x16xbf16>, vector<24x16xf32> -> vector<24x16xf32>
    %c0_20 = arith.constant 0 : index
    %c0_21 = arith.constant 0 : index
    %51 = vector.load %arg5[%c0_20, %c0_21] : memref<16x8xbf16, #tpu.memory_space<vmem>>, vector<16x8xbf16>
    %52 = arith.truncf %50 : vector<24x16xf32> to vector<24x16xbf16>
    %cst_22 = arith.constant dense<0.000000e+00> : vector<24x8xf32>
    %53 = tpu.matmul %52, %51, %cst_22 {dimension_numbers = #tpu.dot_dimension_numbers<[1], [0], [0], [1], [0, 0, 1, 1], [], []>} : vector<24x16xbf16>, vector<16x8xbf16>, vector<24x8xf32> -> vector<24x8xf32>
    %54 = vector.shape_cast %25 : vector<24x16xf32> to vector<1x24x16xf32>
    %55 = vector.shape_cast %53 : vector<24x8xf32> to vector<1x24x8xf32>
    %56 = tpu.iota {dimensions = array<i32: 0>} : vector<24x8xi32>
    %c0_i32 = arith.constant 0 : i32
    %57 = vector.broadcast %c0_i32 : i32 to vector<24x8xi32>
    %58 = arith.cmpi eq, %56, %57 : vector<24x8xi32>
    %c17_i32 = arith.constant 17 : i32
    %59 = vector.broadcast %c17_i32 : i32 to vector<24x8xi32>
    %60 = arith.cmpi sge, %56, %59 : vector<24x8xi32>
    %61 = arith.ori %58, %60 : vector<24x8xi1>
    %62 = vector.shape_cast %61 : vector<24x8xi1> to vector<1x24x8xi1>
    %cst_23 = arith.constant -1.000000e+30 : f32
    %63 = vector.broadcast %cst_23 : f32 to vector<1x24x8xf32>
    %64 = arith.select %62, %63, %55 : vector<1x24x8xi1>, vector<1x24x8xf32>
    %cst_24 = arith.constant dense<0xFF800000> : vector<1x8xf32>
    %65 = vector.multi_reduction <maximumf>, %64, %cst_24 [1] : vector<1x24x8xf32> to vector<1x8xf32>
    %66 = vector.shape_cast %65 : vector<1x8xf32> to vector<1x1x8xf32>
    %67 = vector.broadcast %66 : vector<1x1x8xf32> to vector<1x24x8xf32>
    %68 = arith.subf %64, %67 : vector<1x24x8xf32>
    %69 = math.exp %68 : vector<1x24x8xf32>
    %cst_25 = arith.constant dense<0.000000e+00> : vector<1x8xf32>
    %70 = vector.multi_reduction <add>, %69, %cst_25 [1] : vector<1x24x8xf32> to vector<1x8xf32>
    %71 = vector.shape_cast %70 : vector<1x8xf32> to vector<1x1x8xf32>
    %72 = tpu.reciprocal %71 {approx = true} : vector<1x1x8xf32> -> vector<1x1x8xf32>
    %73 = vector.broadcast %72 : vector<1x1x8xf32> to vector<1x24x8xf32>
    %74 = arith.mulf %69, %73 : vector<1x24x8xf32>
    %cst_26 = arith.constant dense<0.000000e+00> : vector<1x8x16xf32>
    %75 = tpu.matmul %74, %54, %cst_26 {dimension_numbers = #tpu.dot_dimension_numbers<[1], [1], [2], [2], [0, 0, 0, 2, 1, 2], [0], [0]>} : vector<1x24x8xf32>, vector<1x24x16xf32>, vector<1x8x16xf32> -> vector<1x8x16xf32>
    %76 = vector.extract_strided_slice %54 {offsets = [0, 0, 0], sizes = [1, 1, 16], strides = [1, 1, 1]} : vector<1x24x16xf32> to vector<1x1x16xf32>
    %cst_27 = arith.constant 0.000000e+00 : f32
    %77 = vector.broadcast %cst_27 : f32 to vector<1x7x16xf32>
    %78 = tpu.concatenate %76, %75, %77 in 1 : vector<1x1x16xf32>, vector<1x8x16xf32>, vector<1x7x16xf32> -> vector<1x16x16xf32>
    %79 = vector.shape_cast %78 : vector<1x16x16xf32> to vector<16x16xf32>
    %cst_28 = arith.constant dense<0.000000e+00> : vector<16xf32>
    %80 = vector.multi_reduction <add>, %79, %cst_28 [1] : vector<16x16xf32> to vector<16xf32>
    %81 = vector.shape_cast %80 : vector<16xf32> to vector<16x1xf32>
    %cst_29 = arith.constant 1.600000e+01 : f32
    %82 = vector.broadcast %cst_29 : f32 to vector<16x1xf32>
    %83 = arith.divf %81, %82 : vector<16x1xf32>
    %84 = vector.broadcast %83 : vector<16x1xf32> to vector<16x16xf32>
    %85 = arith.subf %79, %84 : vector<16x16xf32>
    %86 = arith.mulf %85, %85 : vector<16x16xf32>
    %cst_30 = arith.constant dense<0.000000e+00> : vector<16xf32>
    %87 = vector.multi_reduction <add>, %86, %cst_30 [1] : vector<16x16xf32> to vector<16xf32>
    %88 = vector.shape_cast %87 : vector<16xf32> to vector<16x1xf32>
    %cst_31 = arith.constant 1.600000e+01 : f32
    %89 = vector.broadcast %cst_31 : f32 to vector<16x1xf32>
    %90 = arith.divf %88, %89 : vector<16x1xf32>
    %91 = vector.broadcast %83 : vector<16x1xf32> to vector<16x16xf32>
    %92 = arith.subf %79, %91 : vector<16x16xf32>
    %cst_32 = arith.constant 9.99999974E-6 : f32
    %93 = vector.broadcast %cst_32 : f32 to vector<16x1xf32>
    %94 = arith.addf %90, %93 : vector<16x1xf32>
    %95 = math.rsqrt %94 : vector<16x1xf32>
    %96 = vector.broadcast %95 : vector<16x1xf32> to vector<16x16xf32>
    %97 = arith.mulf %92, %96 : vector<16x16xf32>
    %98 = vector.broadcast %5 : vector<1x16xf32> to vector<16x16xf32>
    %99 = arith.mulf %97, %98 : vector<16x16xf32>
    %100 = vector.broadcast %6 : vector<1x16xf32> to vector<16x16xf32>
    %101 = arith.addf %99, %100 : vector<16x16xf32>
    %102 = vector.shape_cast %101 : vector<16x16xf32> to vector<1x16x16xf32>
    %103 = tpu.transpose %102, [1, 0, 2] : vector<1x16x16xf32> -> vector<16x1x16xf32>
    %104 = vector.shape_cast %103 : vector<16x1x16xf32> to vector<16x16xf32>
    %c0_33 = arith.constant 0 : index
    %c0_34 = arith.constant 0 : index
    %105 = vector.load %arg8[%c0_33, %c0_34] : memref<40x16xbf16, #tpu.memory_space<vmem>>, vector<40x16xbf16>
    %c0_35 = arith.constant 0 : index
    %c0_36 = arith.constant 0 : index
    %106 = vector.load %arg9[%c0_35, %c0_36] : memref<16x40xbf16, #tpu.memory_space<vmem>>, vector<16x40xbf16>
    %107 = arith.truncf %104 : vector<16x16xf32> to vector<16x16xbf16>
    %cst_37 = arith.constant dense<0.000000e+00> : vector<40x16xf32>
    %108 = tpu.matmul %105, %107, %cst_37 {dimension_numbers = #tpu.dot_dimension_numbers<[1], [0], [0], [1], [0, 0, 1, 1], [], []>} : vector<40x16xbf16>, vector<16x16xbf16>, vector<40x16xf32> -> vector<40x16xf32>
    %109 = vector.broadcast %11 : vector<40x1xf32> to vector<40x16xf32>
    %110 = arith.addf %108, %109 : vector<40x16xf32>
    %cst_38 = arith.constant 5.000000e-01 : f32
    %111 = vector.broadcast %cst_38 : f32 to vector<40x16xf32>
    %112 = arith.mulf %111, %110 : vector<40x16xf32>
    %cst_39 = arith.constant 0.707106769 : f32
    %113 = vector.broadcast %cst_39 : f32 to vector<40x16xf32>
    %114 = arith.mulf %110, %113 : vector<40x16xf32>
    %115 = math.absf %114 : vector<40x16xf32>
    %cst_40 = arith.constant 0.327591091 : f32
    %116 = vector.broadcast %cst_40 : f32 to vector<40x16xf32>
    %117 = arith.mulf %116, %115 : vector<40x16xf32>
    %cst_41 = arith.constant 1.000000e+00 : f32
    %118 = vector.broadcast %cst_41 : f32 to vector<40x16xf32>
    %119 = arith.addf %118, %117 : vector<40x16xf32>
    %120 = tpu.reciprocal %119 {approx = true} : vector<40x16xf32> -> vector<40x16xf32>
    %cst_42 = arith.constant 1.06140542 : f32
    %121 = vector.broadcast %cst_42 : f32 to vector<40x16xf32>
    %122 = arith.mulf %121, %120 : vector<40x16xf32>
    %cst_43 = arith.constant -1.45315206 : f32
    %123 = vector.broadcast %cst_43 : f32 to vector<40x16xf32>
    %124 = arith.addf %122, %123 : vector<40x16xf32>
    %125 = arith.mulf %124, %120 : vector<40x16xf32>
    %cst_44 = arith.constant 1.42141378 : f32
    %126 = vector.broadcast %cst_44 : f32 to vector<40x16xf32>
    %127 = arith.addf %125, %126 : vector<40x16xf32>
    %128 = arith.mulf %127, %120 : vector<40x16xf32>
    %cst_45 = arith.constant -0.284496725 : f32
    %129 = vector.broadcast %cst_45 : f32 to vector<40x16xf32>
    %130 = arith.addf %128, %129 : vector<40x16xf32>
    %131 = arith.mulf %130, %120 : vector<40x16xf32>
    %cst_46 = arith.constant 0.254829586 : f32
    %132 = vector.broadcast %cst_46 : f32 to vector<40x16xf32>
    %133 = arith.addf %131, %132 : vector<40x16xf32>
    %134 = arith.mulf %133, %120 : vector<40x16xf32>
    %cst_47 = arith.constant 0.000000e+00 : f32
    %135 = vector.broadcast %cst_47 : f32 to vector<40x16xf32>
    %136 = arith.subf %135, %115 : vector<40x16xf32>
    %137 = arith.mulf %136, %115 : vector<40x16xf32>
    %138 = math.exp %137 : vector<40x16xf32>
    %139 = arith.mulf %134, %138 : vector<40x16xf32>
    %cst_48 = arith.constant 1.000000e+00 : f32
    %140 = vector.broadcast %cst_48 : f32 to vector<40x16xf32>
    %141 = arith.subf %140, %139 : vector<40x16xf32>
    %cst_49 = arith.constant 0.000000e+00 : f32
    %142 = vector.broadcast %cst_49 : f32 to vector<40x16xf32>
    %143 = arith.cmpf oge, %114, %142 : vector<40x16xf32>
    %cst_50 = arith.constant 0.000000e+00 : f32
    %144 = vector.broadcast %cst_50 : f32 to vector<40x16xf32>
    %145 = arith.subf %144, %141 : vector<40x16xf32>
    %146 = arith.select %143, %141, %145 : vector<40x16xi1>, vector<40x16xf32>
    %cst_51 = arith.constant 1.000000e+00 : f32
    %147 = vector.broadcast %cst_51 : f32 to vector<40x16xf32>
    %148 = arith.addf %147, %146 : vector<40x16xf32>
    %149 = arith.mulf %112, %148 : vector<40x16xf32>
    %150 = arith.truncf %149 : vector<40x16xf32> to vector<40x16xbf16>
    %cst_52 = arith.constant dense<0.000000e+00> : vector<16x16xf32>
    %151 = tpu.matmul %106, %150, %cst_52 {dimension_numbers = #tpu.dot_dimension_numbers<[1], [0], [0], [1], [0, 0, 1, 1], [], []>} : vector<16x40xbf16>, vector<40x16xbf16>, vector<16x16xf32> -> vector<16x16xf32>
    %152 = vector.broadcast %12 : vector<16x1xf32> to vector<16x16xf32>
    %153 = arith.addf %151, %152 : vector<16x16xf32>
    %154 = vector.shape_cast %153 : vector<16x16xf32> to vector<16x1x16xf32>
    %155 = tpu.transpose %154, [1, 0, 2] : vector<16x1x16xf32> -> vector<1x16x16xf32>
    %156 = vector.shape_cast %155 : vector<1x16x16xf32> to vector<16x16xf32>
    %157 = arith.addf %79, %156 : vector<16x16xf32>
    %cst_53 = arith.constant dense<0.000000e+00> : vector<16xf32>
    %158 = vector.multi_reduction <add>, %157, %cst_53 [1] : vector<16x16xf32> to vector<16xf32>
    %159 = vector.shape_cast %158 : vector<16xf32> to vector<16x1xf32>
    %cst_54 = arith.constant 1.600000e+01 : f32
    %160 = vector.broadcast %cst_54 : f32 to vector<16x1xf32>
    %161 = arith.divf %159, %160 : vector<16x1xf32>
    %162 = vector.broadcast %161 : vector<16x1xf32> to vector<16x16xf32>
    %163 = arith.subf %157, %162 : vector<16x16xf32>
    %164 = arith.mulf %163, %163 : vector<16x16xf32>
    %cst_55 = arith.constant dense<0.000000e+00> : vector<16xf32>
    %165 = vector.multi_reduction <add>, %164, %cst_55 [1] : vector<16x16xf32> to vector<16xf32>
    %166 = vector.shape_cast %165 : vector<16xf32> to vector<16x1xf32>
    %cst_56 = arith.constant 1.600000e+01 : f32
    %167 = vector.broadcast %cst_56 : f32 to vector<16x1xf32>
    %168 = arith.divf %166, %167 : vector<16x1xf32>
    %169 = vector.broadcast %161 : vector<16x1xf32> to vector<16x16xf32>
    %170 = arith.subf %157, %169 : vector<16x16xf32>
    %cst_57 = arith.constant 9.99999974E-6 : f32
    %171 = vector.broadcast %cst_57 : f32 to vector<16x1xf32>
    %172 = arith.addf %168, %171 : vector<16x1xf32>
    %173 = math.rsqrt %172 : vector<16x1xf32>
    %174 = vector.broadcast %173 : vector<16x1xf32> to vector<16x16xf32>
    %175 = arith.mulf %170, %174 : vector<16x16xf32>
    %176 = vector.broadcast %7 : vector<1x16xf32> to vector<16x16xf32>
    %177 = arith.mulf %175, %176 : vector<16x16xf32>
    %178 = vector.broadcast %8 : vector<1x16xf32> to vector<16x16xf32>
    %179 = arith.addf %177, %178 : vector<16x16xf32>
    %c0_58 = arith.constant 0 : index
    %c0_59 = arith.constant 0 : index
    %180 = vector.load %arg6[%c0_58, %c0_59] : memref<16x128xbf16, #tpu.memory_space<vmem>>, vector<16x128xbf16>
    %181 = arith.truncf %179 : vector<16x16xf32> to vector<16x16xbf16>
    %cst_60 = arith.constant dense<0.000000e+00> : vector<16x128xf32>
    %182 = tpu.matmul %181, %180, %cst_60 {dimension_numbers = #tpu.dot_dimension_numbers<[1], [0], [0], [1], [0, 0, 1, 1], [], []>} : vector<16x16xbf16>, vector<16x128xbf16>, vector<16x128xf32> -> vector<16x128xf32>
    %c0_61 = arith.constant 0 : index
    %c0_62 = arith.constant 0 : index
    %183 = vector.load %arg11[%c0_61, %c0_62] : memref<1x128xf32, #tpu.memory_space<vmem>>, vector<1x128xf32>
    %184 = vector.broadcast %183 : vector<1x128xf32> to vector<16x128xf32>
    %185 = arith.addf %182, %184 : vector<16x128xf32>
    %cst_63 = arith.constant 5.000000e-01 : f32
    %186 = vector.broadcast %cst_63 : f32 to vector<16x128xf32>
    %187 = arith.mulf %186, %185 : vector<16x128xf32>
    %cst_64 = arith.constant 0.707106769 : f32
    %188 = vector.broadcast %cst_64 : f32 to vector<16x128xf32>
    %189 = arith.mulf %185, %188 : vector<16x128xf32>
    %190 = math.absf %189 : vector<16x128xf32>
    %cst_65 = arith.constant 0.327591091 : f32
    %191 = vector.broadcast %cst_65 : f32 to vector<16x128xf32>
    %192 = arith.mulf %191, %190 : vector<16x128xf32>
    %cst_66 = arith.constant 1.000000e+00 : f32
    %193 = vector.broadcast %cst_66 : f32 to vector<16x128xf32>
    %194 = arith.addf %193, %192 : vector<16x128xf32>
    %195 = tpu.reciprocal %194 {approx = true} : vector<16x128xf32> -> vector<16x128xf32>
    %cst_67 = arith.constant 1.06140542 : f32
    %196 = vector.broadcast %cst_67 : f32 to vector<16x128xf32>
    %197 = arith.mulf %196, %195 : vector<16x128xf32>
    %cst_68 = arith.constant -1.45315206 : f32
    %198 = vector.broadcast %cst_68 : f32 to vector<16x128xf32>
    %199 = arith.addf %197, %198 : vector<16x128xf32>
    %200 = arith.mulf %199, %195 : vector<16x128xf32>
    %cst_69 = arith.constant 1.42141378 : f32
    %201 = vector.broadcast %cst_69 : f32 to vector<16x128xf32>
    %202 = arith.addf %200, %201 : vector<16x128xf32>
    %203 = arith.mulf %202, %195 : vector<16x128xf32>
    %cst_70 = arith.constant -0.284496725 : f32
    %204 = vector.broadcast %cst_70 : f32 to vector<16x128xf32>
    %205 = arith.addf %203, %204 : vector<16x128xf32>
    %206 = arith.mulf %205, %195 : vector<16x128xf32>
    %cst_71 = arith.constant 0.254829586 : f32
    %207 = vector.broadcast %cst_71 : f32 to vector<16x128xf32>
    %208 = arith.addf %206, %207 : vector<16x128xf32>
    %209 = arith.mulf %208, %195 : vector<16x128xf32>
    %cst_72 = arith.constant 0.000000e+00 : f32
    %210 = vector.broadcast %cst_72 : f32 to vector<16x128xf32>
    %211 = arith.subf %210, %190 : vector<16x128xf32>
    %212 = arith.mulf %211, %190 : vector<16x128xf32>
    %213 = math.exp %212 : vector<16x128xf32>
    %214 = arith.mulf %209, %213 : vector<16x128xf32>
    %cst_73 = arith.constant 1.000000e+00 : f32
    %215 = vector.broadcast %cst_73 : f32 to vector<16x128xf32>
    %216 = arith.subf %215, %214 : vector<16x128xf32>
    %cst_74 = arith.constant 0.000000e+00 : f32
    %217 = vector.broadcast %cst_74 : f32 to vector<16x128xf32>
    %218 = arith.cmpf oge, %189, %217 : vector<16x128xf32>
    %cst_75 = arith.constant 0.000000e+00 : f32
    %219 = vector.broadcast %cst_75 : f32 to vector<16x128xf32>
    %220 = arith.subf %219, %216 : vector<16x128xf32>
    %221 = arith.select %218, %216, %220 : vector<16x128xi1>, vector<16x128xf32>
    %cst_76 = arith.constant 1.000000e+00 : f32
    %222 = vector.broadcast %cst_76 : f32 to vector<16x128xf32>
    %223 = arith.addf %222, %221 : vector<16x128xf32>
    %224 = arith.mulf %187, %223 : vector<16x128xf32>
    %c0_77 = arith.constant 0 : index
    %c0_78 = arith.constant 0 : index
    %225 = vector.load %arg7[%c0_77, %c0_78] : memref<128x16xbf16, #tpu.memory_space<vmem>>, vector<128x16xbf16>
    %226 = arith.truncf %224 : vector<16x128xf32> to vector<16x128xbf16>
    %cst_79 = arith.constant dense<0.000000e+00> : vector<16x16xf32>
    %227 = tpu.matmul %226, %225, %cst_79 {dimension_numbers = #tpu.dot_dimension_numbers<[1], [0], [0], [1], [0, 0, 1, 1], [], []>} : vector<16x128xbf16>, vector<128x16xbf16>, vector<16x16xf32> -> vector<16x16xf32>
    %228 = vector.broadcast %9 : vector<1x16xf32> to vector<16x16xf32>
    %229 = arith.addf %227, %228 : vector<16x16xf32>
    %230 = arith.addf %157, %229 : vector<16x16xf32>
    %231 = vector.shape_cast %230 : vector<16x16xf32> to vector<1x16x16xf32>
    %c0_80 = arith.constant 0 : index
    %c0_81 = arith.constant 0 : index
    %c0_82 = arith.constant 0 : index
    %232 = vector.load %arg13[%c0_80, %c0_81, %c0_82] : memref<1x16x16xf32, #tpu.memory_space<vmem>>, vector<1x16x16xf32>
    tpu.vector_store %arg13[%c0_80, %c0_81, %c0_82], %231 {strides = array<i32>} : memref<1x16x16xf32, #tpu.memory_space<vmem>>, vector<1x16x16xf32>,
    return
  }
  func.func @transform_0(%arg0: i32) -> (i32, i32, i32) {
    %c0_i32 = arith.constant 0 : i32
    %c0_i32_0 = arith.constant 0 : i32
    %c0_i32_1 = arith.constant 0 : i32
    return %arg0, %c0_i32, %c0_i32_0 : i32, i32, i32
  }
  func.func @transform_1(%arg0: i32) -> (i32, i32) {
    %c0_i32 = arith.constant 0 : i32
    %c0_i32_0 = arith.constant 0 : i32
    %c0_i32_1 = arith.constant 0 : i32
    return %c0_i32, %c0_i32_0 : i32, i32
  }
  func.func @transform_2(%arg0: i32) -> (i32, i32) {
    %c0_i32 = arith.constant 0 : i32
    %c0_i32_0 = arith.constant 0 : i32
    %c0_i32_1 = arith.constant 0 : i32
    return %c0_i32, %c0_i32_0 : i32, i32
  }
  func.func @transform_3(%arg0: i32) -> (i32, i32) {
    %c0_i32 = arith.constant 0 : i32
    %c0_i32_0 = arith.constant 0 : i32
    %c0_i32_1 = arith.constant 0 : i32
    return %c0_i32, %c0_i32_0 : i32, i32
  }
  func.func @transform_4(%arg0: i32) -> (i32, i32) {
    %c0_i32 = arith.constant 0 : i32
    %c0_i32_0 = arith.constant 0 : i32
    %c0_i32_1 = arith.constant 0 : i32
    return %c0_i32, %c0_i32_0 : i32, i32
  }
  func.func @transform_5(%arg0: i32) -> (i32, i32) {
    %c0_i32 = arith.constant 0 : i32
    %c0_i32_0 = arith.constant 0 : i32
    %c0_i32_1 = arith.constant 0 : i32
    return %c0_i32, %c0_i32_0 : i32, i32
  }
  func.func @transform_6(%arg0: i32) -> (i32, i32) {
    %c0_i32 = arith.constant 0 : i32
    %c0_i32_0 = arith.constant 0 : i32
    %c0_i32_1 = arith.constant 0 : i32
    return %c0_i32, %c0_i32_0 : i32, i32
  }
  func.func @transform_7(%arg0: i32) -> (i32, i32) {
    %c0_i32 = arith.constant 0 : i32
    %c0_i32_0 = arith.constant 0 : i32
    %c0_i32_1 = arith.constant 0 : i32
    return %c0_i32, %c0_i32_0 : i32, i32
  }
  func.func @transform_8(%arg0: i32) -> (i32, i32) {
    %c0_i32 = arith.constant 0 : i32
    %c0_i32_0 = arith.constant 0 : i32
    %c0_i32_1 = arith.constant 0 : i32
    return %c0_i32, %c0_i32_0 : i32, i32
  }
  func.func @transform_9(%arg0: i32) -> (i32, i32) {
    %c0_i32 = arith.constant 0 : i32
    %c0_i32_0 = arith.constant 0 : i32
    %c0_i32_1 = arith.constant 0 : i32
    return %c0_i32, %c0_i32_0 : i32, i32
  }
  func.func @transform_10(%arg0: i32) -> (i32, i32) {
    %c0_i32 = arith.constant 0 : i32
    %c0_i32_0 = arith.constant 0 : i32
    %c0_i32_1 = arith.constant 0 : i32
    return %c0_i32, %c0_i32_0 : i32, i32
  }
  func.func @transform_11(%arg0: i32) -> (i32, i32) {
    %c0_i32 = arith.constant 0 : i32
    %c0_i32_0 = arith.constant 0 : i32
    %c0_i32_1 = arith.constant 0 : i32
    return %c0_i32, %c0_i32_0 : i32, i32
  }
  func.func @transform_12(%arg0: i32) -> (i32, i32, i32) {
    %c0_i32 = arith.constant 0 : i32
    %c0_i32_0 = arith.constant 0 : i32
    %c0_i32_1 = arith.constant 0 : i32
    return %arg0, %c0_i32, %c0_i32_0 : i32, i32, i32
  }
}

module attributes {stable_mosaic.version = 11 : i64} {
  func.func @token_learner_kernel(%arg0: i32, %arg1: memref<1x24x32xbf16, #tpu.memory_space<vmem>>, %arg2: memref<32x16xbf16, #tpu.memory_space<vmem>>, %arg3: memref<16x16xbf16, #tpu.memory_space<vmem>>, %arg4: memref<16x16xbf16, #tpu.memory_space<vmem>>, %arg5: memref<16x8xbf16, #tpu.memory_space<vmem>>, %arg6: memref<16x128xbf16, #tpu.memory_space<vmem>>, %arg7: memref<128x16xbf16, #tpu.memory_space<vmem>>, %arg8: memref<40x16xbf16, #tpu.memory_space<vmem>>, %arg9: memref<16x40xbf16, #tpu.memory_space<vmem>>, %arg10: memref<9x16xf32, #tpu.memory_space<vmem>>, %arg11: memref<1x128xf32, #tpu.memory_space<vmem>>, %arg12: memref<56x1xf32, #tpu.memory_space<vmem>>, %arg13: memref<1x16x16xf32, #tpu.memory_space<vmem>>) attributes {dimension_semantics = [#tpu.dimension_semantics<parallel>], iteration_bounds = array<i64: 2>, scalar_prefetch = 0 : i64, scratch_operands = 0 : i64, tpu.core_type = #tpu.core_type<tc>, window_params = [{transform_indices = @transform_0, window_bounds = array<i64: 1, 24, 32>}, {pipeline_mode = #tpu.pipeline_mode<synchronous>, transform_indices = @transform_1, window_bounds = array<i64: 32, 16>}, {pipeline_mode = #tpu.pipeline_mode<synchronous>, transform_indices = @transform_2, window_bounds = array<i64: 16, 16>}, {pipeline_mode = #tpu.pipeline_mode<synchronous>, transform_indices = @transform_3, window_bounds = array<i64: 16, 16>}, {pipeline_mode = #tpu.pipeline_mode<synchronous>, transform_indices = @transform_4, window_bounds = array<i64: 16, 8>}, {pipeline_mode = #tpu.pipeline_mode<synchronous>, transform_indices = @transform_5, window_bounds = array<i64: 16, 128>}, {pipeline_mode = #tpu.pipeline_mode<synchronous>, transform_indices = @transform_6, window_bounds = array<i64: 128, 16>}, {pipeline_mode = #tpu.pipeline_mode<synchronous>, transform_indices = @transform_7, window_bounds = array<i64: 40, 16>}, {pipeline_mode = #tpu.pipeline_mode<synchronous>, transform_indices = @transform_8, window_bounds = array<i64: 16, 40>}, {pipeline_mode = #tpu.pipeline_mode<synchronous>, transform_indices = @transform_9, window_bounds = array<i64: 9, 16>}, {pipeline_mode = #tpu.pipeline_mode<synchronous>, transform_indices = @transform_10, window_bounds = array<i64: 1, 128>}, {pipeline_mode = #tpu.pipeline_mode<synchronous>, transform_indices = @transform_11, window_bounds = array<i64: 56, 1>}, {transform_indices = @transform_12, window_bounds = array<i64: 1, 16, 16>}]} {
    %c0 = arith.constant 0 : index
    %c0_0 = arith.constant 0 : index
    %0 = vector.load %arg10[%c0, %c0_0] : memref<9x16xf32, #tpu.memory_space<vmem>>, vector<9x16xf32>
    %1 = vector.extract_strided_slice %0 {offsets = [0, 0], sizes = [1, 16], strides = [1, 1]} : vector<9x16xf32> to vector<1x16xf32>
    %2 = vector.extract_strided_slice %0 {offsets = [1, 0], sizes = [1, 16], strides = [1, 1]} : vector<9x16xf32> to vector<1x16xf32>
    %3 = vector.extract_strided_slice %0 {offsets = [2, 0], sizes = [1, 16], strides = [1, 1]} : vector<9x16xf32> to vector<1x16xf32>
    %4 = vector.extract_strided_slice %0 {offsets = [3, 0], sizes = [1, 16], strides = [1, 1]} : vector<9x16xf32> to vector<1x16xf32>
    %5 = vector.extract_strided_slice %0 {offsets = [4, 0], sizes = [1, 16], strides = [1, 1]} : vector<9x16xf32> to vector<1x16xf32>
    %6 = vector.extract_strided_slice %0 {offsets = [5, 0], sizes = [1, 16], strides = [1, 1]} : vector<9x16xf32> to vector<1x16xf32>
    %7 = vector.extract_strided_slice %0 {offsets = [6, 0], sizes = [1, 16], strides = [1, 1]} : vector<9x16xf32> to vector<1x16xf32>
    %8 = vector.extract_strided_slice %0 {offsets = [7, 0], sizes = [1, 16], strides = [1, 1]} : vector<9x16xf32> to vector<1x16xf32>
    %9 = vector.extract_strided_slice %0 {offsets = [8, 0], sizes = [1, 16], strides = [1, 1]} : vector<9x16xf32> to vector<1x16xf32>
    %c0_1 = arith.constant 0 : index
    %c0_2 = arith.constant 0 : index
    %10 = vector.load %arg12[%c0_1, %c0_2] : memref<56x1xf32, #tpu.memory_space<vmem>>, vector<56x1xf32>
    %11 = vector.extract_strided_slice %10 {offsets = [0, 0], sizes = [40, 1], strides = [1, 1]} : vector<56x1xf32> to vector<40x1xf32>
    %12 = vector.extract_strided_slice %10 {offsets = [40, 0], sizes = [16, 1], strides = [1, 1]} : vector<56x1xf32> to vector<16x1xf32>
    %c0_3 = arith.constant 0 : index
    %c0_4 = arith.constant 0 : index
    %c0_5 = arith.constant 0 : index
    %13 = vector.load %arg1[%c0_3, %c0_4, %c0_5] : memref<1x24x32xbf16, #tpu.memory_space<vmem>>, vector<1x24x32xbf16>
    %14 = vector.shape_cast %13 : vector<1x24x32xbf16> to vector<24x32xbf16>
    %c0_6 = arith.constant 0 : index
    %c0_7 = arith.constant 0 : index
    %15 = vector.load %arg2[%c0_6, %c0_7] : memref<32x16xbf16, #tpu.memory_space<vmem>>, vector<32x16xbf16>
    %cst = arith.constant dense<0.000000e+00> : vector<24x16xf32>
    %16 = tpu.matmul %14, %15, %cst {dimension_numbers = #tpu.dot_dimension_numbers<[1], [0], [0], [1], [0, 0, 1, 1], [], []>} : vector<24x32xbf16>, vector<32x16xbf16>, vector<24x16xf32> -> vector<24x16xf32>
    %17 = vector.broadcast %1 : vector<1x16xf32> to vector<24x16xf32>
    %18 = arith.addf %16, %17 : vector<24x16xf32>
    %cst_8 = arith.constant 0.000000e+00 : f32
    %19 = vector.broadcast %cst_8 : f32 to vector<24x16xf32>
    %20 = arith.maximumf %18, %19 : vector<24x16xf32>
    %c0_9 = arith.constant 0 : index
    %c0_10 = arith.constant 0 : index
    %21 = vector.load %arg3[%c0_9, %c0_10] : memref<16x16xbf16, #tpu.memory_space<vmem>>, vector<16x16xbf16>
    %22 = arith.truncf %20 : vector<24x16xf32> to vector<24x16xbf16>
    %cst_11 = arith.constant dense<0.000000e+00> : vector<24x16xf32>
    %23 = tpu.matmul %22, %21, %cst_11 {dimension_numbers = #tpu.dot_dimension_numbers<[1], [0], [0], [1], [0, 0, 1, 1], [], []>} : vector<24x16xbf16>, vector<16x16xbf16>, vector<24x16xf32> -> vector<24x16xf32>
    %24 = vector.broadcast %2 : vector<1x16xf32> to vector<24x16xf32>
    %25 = arith.addf %23, %24 : vector<24x16xf32>
    %cst_12 = arith.constant dense<0.000000e+00> : vector<24xf32>
    %26 = vector.multi_reduction <add>, %25, %cst_12 [1] : vector<24x16xf32> to vector<24xf32>
    %27 = vector.shape_cast %26 : vector<24xf32> to vector<24x1xf32>
    %cst_13 = arith.constant 1.600000e+01 : f32
    %28 = vector.broadcast %cst_13 : f32 to vector<24x1xf32>
    %29 = arith.divf %27, %28 : vector<24x1xf32>
    %30 = vector.broadcast %29 : vector<24x1xf32> to vector<24x16xf32>
    %31 = arith.subf %25, %30 : vector<24x16xf32>
    %32 = arith.mulf %31, %31 : vector<24x16xf32>
    %cst_14 = arith.constant dense<0.000000e+00> : vector<24xf32>
    %33 = vector.multi_reduction <add>, %32, %cst_14 [1] : vector<24x16xf32> to vector<24xf32>
    %34 = vector.shape_cast %33 : vector<24xf32> to vector<24x1xf32>
    %cst_15 = arith.constant 1.600000e+01 : f32
    %35 = vector.broadcast %cst_15 : f32 to vector<24x1xf32>
    %36 = arith.divf %34, %35 : vector<24x1xf32>
    %37 = vector.broadcast %29 : vector<24x1xf32> to vector<24x16xf32>
    %38 = arith.subf %25, %37 : vector<24x16xf32>
    %cst_16 = arith.constant 9.99999974E-6 : f32
    %39 = vector.broadcast %cst_16 : f32 to vector<24x1xf32>
    %40 = arith.addf %36, %39 : vector<24x1xf32>
    %41 = math.rsqrt %40 : vector<24x1xf32>
    %42 = vector.broadcast %41 : vector<24x1xf32> to vector<24x16xf32>
    %43 = arith.mulf %38, %42 : vector<24x16xf32>
    %44 = vector.broadcast %3 : vector<1x16xf32> to vector<24x16xf32>
    %45 = arith.mulf %43, %44 : vector<24x16xf32>
    %46 = vector.broadcast %4 : vector<1x16xf32> to vector<24x16xf32>
    %47 = arith.addf %45, %46 : vector<24x16xf32>
    %c0_17 = arith.constant 0 : index
    %c0_18 = arith.constant 0 : index
    %48 = vector.load %arg4[%c0_17, %c0_18] : memref<16x16xbf16, #tpu.memory_space<vmem>>, vector<16x16xbf16>
    %49 = arith.truncf %47 : vector<24x16xf32> to vector<24x16xbf16>
    %cst_19 = arith.constant dense<0.000000e+00> : vector<24x16xf32>
    %50 = tpu.matmul %49, %48, %cst_19 {dimension_numbers = #tpu.dot_dimension_numbers<[1], [0], [0], [1], [0, 0, 1, 1], [], []>} : vector<24x16xbf16>, vector<16x16xbf16>, vector<24x16xf32> -> vector<24x16xf32>
    %c0_20 = arith.constant 0 : index
    %c0_21 = arith.constant 0 : index
    %51 = vector.load %arg5[%c0_20, %c0_21] : memref<16x8xbf16, #tpu.memory_space<vmem>>, vector<16x8xbf16>
    %52 = arith.truncf %50 : vector<24x16xf32> to vector<24x16xbf16>
    %cst_22 = arith.constant dense<0.000000e+00> : vector<24x8xf32>
    %53 = tpu.matmul %52, %51, %cst_22 {dimension_numbers = #tpu.dot_dimension_numbers<[1], [0], [0], [1], [0, 0, 1, 1], [], []>} : vector<24x16xbf16>, vector<16x8xbf16>, vector<24x8xf32> -> vector<24x8xf32>
    %54 = vector.shape_cast %25 : vector<24x16xf32> to vector<1x24x16xf32>
    %55 = vector.shape_cast %53 : vector<24x8xf32> to vector<1x24x8xf32>
    %56 = tpu.iota {dimensions = array<i32: 0>} : vector<24x8xi32>
    %c0_i32 = arith.constant 0 : i32
    %57 = vector.broadcast %c0_i32 : i32 to vector<24x8xi32>
    %58 = arith.cmpi eq, %56, %57 : vector<24x8xi32>
    %c17_i32 = arith.constant 17 : i32
    %59 = vector.broadcast %c17_i32 : i32 to vector<24x8xi32>
    %60 = arith.cmpi sge, %56, %59 : vector<24x8xi32>
    %61 = arith.ori %58, %60 : vector<24x8xi1>
    %62 = vector.shape_cast %61 : vector<24x8xi1> to vector<1x24x8xi1>
    %cst_23 = arith.constant -1.000000e+30 : f32
    %63 = vector.broadcast %cst_23 : f32 to vector<1x24x8xf32>
    %64 = arith.select %62, %63, %55 : vector<1x24x8xi1>, vector<1x24x8xf32>
    %cst_24 = arith.constant dense<0xFF800000> : vector<1x8xf32>
    %65 = vector.multi_reduction <maximumf>, %64, %cst_24 [1] : vector<1x24x8xf32> to vector<1x8xf32>
    %66 = vector.shape_cast %65 : vector<1x8xf32> to vector<1x1x8xf32>
    %67 = vector.broadcast %66 : vector<1x1x8xf32> to vector<1x24x8xf32>
    %68 = arith.subf %64, %67 : vector<1x24x8xf32>
    %69 = math.exp %68 : vector<1x24x8xf32>
    %cst_25 = arith.constant dense<0.000000e+00> : vector<1x8xf32>
    %70 = vector.multi_reduction <add>, %69, %cst_25 [1] : vector<1x24x8xf32> to vector<1x8xf32>
    %71 = vector.shape_cast %70 : vector<1x8xf32> to vector<1x1x8xf32>
    %72 = tpu.reciprocal %71 {approx = true} : vector<1x1x8xf32> -> vector<1x1x8xf32>
    %73 = vector.broadcast %72 : vector<1x1x8xf32> to vector<1x24x8xf32>
    %74 = arith.mulf %69, %73 : vector<1x24x8xf32>
    %cst_26 = arith.constant dense<0.000000e+00> : vector<1x8x16xf32>
    %75 = tpu.matmul %74, %54, %cst_26 {dimension_numbers = #tpu.dot_dimension_numbers<[1], [1], [2], [2], [0, 0, 0, 2, 1, 2], [0], [0]>} : vector<1x24x8xf32>, vector<1x24x16xf32>, vector<1x8x16xf32> -> vector<1x8x16xf32>
    %76 = vector.extract_strided_slice %54 {offsets = [0, 0, 0], sizes = [1, 1, 16], strides = [1, 1, 1]} : vector<1x24x16xf32> to vector<1x1x16xf32>
    %cst_27 = arith.constant 0.000000e+00 : f32
    %77 = vector.broadcast %cst_27 : f32 to vector<1x7x16xf32>
    %78 = tpu.concatenate %76, %75, %77 in 1 : vector<1x1x16xf32>, vector<1x8x16xf32>, vector<1x7x16xf32> -> vector<1x16x16xf32>
    %79 = vector.shape_cast %78 : vector<1x16x16xf32> to vector<16x16xf32>
    %cst_28 = arith.constant dense<0.000000e+00> : vector<16xf32>
    %80 = vector.multi_reduction <add>, %79, %cst_28 [1] : vector<16x16xf32> to vector<16xf32>
    %81 = vector.shape_cast %80 : vector<16xf32> to vector<16x1xf32>
    %cst_29 = arith.constant 1.600000e+01 : f32
    %82 = vector.broadcast %cst_29 : f32 to vector<16x1xf32>
    %83 = arith.divf %81, %82 : vector<16x1xf32>
    %84 = vector.broadcast %83 : vector<16x1xf32> to vector<16x16xf32>
    %85 = arith.subf %79, %84 : vector<16x16xf32>
    %86 = arith.mulf %85, %85 : vector<16x16xf32>
    %cst_30 = arith.constant dense<0.000000e+00> : vector<16xf32>
    %87 = vector.multi_reduction <add>, %86, %cst_30 [1] : vector<16x16xf32> to vector<16xf32>
    %88 = vector.shape_cast %87 : vector<16xf32> to vector<16x1xf32>
    %cst_31 = arith.constant 1.600000e+01 : f32
    %89 = vector.broadcast %cst_31 : f32 to vector<16x1xf32>
    %90 = arith.divf %88, %89 : vector<16x1xf32>
    %91 = vector.broadcast %83 : vector<16x1xf32> to vector<16x16xf32>
    %92 = arith.subf %79, %91 : vector<16x16xf32>
    %cst_32 = arith.constant 9.99999974E-6 : f32
    %93 = vector.broadcast %cst_32 : f32 to vector<16x1xf32>
    %94 = arith.addf %90, %93 : vector<16x1xf32>
    %95 = math.rsqrt %94 : vector<16x1xf32>
    %96 = vector.broadcast %95 : vector<16x1xf32> to vector<16x16xf32>
    %97 = arith.mulf %92, %96 : vector<16x16xf32>
    %98 = vector.broadcast %5 : vector<1x16xf32> to vector<16x16xf32>
    %99 = arith.mulf %97, %98 : vector<16x16xf32>
    %100 = vector.broadcast %6 : vector<1x16xf32> to vector<16x16xf32>
    %101 = arith.addf %99, %100 : vector<16x16xf32>
    %102 = vector.shape_cast %101 : vector<16x16xf32> to vector<1x16x16xf32>
    %103 = tpu.transpose %102, [1, 0, 2] : vector<1x16x16xf32> -> vector<16x1x16xf32>
    %104 = vector.shape_cast %103 : vector<16x1x16xf32> to vector<16x16xf32>
    %c0_33 = arith.constant 0 : index
    %c0_34 = arith.constant 0 : index
    %105 = vector.load %arg8[%c0_33, %c0_34] : memref<40x16xbf16, #tpu.memory_space<vmem>>, vector<40x16xbf16>
    %c0_35 = arith.constant 0 : index
    %c0_36 = arith.constant 0 : index
    %106 = vector.load %arg9[%c0_35, %c0_36] : memref<16x40xbf16, #tpu.memory_space<vmem>>, vector<16x40xbf16>
    %107 = arith.truncf %104 : vector<16x16xf32> to vector<16x16xbf16>
    %cst_37 = arith.constant dense<0.000000e+00> : vector<40x16xf32>
    %108 = tpu.matmul %105, %107, %cst_37 {dimension_numbers = #tpu.dot_dimension_numbers<[1], [0], [0], [1], [0, 0, 1, 1], [], []>} : vector<40x16xbf16>, vector<16x16xbf16>, vector<40x16xf32> -> vector<40x16xf32>
    %109 = vector.broadcast %11 : vector<40x1xf32> to vector<40x16xf32>
    %110 = arith.addf %108, %109 : vector<40x16xf32>
    %cst_38 = arith.constant 5.000000e-01 : f32
    %111 = vector.broadcast %cst_38 : f32 to vector<40x16xf32>
    %112 = arith.mulf %111, %110 : vector<40x16xf32>
    %cst_39 = arith.constant 0.707106769 : f32
    %113 = vector.broadcast %cst_39 : f32 to vector<40x16xf32>
    %114 = arith.mulf %110, %113 : vector<40x16xf32>
    %115 = math.absf %114 : vector<40x16xf32>
    %cst_40 = arith.constant 0.327591091 : f32
    %116 = vector.broadcast %cst_40 : f32 to vector<40x16xf32>
    %117 = arith.mulf %116, %115 : vector<40x16xf32>
    %cst_41 = arith.constant 1.000000e+00 : f32
    %118 = vector.broadcast %cst_41 : f32 to vector<40x16xf32>
    %119 = arith.addf %118, %117 : vector<40x16xf32>
    %120 = tpu.reciprocal %119 {approx = true} : vector<40x16xf32> -> vector<40x16xf32>
    %cst_42 = arith.constant 1.06140542 : f32
    %121 = vector.broadcast %cst_42 : f32 to vector<40x16xf32>
    %122 = arith.mulf %121, %120 : vector<40x16xf32>
    %cst_43 = arith.constant -1.45315206 : f32
    %123 = vector.broadcast %cst_43 : f32 to vector<40x16xf32>
    %124 = arith.addf %122, %123 : vector<40x16xf32>
    %125 = arith.mulf %124, %120 : vector<40x16xf32>
    %cst_44 = arith.constant 1.42141378 : f32
    %126 = vector.broadcast %cst_44 : f32 to vector<40x16xf32>
    %127 = arith.addf %125, %126 : vector<40x16xf32>
    %128 = arith.mulf %127, %120 : vector<40x16xf32>
    %cst_45 = arith.constant -0.284496725 : f32
    %129 = vector.broadcast %cst_45 : f32 to vector<40x16xf32>
    %130 = arith.addf %128, %129 : vector<40x16xf32>
    %131 = arith.mulf %130, %120 : vector<40x16xf32>
    %cst_46 = arith.constant 0.254829586 : f32
    %132 = vector.broadcast %cst_46 : f32 to vector<40x16xf32>
    %133 = arith.addf %131, %132 : vector<40x16xf32>
    %134 = arith.mulf %133, %120 : vector<40x16xf32>
    %cst_47 = arith.constant 0.000000e+00 : f32
    %135 = vector.broadcast %cst_47 : f32 to vector<40x16xf32>
    %136 = arith.subf %135, %115 : vector<40x16xf32>
    %137 = arith.mulf %136, %115 : vector<40x16xf32>
    %138 = math.exp %137 : vector<40x16xf32>
    %139 = arith.mulf %134, %138 : vector<40x16xf32>
    %cst_48 = arith.constant 1.000000e+00 : f32
    %140 = vector.broadcast %cst_48 : f32 to vector<40x16xf32>
    %141 = arith.subf %140, %139 : vector<40x16xf32>
    %cst_49 = arith.constant 0.000000e+00 : f32
    %142 = vector.broadcast %cst_49 : f32 to vector<40x16xf32>
    %143 = arith.cmpf oge, %114, %142 : vector<40x16xf32>
    %cst_50 = arith.constant 0.000000e+00 : f32
    %144 = vector.broadcast %cst_50 : f32 to vector<40x16xf32>
    %145 = arith.subf %144, %141 : vector<40x16xf32>
    %146 = arith.select %143, %141, %145 : vector<40x16xi1>, vector<40x16xf32>
    %cst_51 = arith.constant 1.000000e+00 : f32
    %147 = vector.broadcast %cst_51 : f32 to vector<40x16xf32>
    %148 = arith.addf %147, %146 : vector<40x16xf32>
    %149 = arith.mulf %112, %148 : vector<40x16xf32>
    %150 = arith.truncf %149 : vector<40x16xf32> to vector<40x16xbf16>
    %cst_52 = arith.constant dense<0.000000e+00> : vector<16x16xf32>
    %151 = tpu.matmul %106, %150, %cst_52 {dimension_numbers = #tpu.dot_dimension_numbers<[1], [0], [0], [1], [0, 0, 1, 1], [], []>} : vector<16x40xbf16>, vector<40x16xbf16>, vector<16x16xf32> -> vector<16x16xf32>
    %152 = vector.broadcast %12 : vector<16x1xf32> to vector<16x16xf32>
    %153 = arith.addf %151, %152 : vector<16x16xf32>
    %154 = vector.shape_cast %153 : vector<16x16xf32> to vector<16x1x16xf32>
    %155 = tpu.transpose %154, [1, 0, 2] : vector<16x1x16xf32> -> vector<1x16x16xf32>
    %156 = vector.shape_cast %155 : vector<1x16x16xf32> to vector<16x16xf32>
    %157 = arith.addf %79, %156 : vector<16x16xf32>
    %cst_53 = arith.constant dense<0.000000e+00> : vector<16xf32>
    %158 = vector.multi_reduction <add>, %157, %cst_53 [1] : vector<16x16xf32> to vector<16xf32>
    %159 = vector.shape_cast %158 : vector<16xf32> to vector<16x1xf32>
    %cst_54 = arith.constant 1.600000e+01 : f32
    %160 = vector.broadcast %cst_54 : f32 to vector<16x1xf32>
    %161 = arith.divf %159, %160 : vector<16x1xf32>
    %162 = vector.broadcast %161 : vector<16x1xf32> to vector<16x16xf32>
    %163 = arith.subf %157, %162 : vector<16x16xf32>
    %164 = arith.mulf %163, %163 : vector<16x16xf32>
    %cst_55 = arith.constant dense<0.000000e+00> : vector<16xf32>
    %165 = vector.multi_reduction <add>, %164, %cst_55 [1] : vector<16x16xf32> to vector<16xf32>
    %166 = vector.shape_cast %165 : vector<16xf32> to vector<16x1xf32>
    %cst_56 = arith.constant 1.600000e+01 : f32
    %167 = vector.broadcast %cst_56 : f32 to vector<16x1xf32>
    %168 = arith.divf %166, %167 : vector<16x1xf32>
    %169 = vector.broadcast %161 : vector<16x1xf32> to vector<16x16xf32>
    %170 = arith.subf %157, %169 : vector<16x16xf32>
    %cst_57 = arith.constant 9.99999974E-6 : f32
    %171 = vector.broadcast %cst_57 : f32 to vector<16x1xf32>
    %172 = arith.addf %168, %171 : vector<16x1xf32>
    %173 = math.rsqrt %172 : vector<16x1xf32>
    %174 = vector.broadcast %173 : vector<16x1xf32> to vector<16x16xf32>
    %175 = arith.mulf %170, %174 : vector<16x16xf32>
    %176 = vector.broadcast %7 : vector<1x16xf32> to vector<16x16xf32>
    %177 = arith.mulf %175, %176 : vector<16x16xf32>
    %178 = vector.broadcast %8 : vector<1x16xf32> to vector<16x16xf32>
    %179 = arith.addf %177, %178 : vector<16x16xf32>
    %c0_58 = arith.constant 0 : index
    %c0_59 = arith.constant 0 : index
    %180 = vector.load %arg6[%c0_58, %c0_59] : memref<16x128xbf16, #tpu.memory_space<vmem>>, vector<16x128xbf16>
    %181 = arith.truncf %179 : vector<16x16xf32> to vector<16x16xbf16>
    %cst_60 = arith.constant dense<0.000000e+00> : vector<16x128xf32>
    %182 = tpu.matmul %181, %180, %cst_60 {dimension_numbers = #tpu.dot_dimension_numbers<[1], [0], [0], [1], [0, 0, 1, 1], [], []>} : vector<16x16xbf16>, vector<16x128xbf16>, vector<16x128xf32> -> vector<16x128xf32>
    %c0_61 = arith.constant 0 : index
    %c0_62 = arith.constant 0 : index
    %183 = vector.load %arg11[%c0_61, %c0_62] : memref<1x128xf32, #tpu.memory_space<vmem>>, vector<1x128xf32>
    %184 = vector.broadcast %183 : vector<1x128xf32> to vector<16x128xf32>
    %185 = arith.addf %182, %184 : vector<16x128xf32>
    %cst_63 = arith.constant 5.000000e-01 : f32
    %186 = vector.broadcast %cst_63 : f32 to vector<16x128xf32>
    %187 = arith.mulf %186, %185 : vector<16x128xf32>
    %cst_64 = arith.constant 0.707106769 : f32
    %188 = vector.broadcast %cst_64 : f32 to vector<16x128xf32>
    %189 = arith.mulf %185, %188 : vector<16x128xf32>
    %190 = math.absf %189 : vector<16x128xf32>
    %cst_65 = arith.constant 0.327591091 : f32
    %191 = vector.broadcast %cst_65 : f32 to vector<16x128xf32>
    %192 = arith.mulf %191, %190 : vector<16x128xf32>
    %cst_66 = arith.constant 1.000000e+00 : f32
    %193 = vector.broadcast %cst_66 : f32 to vector<16x128xf32>
    %194 = arith.addf %193, %192 : vector<16x128xf32>
    %195 = tpu.reciprocal %194 {approx = true} : vector<16x128xf32> -> vector<16x128xf32>
    %cst_67 = arith.constant 1.06140542 : f32
    %196 = vector.broadcast %cst_67 : f32 to vector<16x128xf32>
    %197 = arith.mulf %196, %195 : vector<16x128xf32>
    %cst_68 = arith.constant -1.45315206 : f32
    %198 = vector.broadcast %cst_68 : f32 to vector<16x128xf32>
    %199 = arith.addf %197, %198 : vector<16x128xf32>
    %200 = arith.mulf %199, %195 : vector<16x128xf32>
    %cst_69 = arith.constant 1.42141378 : f32
    %201 = vector.broadcast %cst_69 : f32 to vector<16x128xf32>
    %202 = arith.addf %200, %201 : vector<16x128xf32>
    %203 = arith.mulf %202, %195 : vector<16x128xf32>
    %cst_70 = arith.constant -0.284496725 : f32
    %204 = vector.broadcast %cst_70 : f32 to vector<16x128xf32>
    %205 = arith.addf %203, %204 : vector<16x128xf32>
    %206 = arith.mulf %205, %195 : vector<16x128xf32>
    %cst_71 = arith.constant 0.254829586 : f32
    %207 = vector.broadcast %cst_71 : f32 to vector<16x128xf32>
    %208 = arith.addf %206, %207 : vector<16x128xf32>
    %209 = arith.mulf %208, %195 : vector<16x128xf32>
    %cst_72 = arith.constant 0.000000e+00 : f32
    %210 = vector.broadcast %cst_72 : f32 to vector<16x128xf32>
    %211 = arith.subf %210, %190 : vector<16x128xf32>
    %212 = arith.mulf %211, %190 : vector<16x128xf32>
    %213 = math.exp %212 : vector<16x128xf32>
    %214 = arith.mulf %209, %213 : vector<16x128xf32>
    %cst_73 = arith.constant 1.000000e+00 : f32
    %215 = vector.broadcast %cst_73 : f32 to vector<16x128xf32>
    %216 = arith.subf %215, %214 : vector<16x128xf32>
    %cst_74 = arith.constant 0.000000e+00 : f32
    %217 = vector.broadcast %cst_74 : f32 to vector<16x128xf32>
    %218 = arith.cmpf oge, %189, %217 : vector<16x128xf32>
    %cst_75 = arith.constant 0.000000e+00 : f32
    %219 = vector.broadcast %cst_75 : f32 to vector<16x128xf32>
    %220 = arith.subf %219, %216 : vector<16x128xf32>
    %221 = arith.select %218, %216, %220 : vector<16x128xi1>, vector<16x128xf32>
    %cst_76 = arith.constant 1.000000e+00 : f32
    %222 = vector.broadcast %cst_76 : f32 to vector<16x128xf32>
    %223 = arith.addf %222, %221 : vector<16x128xf32>
    %224 = arith.mulf %187, %223 : vector<16x128xf32>
    %c0_77 = arith.constant 0 : index
    %c0_78 = arith.constant 0 : index
    %225 = vector.load %arg7[%c0_77, %c0_78] : memref<128x16xbf16, #tpu.memory_space<vmem>>, vector<128x16xbf16>
    %226 = arith.truncf %224 : vector<16x128xf32> to vector<16x128xbf16>
    %cst_79 = arith.constant dense<0.000000e+00> : vector<16x16xf32>
    %227 = tpu.matmul %226, %225, %cst_79 {dimension_numbers = #tpu.dot_dimension_numbers<[1], [0], [0], [1], [0, 0, 1, 1], [], []>} : vector<16x128xbf16>, vector<128x16xbf16>, vector<16x16xf32> -> vector<16x16xf32>
    %228 = vector.broadcast %9 : vector<1x16xf32> to vector<16x16xf32>
    %229 = arith.addf %227, %228 : vector<16x16xf32>
    %230 = arith.addf %157, %229 : vector<16x16xf32>
    %231 = vector.shape_cast %230 : vector<16x16xf32> to vector<1x16x16xf32>
    %c0_80 = arith.constant 0 : index
    %c0_81 = arith.constant 0 : index
    %c0_82 = arith.constant 0 : index
    %232 = vector.load %arg13[%c0_80, %c0_81, %c0_82] : memref<1x16x16xf32, #tpu.memory_space<vmem>>, vector<1x16x16xf32>
    tpu.vector_store %arg13[%c0_80, %c0_81, %c0_82], %231 {strides = array<i32>} : memref<1x16x16xf32, #tpu.memory_space<vmem>>, vector<1x16x16xf32>,
    return
  }
  func.func @transform_0(%arg0: i32) -> (i32, i32, i32) {
    %c0_i32 = arith.constant 0 : i32
    %c0_i32_0 = arith.constant 0 : i32
    %c0_i32_1 = arith.constant 0 : i32
    return %arg0, %c0_i32, %c0_i32_0 : i32, i32, i32
  }
  func.func @transform_1(%arg0: i32) -> (i32, i32) {
    %c0_i32 = arith.constant 0 : i32
    %c0_i32_0 = arith.constant 0 : i32
    %c0_i32_1 = arith.constant 0 : i32
    return %c0_i32, %c0_i32_0 : i32, i32
  }
  func.func @transform_2(%arg0: i32) -> (i32, i32) {
    %c0_i32 = arith.constant 0 : i32
    %c0_i32_0 = arith.constant 0 : i32
    %c0_i32_1 = arith.constant 0 : i32
    return %c0_i32, %c0_i32_0 : i32, i32
  }
  func.func @transform_3(%arg0: i32) -> (i32, i32) {
    %c0_i32 = arith.constant 0 : i32
    %c0_i32_0 = arith.constant 0 : i32
    %c0_i32_1 = arith.constant 0 : i32
    return %c0_i32, %c0_i32_0 : i32, i32
  }
  func.func @transform_4(%arg0: i32) -> (i32, i32) {
    %c0_i32 = arith.constant 0 : i32
    %c0_i32_0 = arith.constant 0 : i32
    %c0_i32_1 = arith.constant 0 : i32
    return %c0_i32, %c0_i32_0 : i32, i32
  }
  func.func @transform_5(%arg0: i32) -> (i32, i32) {
    %c0_i32 = arith.constant 0 : i32
    %c0_i32_0 = arith.constant 0 : i32
    %c0_i32_1 = arith.constant 0 : i32
    return %c0_i32, %c0_i32_0 : i32, i32
  }
  func.func @transform_6(%arg0: i32) -> (i32, i32) {
    %c0_i32 = arith.constant 0 : i32
    %c0_i32_0 = arith.constant 0 : i32
    %c0_i32_1 = arith.constant 0 : i32
    return %c0_i32, %c0_i32_0 : i32, i32
  }
  func.func @transform_7(%arg0: i32) -> (i32, i32) {
    %c0_i32 = arith.constant 0 : i32
    %c0_i32_0 = arith.constant 0 : i32
    %c0_i32_1 = arith.constant 0 : i32
    return %c0_i32, %c0_i32_0 : i32, i32
  }
  func.func @transform_8(%arg0: i32) -> (i32, i32) {
    %c0_i32 = arith.constant 0 : i32
    %c0_i32_0 = arith.constant 0 : i32
    %c0_i32_1 = arith.constant 0 : i32
    return %c0_i32, %c0_i32_0 : i32, i32
  }
  func.func @transform_9(%arg0: i32) -> (i32, i32) {
    %c0_i32 = arith.constant 0 : i32
    %c0_i32_0 = arith.constant 0 : i32
    %c0_i32_1 = arith.constant 0 : i32
    return %c0_i32, %c0_i32_0 : i32, i32
  }
  func.func @transform_10(%arg0: i32) -> (i32, i32) {
    %c0_i32 = arith.constant 0 : i32
    %c0_i32_0 = arith.constant 0 : i32
    %c0_i32_1 = arith.constant 0 : i32
    return %c0_i32, %c0_i32_0 : i32, i32
  }
  func.func @transform_11(%arg0: i32) -> (i32, i32) {
    %c0_i32 = arith.constant 0 : i32
    %c0_i32_0 = arith.constant 0 : i32
    %c0_i32_1 = arith.constant 0 : i32
    return %c0_i32, %c0_i32_0 : i32, i32
  }
  func.func @transform_12(%arg0: i32) -> (i32, i32, i32) {
    %c0_i32 = arith.constant 0 : i32
    %c0_i32_0 = arith.constant 0 : i32
    %c0_i32_1 = arith.constant 0 : i32
    return %arg0, %c0_i32, %c0_i32_0 : i32, i32, i32
  }
}

</mosaic_0001>

<llo_original>
// kernel: tpu_custom_call.1
$region0: #{tpu_custom_call.1}
  #allocation0 [shape = 'u32[]', space=smem, size = 0x4, offset = 0x4, fixed_abs, tag = 'smem constant byte address 0x4 - core index']
  #allocation1 [shape = 'u32[144,128]{1,0:T(1,128)}', space=vmem, size = 0x12000, scoped, tag = 'internal scratch']
  %s0 = inlined_call_operand.vmem [shape: bf16[2,24,32], index: 0, kind: input, shape index: {}]
  %s1 = inlined_call_operand.vmem [shape: bf16[32,16], index: 1, kind: input, shape index: {}]
  %s2 = inlined_call_operand.vmem [shape: bf16[16,16], index: 2, kind: input, shape index: {}]
  %s3 = inlined_call_operand.vmem [shape: bf16[16,16], index: 3, kind: input, shape index: {}]
  %s4 = inlined_call_operand.vmem [shape: bf16[16,8], index: 4, kind: input, shape index: {}]
  %s5 = inlined_call_operand.vmem [shape: bf16[16,128], index: 5, kind: input, shape index: {}]
  %s6 = inlined_call_operand.vmem [shape: bf16[128,16], index: 6, kind: input, shape index: {}]
  %s7 = inlined_call_operand.vmem [shape: bf16[40,16], index: 7, kind: input, shape index: {}]
  %s8 = inlined_call_operand.vmem [shape: bf16[16,40], index: 8, kind: input, shape index: {}]
  %s9 = inlined_call_operand.vmem [shape: f32[9,16], index: 9, kind: input, shape index: {}]
  %s10 = inlined_call_operand.vmem [shape: f32[1,128], index: 10, kind: input, shape index: {}]
  %s11 = inlined_call_operand.vmem [shape: f32[56,1], index: 11, kind: input, shape index: {}]
  %s12 = inlined_call_operand.hbm [shape: f32[2,16,16], index: 12, kind: output, shape index: {}]
  %s13 = sld [smem:[#allocation0]]
  $region81: #{tpu_custom_call.1} parent=0
    _
  %s15 = ssub.s32 1, %s13
  %s16 = scalar_select 0, %s15, %s13
  $region1: #{tpu_custom_call.1} parent=0
    #allocation2 [shape = 'u8[16384]{0}', space=vmem, size = 0x4000, scoped, tag = 'output window, operand 0']
    #allocation3 [shape = 's32[2]{0}', space=sflag, size = 0x8, scoped, tag = 'scoped memory for tpu_custom_call.1']
    %17 = vsyncpa [#allocation3], 0
    %s18 = scalar_lea.sflag [#allocation3], 1
    %19 = vsyncpa %s18, 0
    loop: start=0, step=1, limit=4
    $region2: #{tpu_custom_call.1} parent=1 // loop_pre_header
      _
    $region3: #{tpu_custom_call.1} parent=1 // loop_header
      %s21 = sphi 0, %s25
      %p22 = scmp.ge.s32.totalorder %s21, 4
      %s31 = sphi 0, %s33
      %s34 = sphi 0, %s31
      %s35 = sphi 0, %s34
      %s51 = sphi 0, %s35
      %s55 = sphi 0, %s55
      %s57 = sphi 0, %s55
      %s58 = sphi 0, %s57
      %s72 = sphi 0, %s58
      %s76 = sphi 0, %s76
      %s78 = sphi 0, %s76
      %s79 = sphi 0, %s78
      %s93 = sphi 0, %s79
      %s97 = sphi 0, %s97
      %s99 = sphi 0, %s97
      %s100 = sphi 0, %s99
      %s114 = sphi 0, %s100
      %s118 = sphi 0, %s118
      %s120 = sphi 0, %s118
      %s121 = sphi 0, %s120
      %s135 = sphi 0, %s121
      %s139 = sphi 0, %s139
      %s141 = sphi 0, %s139
      %s142 = sphi 0, %s141
      %s156 = sphi 0, %s142
      %s160 = sphi 0, %s160
      %s162 = sphi 0, %s160
      %s163 = sphi 0, %s162
      %s177 = sphi 0, %s163
      %s181 = sphi 0, %s181
      %s183 = sphi 0, %s181
      %s184 = sphi 0, %s183
      %s198 = sphi 0, %s184
      %s202 = sphi 0, %s202
      %s204 = sphi 0, %s202
      %s205 = sphi 0, %s204
      %s219 = sphi 0, %s205
      %s223 = sphi 0, %s223
      %s225 = sphi 0, %s223
      %s226 = sphi 0, %s225
      %s240 = sphi 0, %s226
      %s244 = sphi 0, %s244
      %s246 = sphi 0, %s244
      %s247 = sphi 0, %s246
      %s261 = sphi 0, %s247
      %s265 = sphi 0, %s265
      %s267 = sphi 0, %s265
      %s268 = sphi 0, %s267
      %s282 = sphi 0, %s268
      %s288 = sphi 0, %s290
      %s291 = sphi 0, %s288
      %s292 = sphi 0, %s291
      %s308 = sphi 0, %s292
    $region4: #{tpu_custom_call.1} parent=1 // loop_header_branch
      %24 = sbr.rel (%p22) target = $region8
    $region5: #{tpu_custom_call.1} parent=1 // loop_body
      %s26 = ssub.s32 %s21, 1
      %s27 = ssub.s32 %s21, 2
      %s28 = sadd.s32 %s21, 1
      %s29 = ssub.s32 %s21, %s28
      %p30 = scmp.eq.s32.totalorder %s29, 0
      %s32 = sadd.s32 %s31, 1
      %s33 = scalar_select %p30, %s31, %s32
      %p36 = pneg %p30
      %p37 = scmp.eq.s32.totalorder %s21, 1
      %p38 = por %p36, %p37
      %p39 = scmp.ne.s32.totalorder %s31, %s34
      %p40 = scmp.eq.s32.totalorder %s21, 0
      %p41 = por %p39, %p40
      %p42 = scmp.ne.s32.totalorder %s31, %s34
      %p43 = scmp.eq.s32.totalorder %s26, 1
      %p44 = por %p42, %p43
      %p45 = scmp.ne.s32.totalorder %s34, %s35
      %p46 = scmp.eq.s32.totalorder %s26, 0
      %p47 = por %p45, %p46
      %p48 = scmp.ne.s32.totalorder %s34, %s35
      %p49 = scmp.eq.s32.totalorder %s27, 1
      %p50 = por %p48, %p49
      %p52 = scmp.ne.s32.totalorder %s35, %s51
      %p53 = scmp.eq.s32.totalorder %s27, 0
      %p54 = por %p52, %p53
      %s56 = sadd.s32 %s55, 1
      %p59 = scmp.eq.s32.totalorder %s21, 1
      %p60 = scmp.ne.s32.totalorder %s55, %s57
      %p61 = scmp.eq.s32.totalorder %s21, 0
      %p62 = por %p60, %p61
      %p63 = scmp.ne.s32.totalorder %s55, %s57
      %p64 = scmp.eq.s32.totalorder %s26, 1
      %p65 = por %p63, %p64
      %p66 = scmp.ne.s32.totalorder %s57, %s58
      %p67 = scmp.eq.s32.totalorder %s26, 0
      %p68 = por %p66, %p67
      %p69 = scmp.ne.s32.totalorder %s57, %s58
      %p70 = scmp.eq.s32.totalorder %s27, 1
      %p71 = por %p69, %p70
      %p73 = scmp.ne.s32.totalorder %s58, %s72
      %p74 = scmp.eq.s32.totalorder %s27, 0
      %p75 = por %p73, %p74
      %s77 = sadd.s32 %s76, 1
      %p80 = scmp.eq.s32.totalorder %s21, 1
      %p81 = scmp.ne.s32.totalorder %s76, %s78
      %p82 = scmp.eq.s32.totalorder %s21, 0
      %p83 = por %p81, %p82
      %p84 = scmp.ne.s32.totalorder %s76, %s78
      %p85 = scmp.eq.s32.totalorder %s26, 1
      %p86 = por %p84, %p85
      %p87 = scmp.ne.s32.totalorder %s78, %s79
      %p88 = scmp.eq.s32.totalorder %s26, 0
      %p89 = por %p87, %p88
      %p90 = scmp.ne.s32.totalorder %s78, %s79
      %p91 = scmp.eq.s32.totalorder %s27, 1
      %p92 = por %p90, %p91
      %p94 = scmp.ne.s32.totalorder %s79, %s93
      %p95 = scmp.eq.s32.totalorder %s27, 0
      %p96 = por %p94, %p95
      %s98 = sadd.s32 %s97, 1
      %p101 = scmp.eq.s32.totalorder %s21, 1
      %p102 = scmp.ne.s32.totalorder %s97, %s99
      %p103 = scmp.eq.s32.totalorder %s21, 0
      %p104 = por %p102, %p103
      %p105 = scmp.ne.s32.totalorder %s97, %s99
      %p106 = scmp.eq.s32.totalorder %s26, 1
      %p107 = por %p105, %p106
      %p108 = scmp.ne.s32.totalorder %s99, %s100
      %p109 = scmp.eq.s32.totalorder %s26, 0
      %p110 = por %p108, %p109
      %p111 = scmp.ne.s32.totalorder %s99, %s100
      %p112 = scmp.eq.s32.totalorder %s27, 1
      %p113 = por %p111, %p112
      %p115 = scmp.ne.s32.totalorder %s100, %s114
      %p116 = scmp.eq.s32.totalorder %s27, 0
      %p117 = por %p115, %p116
      %s119 = sadd.s32 %s118, 1
      %p122 = scmp.eq.s32.totalorder %s21, 1
      %p123 = scmp.ne.s32.totalorder %s118, %s120
      %p124 = scmp.eq.s32.totalorder %s21, 0
      %p125 = por %p123, %p124
      %p126 = scmp.ne.s32.totalorder %s118, %s120
      %p127 = scmp.eq.s32.totalorder %s26, 1
      %p128 = por %p126, %p127
      %p129 = scmp.ne.s32.totalorder %s120, %s121
      %p130 = scmp.eq.s32.totalorder %s26, 0
      %p131 = por %p129, %p130
      %p132 = scmp.ne.s32.totalorder %s120, %s121
      %p133 = scmp.eq.s32.totalorder %s27, 1
      %p134 = por %p132, %p133
      %p136 = scmp.ne.s32.totalorder %s121, %s135
      %p137 = scmp.eq.s32.totalorder %s27, 0
      %p138 = por %p136, %p137
      %s140 = sadd.s32 %s139, 1
      %p143 = scmp.eq.s32.totalorder %s21, 1
      %p144 = scmp.ne.s32.totalorder %s139, %s141
      %p145 = scmp.eq.s32.totalorder %s21, 0
      %p146 = por %p144, %p145
      %p147 = scmp.ne.s32.totalorder %s139, %s141
      %p148 = scmp.eq.s32.totalorder %s26, 1
      %p149 = por %p147, %p148
      %p150 = scmp.ne.s32.totalorder %s141, %s142
      %p151 = scmp.eq.s32.totalorder %s26, 0
      %p152 = por %p150, %p151
      %p153 = scmp.ne.s32.totalorder %s141, %s142
      %p154 = scmp.eq.s32.totalorder %s27, 1
      %p155 = por %p153, %p154
      %p157 = scmp.ne.s32.totalorder %s142, %s156
      %p158 = scmp.eq.s32.totalorder %s27, 0
      %p159 = por %p157, %p158
      %s161 = sadd.s32 %s160, 1
      %p164 = scmp.eq.s32.totalorder %s21, 1
      %p165 = scmp.ne.s32.totalorder %s160, %s162
      %p166 = scmp.eq.s32.totalorder %s21, 0
      %p167 = por %p165, %p166
      %p168 = scmp.ne.s32.totalorder %s160, %s162
      %p169 = scmp.eq.s32.totalorder %s26, 1
      %p170 = por %p168, %p169
      %p171 = scmp.ne.s32.totalorder %s162, %s163
      %p172 = scmp.eq.s32.totalorder %s26, 0
      %p173 = por %p171, %p172
      %p174 = scmp.ne.s32.totalorder %s162, %s163
      %p175 = scmp.eq.s32.totalorder %s27, 1
      %p176 = por %p174, %p175
      %p178 = scmp.ne.s32.totalorder %s163, %s177
      %p179 = scmp.eq.s32.totalorder %s27, 0
      %p180 = por %p178, %p179
      %s182 = sadd.s32 %s181, 1
      %p185 = scmp.eq.s32.totalorder %s21, 1
      %p186 = scmp.ne.s32.totalorder %s181, %s183
      %p187 = scmp.eq.s32.totalorder %s21, 0
      %p188 = por %p186, %p187
      %p189 = scmp.ne.s32.totalorder %s181, %s183
      %p190 = scmp.eq.s32.totalorder %s26, 1
      %p191 = por %p189, %p190
      %p192 = scmp.ne.s32.totalorder %s183, %s184
      %p193 = scmp.eq.s32.totalorder %s26, 0
      %p194 = por %p192, %p193
      %p195 = scmp.ne.s32.totalorder %s183, %s184
      %p196 = scmp.eq.s32.totalorder %s27, 1
      %p197 = por %p195, %p196
      %p199 = scmp.ne.s32.totalorder %s184, %s198
      %p200 = scmp.eq.s32.totalorder %s27, 0
      %p201 = por %p199, %p200
      %s203 = sadd.s32 %s202, 1
      %p206 = scmp.eq.s32.totalorder %s21, 1
      %p207 = scmp.ne.s32.totalorder %s202, %s204
      %p208 = scmp.eq.s32.totalorder %s21, 0
      %p209 = por %p207, %p208
      %p210 = scmp.ne.s32.totalorder %s202, %s204
      %p211 = scmp.eq.s32.totalorder %s26, 1
      %p212 = por %p210, %p211
      %p213 = scmp.ne.s32.totalorder %s204, %s205
      %p214 = scmp.eq.s32.totalorder %s26, 0
      %p215 = por %p213, %p214
      %p216 = scmp.ne.s32.totalorder %s204, %s205
      %p217 = scmp.eq.s32.totalorder %s27, 1
      %p218 = por %p216, %p217
      %p220 = scmp.ne.s32.totalorder %s205, %s219
      %p221 = scmp.eq.s32.totalorder %s27, 0
      %p222 = por %p220, %p221
      %s224 = sadd.s32 %s223, 1
      %p227 = scmp.eq.s32.totalorder %s21, 1
      %p228 = scmp.ne.s32.totalorder %s223, %s225
      %p229 = scmp.eq.s32.totalorder %s21, 0
      %p230 = por %p228, %p229
      %p231 = scmp.ne.s32.totalorder %s223, %s225
      %p232 = scmp.eq.s32.totalorder %s26, 1
      %p233 = por %p231, %p232
      %p234 = scmp.ne.s32.totalorder %s225, %s226
      %p235 = scmp.eq.s32.totalorder %s26, 0
      %p236 = por %p234, %p235
      %p237 = scmp.ne.s32.totalorder %s225, %s226
      %p238 = scmp.eq.s32.totalorder %s27, 1
      %p239 = por %p237, %p238
      %p241 = scmp.ne.s32.totalorder %s226, %s240
      %p242 = scmp.eq.s32.totalorder %s27, 0
      %p243 = por %p241, %p242
      %s245 = sadd.s32 %s244, 1
      %p248 = scmp.eq.s32.totalorder %s21, 1
      %p249 = scmp.ne.s32.totalorder %s244, %s246
      %p250 = scmp.eq.s32.totalorder %s21, 0
      %p251 = por %p249, %p250
      %p252 = scmp.ne.s32.totalorder %s244, %s246
      %p253 = scmp.eq.s32.totalorder %s26, 1
      %p254 = por %p252, %p253
      %p255 = scmp.ne.s32.totalorder %s246, %s247
      %p256 = scmp.eq.s32.totalorder %s26, 0
      %p257 = por %p255, %p256
      %p258 = scmp.ne.s32.totalorder %s246, %s247
      %p259 = scmp.eq.s32.totalorder %s27, 1
      %p260 = por %p258, %p259
      %p262 = scmp.ne.s32.totalorder %s247, %s261
      %p263 = scmp.eq.s32.totalorder %s27, 0
      %p264 = por %p262, %p263
      %s266 = sadd.s32 %s265, 1
      %p269 = scmp.eq.s32.totalorder %s21, 1
      %p270 = scmp.ne.s32.totalorder %s265, %s267
      %p271 = scmp.eq.s32.totalorder %s21, 0
      %p272 = por %p270, %p271
      %p273 = scmp.ne.s32.totalorder %s265, %s267
      %p274 = scmp.eq.s32.totalorder %s26, 1
      %p275 = por %p273, %p274
      %p276 = scmp.ne.s32.totalorder %s267, %s268
      %p277 = scmp.eq.s32.totalorder %s26, 0
      %p278 = por %p276, %p277
      %p279 = scmp.ne.s32.totalorder %s267, %s268
      %p280 = scmp.eq.s32.totalorder %s27, 1
      %p281 = por %p279, %p280
      %p283 = scmp.ne.s32.totalorder %s268, %s282
      %p284 = scmp.eq.s32.totalorder %s27, 0
      %p285 = por %p283, %p284
      %s286 = ssub.s32 %s21, %s28
      %p287 = scmp.eq.s32.totalorder %s286, 0
      %s289 = sadd.s32 %s288, 1
      %s290 = scalar_select %p287, %s288, %s289
      %p293 = pneg %p287
      %p294 = scmp.eq.s32.totalorder %s21, 1
      %p295 = por %p293, %p294
      %p296 = scmp.ne.s32.totalorder %s288, %s291
      %p297 = scmp.eq.s32.totalorder %s21, 0
      %p298 = por %p296, %p297
      %p299 = scmp.ne.s32.totalorder %s288, %s291
      %p300 = scmp.eq.s32.totalorder %s26, 1
      %p301 = por %p299, %p300
      %p302 = scmp.ne.s32.totalorder %s291, %s292
      %p303 = scmp.eq.s32.totalorder %s26, 0
      %p304 = por %p302, %p303
      %p305 = scmp.ne.s32.totalorder %s291, %s292
      %p306 = scmp.eq.s32.totalorder %s27, 1
      %p307 = por %p305, %p306
      %p309 = scmp.ne.s32.totalorder %s292, %s308
      %p310 = scmp.eq.s32.totalorder %s27, 0
      %p311 = por %p309, %p310
      %p312 = scmp.le.s32.totalorder 1, %s21
      %p313 = scmp.lt.s32.totalorder %s21, 3
      %p314 = pnand %p312, %p313
      %p315 = pneg %p314
      // Predicated region
      $region9: #{tpu_custom_call.1} parent=5 // pred_check
        _
      $region10: #{tpu_custom_call.1} parent=5 // pred_check_branch
        %317 = sbr.rel (%p314) target = $region12
      $region11: #{tpu_custom_call.1} parent=5 // pred_region
        %s318 = ssub.s32 %s21, 1
        // Predicated region
        $region13: #{tpu_custom_call.1} parent=11 // pred_check
          %p319 = pneg %p68
        $region14: #{tpu_custom_call.1} parent=11 // pred_check_branch
          %321 = sbr.rel (%p319) target = $region16
        $region15: #{tpu_custom_call.1} parent=11 // pred_region
          _
        $region16: #{tpu_custom_call.1} parent=11 // pred_fallthru
          _
        // Predicated region
        $region17: #{tpu_custom_call.1} parent=11 // pred_check
          %p322 = pneg %p89
        $region18: #{tpu_custom_call.1} parent=11 // pred_check_branch
          %324 = sbr.rel (%p322) target = $region20
        $region19: #{tpu_custom_call.1} parent=11 // pred_region
          _
        $region20: #{tpu_custom_call.1} parent=11 // pred_fallthru
          _
        // Predicated region
        $region21: #{tpu_custom_call.1} parent=11 // pred_check
          %p325 = pneg %p110
        $region22: #{tpu_custom_call.1} parent=11 // pred_check_branch
          %327 = sbr.rel (%p325) target = $region24
        $region23: #{tpu_custom_call.1} parent=11 // pred_region
          _
        $region24: #{tpu_custom_call.1} parent=11 // pred_fallthru
          _
        // Predicated region
        $region25: #{tpu_custom_call.1} parent=11 // pred_check
          %p328 = pneg %p131
        $region26: #{tpu_custom_call.1} parent=11 // pred_check_branch
          %330 = sbr.rel (%p328) target = $region28
        $region27: #{tpu_custom_call.1} parent=11 // pred_region
          _
        $region28: #{tpu_custom_call.1} parent=11 // pred_fallthru
          _
        // Predicated region
        $region29: #{tpu_custom_call.1} parent=11 // pred_check
          %p331 = pneg %p152
        $region30: #{tpu_custom_call.1} parent=11 // pred_check_branch
          %333 = sbr.rel (%p331) target = $region32
        $region31: #{tpu_custom_call.1} parent=11 // pred_region
          _
        $region32: #{tpu_custom_call.1} parent=11 // pred_fallthru
          _
        // Predicated region
        $region33: #{tpu_custom_call.1} parent=11 // pred_check
          %p334 = pneg %p173
        $region34: #{tpu_custom_call.1} parent=11 // pred_check_branch
          %336 = sbr.rel (%p334) target = $region36
        $region35: #{tpu_custom_call.1} parent=11 // pred_region
          _
        $region36: #{tpu_custom_call.1} parent=11 // pred_fallthru
          _
        // Predicated region
        $region37: #{tpu_custom_call.1} parent=11 // pred_check
          %p337 = pneg %p194
        $region38: #{tpu_custom_call.1} parent=11 // pred_check_branch
          %339 = sbr.rel (%p337) target = $region40
        $region39: #{tpu_custom_call.1} parent=11 // pred_region
          _
        $region40: #{tpu_custom_call.1} parent=11 // pred_fallthru
          _
        // Predicated region
        $region41: #{tpu_custom_call.1} parent=11 // pred_check
          %p340 = pneg %p215
        $region42: #{tpu_custom_call.1} parent=11 // pred_check_branch
          %342 = sbr.rel (%p340) target = $region44
        $region43: #{tpu_custom_call.1} parent=11 // pred_region
          _
        $region44: #{tpu_custom_call.1} parent=11 // pred_fallthru
          _
        // Predicated region
        $region45: #{tpu_custom_call.1} parent=11 // pred_check
          %p343 = pneg %p236
        $region46: #{tpu_custom_call.1} parent=11 // pred_check_branch
          %345 = sbr.rel (%p343) target = $region48
        $region47: #{tpu_custom_call.1} parent=11 // pred_region
          _
        $region48: #{tpu_custom_call.1} parent=11 // pred_fallthru
          _
        // Predicated region
        $region49: #{tpu_custom_call.1} parent=11 // pred_check
          %p346 = pneg %p257
        $region50: #{tpu_custom_call.1} parent=11 // pred_check_branch
          %348 = sbr.rel (%p346) target = $region52
        $region51: #{tpu_custom_call.1} parent=11 // pred_region
          _
        $region52: #{tpu_custom_call.1} parent=11 // pred_fallthru
          _
        // Predicated region
        $region53: #{tpu_custom_call.1} parent=11 // pred_check
          %p349 = pneg %p278
        $region54: #{tpu_custom_call.1} parent=11 // pred_check_branch
          %351 = sbr.rel (%p349) target = $region56
        $region55: #{tpu_custom_call.1} parent=11 // pred_region
          _
        $region56: #{tpu_custom_call.1} parent=11 // pred_fallthru
          _
      $region12: #{tpu_custom_call.1} parent=5 // pred_fallthru
        _
      %p352 = scmp.lt.s32.totalorder %s21, 2
      // Predicated region
      $region57: #{tpu_custom_call.1} parent=5 // pred_check
        %p353 = pneg %p352
      $region58: #{tpu_custom_call.1} parent=5 // pred_check_branch
        %355 = sbr.rel (%p353) target = $region60
      $region59: #{tpu_custom_call.1} parent=5 // pred_region
        // Predicated region
        $region61: #{tpu_custom_call.1} parent=59 // pred_check
          %p356 = pneg %p41
        $region62: #{tpu_custom_call.1} parent=59 // pred_check_branch
          %358 = sbr.rel (%p356) target = $region64
        $region63: #{tpu_custom_call.1} parent=59 // pred_region
          %p359 = scmp.lt.s32.totalorder %s21, 1
          %s360 = scalar_select %p359, %s21, 1
          %s361 = smul.addr %s360, 3
          %s362 = smul.addr %s361, 4
          %s363 = scalar_lea.vmem %s0, %s362
        $region64: #{tpu_custom_call.1} parent=59 // pred_fallthru
          _
      $region60: #{tpu_custom_call.1} parent=5 // pred_fallthru
        _
      %p364 = scmp.le.s32.totalorder 1, %s21
      %p365 = scmp.lt.s32.totalorder %s21, 3
      %p366 = pnand %p364, %p365
      %p367 = pneg %p366
      // Predicated region
      $region65: #{tpu_custom_call.1} parent=5 // pred_check
        _
      $region66: #{tpu_custom_call.1} parent=5 // pred_check_branch
        %369 = sbr.rel (%p366) target = $region68
      $region67: #{tpu_custom_call.1} parent=5 // pred_region
        %s370 = ssub.s32 %s21, 1
        %p371 = scmp.lt.s32.totalorder %s26, 1
        %s372 = scalar_select %p371, %s26, 1
        %s373 = smul.addr %s372, 3
        %s374 = smul.addr %s373, 4
        %s375 = scalar_lea.vmem %s0, %s374
        %p376 = pneg %p47
        %p377 = pneg %p44
        %p378 = pneg %p68
        %p379 = pneg %p65
        %p380 = pneg %p89
        %p381 = pneg %p86
        %p382 = pneg %p110
        %p383 = pneg %p107
        %p384 = pneg %p131
        %p385 = pneg %p128
        %p386 = pneg %p152
        %p387 = pneg %p149
        %p388 = pneg %p173
        %p389 = pneg %p170
        %p390 = pneg %p194
        %p391 = pneg %p191
        %p392 = pneg %p215
        %p393 = pneg %p212
        %p394 = pneg %p236
        %p395 = pneg %p233
        %p396 = pneg %p257
        %p397 = pneg %p254
        %p398 = pneg %p278
        %p399 = pneg %p275
        %p400 = pneg %p304
        %p401 = pneg %p301
        %s402 = sand.u32 %s291, 1
        %s403 = scalar_lea.sflag [#allocation3], %s402
        %s404 = sand.u32 %s291, 1
        %s405 = smul.addr %s404, 16
        %s406 = scalar_lea.vmem [#allocation2], %s405
        %p407 = scmp.lt.s32.totalorder %s26, 1
        %s408 = scalar_select %p407, %s26, 1
        %s409 = smul.addr %s408, 3
        %s410 = smul.addr %s409, 4
        %s411 = scalar_lea.vmem %s0, %s410
        %v413 = vld [vmem:[%s9] sm:$0xff]
        %v414 = vld [vmem:[%s9 + $0x8] sm:$0x1]
        %v415 = vld [vmem:[%s11] sm:$0xff]
        %v416 = vld [vmem:[%s11 + $0x8] sm:$0xff]
        %v417 = vld [vmem:[%s11 + $0x10] sm:$0xff]
        %v418 = vld [vmem:[%s11 + $0x18] sm:$0xff]
        %v419 = vld [vmem:[%s11 + $0x20] sm:$0xff]
        %v420 = vld [vmem:[%s11 + $0x28] sm:$0xff]
        %v421 = vld [vmem:[%s11 + $0x30] sm:$0xff]
        %v422 = vld [vmem:[%s411] sm:$0xf]
        %v423 = vld [vmem:[%s411 + $0x4] sm:$0xf]
        %v424 = vld [vmem:[%s411 + $0x8] sm:$0xf]
        %v425 = vld [vmem:[%s1] sm:$0xf]
        %v426 = vld [vmem:[%s1 + $0x4] sm:$0xf]
        %v427 = vld [vmem:[%s1 + $0x8] sm:$0xf]
        %v428 = vld [vmem:[%s1 + $0xc] sm:$0xf]
        %v429 = vlaneseq
        %v430 = vshrl.u32 %v429, 7
        %v431 = vsub.s32 0, %v430
        %v432 = vrot.slane %v413, %v431
        %v436 = vunpack.c.l.b16 %v422
        %v437 = vunpack.c.l.b16 %v423
        %v438 = vunpack.c.l.b16 %v424
        %v439 = vpack.c.b16 %v437, %v436
        %v440 = vpack.c.b16 %v438, %v438
        %v445 = vunpack.c.l.b16 %v425
        %v446 = vunpack.c.l.b16 %v426
        %v447 = vunpack.c.l.b16 %v427
        %v448 = vunpack.c.l.b16 %v428
        %v449 = vpack.c.b16 %v446, %v445
        %v450 = vpack.c.b16 %v448, %v447
        %vm453 = vcmask 261120
        %v455 = vsel %vm453, %v439, 0
        %v458 = vsel %vm453, %v440, 0
        %460 = vmatprep.subr.bf16.mxu0 0
        %461 = vmatpush1.bf16.msra.mxu0 %v449
        %462 = vmatprep.subr.bf16.mxu0 0
        %463 = vmatpush1.bf16.msra.mxu0 %v450
        %464 = vmatprep.subr.bf16.mxu0 0
        %465 = vmatpush1.bf16.msra.mxu0 0
        %466 = vmatprep.subr.bf16.mxu0 0
        %467 = vmatpush1.bf16.msra.mxu0 0
        %468 = vmatprep.subr.bf16.mxu0 0
        %469 = vmatpush1.bf16.msra.mxu0 0
        %470 = vmatprep.subr.bf16.mxu0 0
        %471 = vmatpush1.bf16.msra.mxu0 0
        %472 = vmatprep.subr.bf16.mxu0 0
        %473 = vmatpush1.bf16.msra.mxu0 0
        %474 = vmatprep.subr.bf16.mxu0 0
        %475 = vmatpush1.bf16.msra.mxu0 0
        %476 = vmatprep.subr.bf16.mxu0 0
        %477 = vmatpush1.bf16.msra.mxu0 0
        %478 = vmatprep.subr.bf16.mxu0 0
        %479 = vmatpush1.bf16.msra.mxu0 0
        %480 = vmatprep.subr.bf16.mxu0 0
        %481 = vmatpush1.bf16.msra.mxu0 0
        %482 = vmatprep.subr.bf16.mxu0 0
        %483 = vmatpush1.bf16.msra.mxu0 0
        %484 = vmatprep.subr.bf16.mxu0 0
        %485 = vmatpush1.bf16.msra.mxu0 0
        %486 = vmatprep.subr.bf16.mxu0 0
        %487 = vmatpush1.bf16.msra.mxu0 0
        %488 = vmatprep.subr.bf16.mxu0 0
        %489 = vmatpush1.bf16.msra.mxu0 0
        %490 = vmatprep.subr.bf16.mxu0 0
        %491 = vmatpush1.bf16.msra.mxu0 0
        %492 = vmatprep.mubr.bf16.mxu0 0
        %493 = vmatmul.mubr.bf16.gmra.mrb[0].mxu0 %v455
        %v494 = vpop.f32.mrb[0].mxu0
        %v495 = vadd.f32 %v432, %v494
        %v496 = vpop.f32.mrb[0].mxu0
        %v497 = vpop.f32.mrb[0].mxu0
        %v498 = vadd.f32 %v432, %v497
        %v499 = vpop.f32.mrb[0].mxu0
        %500 = vmatprep.mubr.bf16.mxu0 0
        %501 = vmatmul.mubr.bf16.gmra.mrb[0].mxu0 %v458
        %v502 = vpop.f32.mrb[0].mxu0
        %v503 = vadd.f32 %v432, %v502
        %v504 = vpop.f32.mrb[0].mxu0
        %v505 = vpop.f32.mrb[0].mxu0
        %v506 = vpop.f32.mrb[0].mxu0
        %507 = vdwg.mxu0
        %v508 = vmax.f32 %v495, 0.0
        %v509 = vmax.f32 %v498, 0.0
        %v510 = vmax.f32 %v503, 0.0
        %v511 = vld [vmem:[%s2] sm:$0xf]
        %v512 = vld [vmem:[%s2 + $0x4] sm:$0xf]
        %v513 = vpack.c.bf16 %v509, %v508
        %v514 = vpack.c.bf16 %v510, %v510
        %v515 = vlaneseq
        %v516 = vshrl.u32 %v515, 7
        %v517 = vsub.s32 1, %v516
        %v518 = vrot.slane %v413, %v517
        %v521 = vunpack.c.l.b16 %v511
        %v522 = vunpack.c.l.b16 %v512
        %v523 = vpack.c.b16 %v522, %v521
        %vm525 = vcmask 130048
        %v527 = vsel %vm525, %v513, 0
        %v530 = vsel %vm525, %v514, 0
        %532 = vmatprep.subr.bf16.mxu0 0
        %533 = vmatpush1.bf16.msra.mxu0 %v523
        %534 = vmatprep.subr.bf16.mxu0 0
        %535 = vmatpush1.bf16.msra.mxu0 0
        %536 = vmatprep.subr.bf16.mxu0 0
        %537 = vmatpush1.bf16.msra.mxu0 0
        %538 = vmatprep.subr.bf16.mxu0 0
        %539 = vmatpush1.bf16.msra.mxu0 0
        %540 = vmatprep.subr.bf16.mxu0 0
        %541 = vmatpush1.bf16.msra.mxu0 0
        %542 = vmatprep.subr.bf16.mxu0 0
        %543 = vmatpush1.bf16.msra.mxu0 0
        %544 = vmatprep.subr.bf16.mxu0 0
        %545 = vmatpush1.bf16.msra.mxu0 0
        %546 = vmatprep.subr.bf16.mxu0 0
        %547 = vmatpush1.bf16.msra.mxu0 0
        %548 = vmatprep.subr.bf16.mxu0 0
        %549 = vmatpush1.bf16.msra.mxu0 0
        %550 = vmatprep.subr.bf16.mxu0 0
        %551 = vmatpush1.bf16.msra.mxu0 0
        %552 = vmatprep.subr.bf16.mxu0 0
        %553 = vmatpush1.bf16.msra.mxu0 0
        %554 = vmatprep.subr.bf16.mxu0 0
        %555 = vmatpush1.bf16.msra.mxu0 0
        %556 = vmatprep.subr.bf16.mxu0 0
        %557 = vmatpush1.bf16.msra.mxu0 0
        %558 = vmatprep.subr.bf16.mxu0 0
        %559 = vmatpush1.bf16.msra.mxu0 0
        %560 = vmatprep.subr.bf16.mxu0 0
        %561 = vmatpush1.bf16.msra.mxu0 0
        %562 = vmatprep.subr.bf16.mxu0 0
        %563 = vmatpush1.bf16.msra.mxu0 0
        %564 = vmatprep.mubr.bf16.mxu0 0
        %565 = vmatmul.mubr.bf16.gmra.mrb[0].mxu0 %v527
        %v566 = vpop.f32.mrb[0].mxu0
        %v567 = vadd.f32 %v518, %v566
        %v568 = vpop.f32.mrb[0].mxu0
        %v569 = vpop.f32.mrb[0].mxu0
        %v570 = vadd.f32 %v518, %v569
        %v571 = vpop.f32.mrb[0].mxu0
        %572 = vmatprep.mubr.bf16.mxu0 0
        %573 = vmatmul.mubr.bf16.gmra.mrb[0].mxu0 %v530
        %v574 = vpop.f32.mrb[0].mxu0
        %v575 = vadd.f32 %v518, %v574
        %v576 = vpop.f32.mrb[0].mxu0
        %v577 = vpop.f32.mrb[0].mxu0
        %v578 = vpop.f32.mrb[0].mxu0
        %579 = vdwg.mxu0
        %v580 = vsel %vm525, %v567, 0.0
        %581 = vadd.xlane.f32.xlu0 %v580
        %v582 = vpop.xlane.xlu0 %581
        %v583 = vsel %vm525, %v570, 0.0
        %584 = vadd.xlane.f32.xlu0 %v583
        %v585 = vpop.xlane.xlu0 %584
        %v586 = vsel %vm525, %v575, 0.0
        %587 = vadd.xlane.f32.xlu0 %v586
        %v588 = vpop.xlane.xlu0 %587
        %v589 = vrcp.pop 16.0
        %v590 = vmul.f32 %v582, %v589
        %v591 = vmul.f32 %v585, %v589
        %v592 = vmul.f32 %v588, %v589
        %v593 = vsub.f32 %v567, %v590
        %v594 = vsub.f32 %v570, %v591
        %v595 = vsub.f32 %v575, %v592
        %v596 = vmul.f32 %v593, %v593
        %v597 = vmul.f32 %v594, %v594
        %v598 = vmul.f32 %v595, %v595
        %v599 = vsel %vm525, %v596, 0.0
        %600 = vadd.xlane.f32.xlu0 %v599
        %v601 = vpop.xlane.xlu0 %600
        %v602 = vsel %vm525, %v597, 0.0
        %603 = vadd.xlane.f32.xlu0 %v602
        %v604 = vpop.xlane.xlu0 %603
        %v605 = vsel %vm525, %v598, 0.0
        %606 = vadd.xlane.f32.xlu0 %v605
        %v607 = vpop.xlane.xlu0 %606
        %v608 = vmul.f32 %v601, %v589
        %v609 = vmul.f32 %v604, %v589
        %v610 = vmul.f32 %v607, %v589
        %v611 = vadd.f32 %v608, 1e-05
        %v612 = vadd.f32 %v609, 1e-05
        %v613 = vadd.f32 %v610, 1e-05
        %v614 = vrsqrt.pop %v611
        %v615 = vrsqrt.pop %v612
        %v616 = vrsqrt.pop %v613
        %v617 = vmul.f32 %v593, %v614
        %v618 = vmul.f32 %v594, %v615
        %v619 = vmul.f32 %v595, %v616
        %v620 = vlaneseq
        %v621 = vshrl.u32 %v620, 7
        %v622 = vsub.s32 2, %v621
        %v623 = vrot.slane %v413, %v622
        %v624 = vmul.f32 %v617, %v623
        %v625 = vmul.f32 %v618, %v623
        %v626 = vmul.f32 %v619, %v623
        %v627 = vlaneseq
        %v628 = vshrl.u32 %v627, 7
        %v629 = vsub.s32 3, %v628
        %v630 = vrot.slane %v413, %v629
        %v631 = vadd.f32 %v624, %v630
        %v632 = vadd.f32 %v625, %v630
        %v633 = vadd.f32 %v626, %v630
        %v634 = vld [vmem:[%s3] sm:$0xf]
        %v635 = vld [vmem:[%s3 + $0x4] sm:$0xf]
        %v636 = vpack.c.bf16 %v632, %v631
        %v637 = vpack.c.bf16 %v633, %v633
        %v640 = vunpack.c.l.b16 %v634
        %v641 = vunpack.c.l.b16 %v635
        %v642 = vpack.c.b16 %v641, %v640
        %v645 = vsel %vm525, %v636, 0
        %v648 = vsel %vm525, %v637, 0
        %650 = vmatprep.subr.bf16.mxu0 0
        %651 = vmatpush1.bf16.msra.mxu0 %v642
        %652 = vmatprep.subr.bf16.mxu0 0
        %653 = vmatpush1.bf16.msra.mxu0 0
        %654 = vmatprep.subr.bf16.mxu0 0
        %655 = vmatpush1.bf16.msra.mxu0 0
        %656 = vmatprep.subr.bf16.mxu0 0
        %657 = vmatpush1.bf16.msra.mxu0 0
        %658 = vmatprep.subr.bf16.mxu0 0
        %659 = vmatpush1.bf16.msra.mxu0 0
        %660 = vmatprep.subr.bf16.mxu0 0
        %661 = vmatpush1.bf16.msra.mxu0 0
        %662 = vmatprep.subr.bf16.mxu0 0
        %663 = vmatpush1.bf16.msra.mxu0 0
        %664 = vmatprep.subr.bf16.mxu0 0
        %665 = vmatpush1.bf16.msra.mxu0 0
        %666 = vmatprep.subr.bf16.mxu0 0
        %667 = vmatpush1.bf16.msra.mxu0 0
        %668 = vmatprep.subr.bf16.mxu0 0
        %669 = vmatpush1.bf16.msra.mxu0 0
        %670 = vmatprep.subr.bf16.mxu0 0
        %671 = vmatpush1.bf16.msra.mxu0 0
        %672 = vmatprep.subr.bf16.mxu0 0
        %673 = vmatpush1.bf16.msra.mxu0 0
        %674 = vmatprep.subr.bf16.mxu0 0
        %675 = vmatpush1.bf16.msra.mxu0 0
        %676 = vmatprep.subr.bf16.mxu0 0
        %677 = vmatpush1.bf16.msra.mxu0 0
        %678 = vmatprep.subr.bf16.mxu0 0
        %679 = vmatpush1.bf16.msra.mxu0 0
        %680 = vmatprep.subr.bf16.mxu0 0
        %681 = vmatpush1.bf16.msra.mxu0 0
        %682 = vmatprep.mubr.bf16.mxu0 0
        %683 = vmatmul.mubr.bf16.gmra.mrb[0].mxu0 %v645
        %v684 = vpop.f32.mrb[0].mxu0
        %v685 = vadd.f32 0.0, %v684
        %v686 = vpop.f32.mrb[0].mxu0
        %v687 = vpop.f32.mrb[0].mxu0
        %v688 = vadd.f32 0.0, %v687
        %v689 = vpop.f32.mrb[0].mxu0
        %690 = vmatprep.mubr.bf16.mxu0 0
        %691 = vmatmul.mubr.bf16.gmra.mrb[0].mxu0 %v648
        %v692 = vpop.f32.mrb[0].mxu0
        %v693 = vadd.f32 0.0, %v692
        %v694 = vpop.f32.mrb[0].mxu0
        %v695 = vpop.f32.mrb[0].mxu0
        %v696 = vpop.f32.mrb[0].mxu0
        %697 = vdwg.mxu0
        %v698 = vld [vmem:[%s4] sm:$0xf]
        %v699 = vld [vmem:[%s4 + $0x4] sm:$0xf]
        %v700 = vpack.c.bf16 %v688, %v685
        %v701 = vpack.c.bf16 %v693, %v693
        %v704 = vunpack.c.l.b16 %v698
        %v705 = vunpack.c.l.b16 %v699
        %v706 = vpack.c.b16 %v705, %v704
        %v709 = vsel %vm525, %v700, 0
        %v712 = vsel %vm525, %v701, 0
        %714 = vmatprep.subr.bf16.mxu0 0
        %715 = vmatpush1.bf16.msra.mxu0 %v706
        %716 = vmatprep.subr.bf16.mxu0 0
        %717 = vmatpush1.bf16.msra.mxu0 0
        %718 = vmatprep.subr.bf16.mxu0 0
        %719 = vmatpush1.bf16.msra.mxu0 0
        %720 = vmatprep.subr.bf16.mxu0 0
        %721 = vmatpush1.bf16.msra.mxu0 0
        %722 = vmatprep.subr.bf16.mxu0 0
        %723 = vmatpush1.bf16.msra.mxu0 0
        %724 = vmatprep.subr.bf16.mxu0 0
        %725 = vmatpush1.bf16.msra.mxu0 0
        %726 = vmatprep.subr.bf16.mxu0 0
        %727 = vmatpush1.bf16.msra.mxu0 0
        %728 = vmatprep.subr.bf16.mxu0 0
        %729 = vmatpush1.bf16.msra.mxu0 0
        %730 = vmatprep.subr.bf16.mxu0 0
        %731 = vmatpush1.bf16.msra.mxu0 0
        %732 = vmatprep.subr.bf16.mxu0 0
        %733 = vmatpush1.bf16.msra.mxu0 0
        %734 = vmatprep.subr.bf16.mxu0 0
        %735 = vmatpush1.bf16.msra.mxu0 0
        %736 = vmatprep.subr.bf16.mxu0 0
        %737 = vmatpush1.bf16.msra.mxu0 0
        %738 = vmatprep.subr.bf16.mxu0 0
        %739 = vmatpush1.bf16.msra.mxu0 0
        %740 = vmatprep.subr.bf16.mxu0 0
        %741 = vmatpush1.bf16.msra.mxu0 0
        %742 = vmatprep.subr.bf16.mxu0 0
        %743 = vmatpush1.bf16.msra.mxu0 0
        %744 = vmatprep.subr.bf16.mxu0 0
        %745 = vmatpush1.bf16.msra.mxu0 0
        %746 = vmatprep.mubr.bf16.mxu0 0
        %747 = vmatmul.mubr.bf16.gmra.mrb[0].mxu0 %v709
        %v748 = vpop.f32.mrb[0].mxu0
        %v749 = vadd.f32 0.0, %v748
        %v750 = vpop.f32.mrb[0].mxu0
        %v751 = vpop.f32.mrb[0].mxu0
        %v752 = vadd.f32 0.0, %v751
        %v753 = vpop.f32.mrb[0].mxu0
        %754 = vmatprep.mubr.bf16.mxu0 0
        %755 = vmatmul.mubr.bf16.gmra.mrb[0].mxu0 %v712
        %v756 = vpop.f32.mrb[0].mxu0
        %v757 = vadd.f32 0.0, %v756
        %v758 = vpop.f32.mrb[0].mxu0
        %v759 = vpop.f32.mrb[0].mxu0
        %v760 = vpop.f32.mrb[0].mxu0
        %761 = vdwg.mxu0
        %v762 = vlaneseq
        %v763 = vshrl.u32 %v762, 7
        %v764 = vadd.s32 %v763, 8
        %v765 = vadd.s32 %v763, 16
        %vm766 = vcmp.eq.s32.totalorder %v763, 0
        %vm767 = vcmp.eq.s32.totalorder %v764, 0
        %vm768 = vcmp.eq.s32.totalorder %v765, 0
        %vm769 = vcmp.ge.s32.totalorder %v763, 17
        %vm770 = vcmp.ge.s32.totalorder %v764, 17
        %vm771 = vcmp.ge.s32.totalorder %v765, 17
        %vm772 = vmor %vm766, %vm769
        %vm773 = vmor %vm767, %vm770
        %vm774 = vmor %vm768, %vm771
        %v775 = vsel %vm772, -1e+30, %v749
        %v776 = vsel %vm773, -1e+30, %v752
        %v777 = vsel %vm774, -1e+30, %v757
        %vm778 = vcmask 64512
        %v779 = vsel %vm778, %v775, -inf
        %v780 = vsel %vm778, %v776, -inf
        %v781 = vsel %vm778, %v777, -inf
        %v782 = vmax.f32 %v779, %v780
        %v783 = vmax.f32 %v782, %v781
        %v784 = vrot.slane %v783, 4
        %v785 = vmax.f32 %v783, %v784
        %v786 = vrot.slane %v785, 2
        %v787 = vmax.f32 %v785, %v786
        %v788 = vrot.slane %v787, 1
        %v789 = vmax.f32 %v787, %v788
        %v790 = vsub.f32 %v775, %v789
        %v791 = vsub.f32 %v776, %v789
        %v792 = vsub.f32 %v777, %v789
        %v793 = vmul.f32 %v790, 1.442695
        %v794 = vpow.pop %v793
        %v795 = vmul.f32 %v791, 1.442695
        %v796 = vpow.pop %v795
        %v797 = vmul.f32 %v792, 1.442695
        %v798 = vpow.pop %v797
        %v799 = vsel %vm778, %v794, 0.0
        %v800 = vsel %vm778, %v796, 0.0
        %v801 = vadd.f32 %v799, %v800
        %v802 = vsel %vm778, %v798, 0.0
        %v803 = vadd.f32 %v801, %v802
        %v804 = vrot.slane %v803, 4
        %v805 = vadd.f32 %v803, %v804
        %v806 = vrot.slane %v805, 2
        %v807 = vadd.f32 %v805, %v806
        %v808 = vrot.slane %v807, 1
        %v809 = vadd.f32 %v807, %v808
        %v810 = vrcp.pop %v809
        %v811 = vmul.f32 %v794, %v810
        %v812 = vmul.f32 %v796, %v810
        %v813 = vmul.f32 %v798, %v810
        %814 = vxpose.xlu0.b32.start [1/16] %v811, 128
        %815 = vxpose.xlu0.b32.cont [2/16] %v812, 128
        %816 = vxpose.xlu0.b32.cont [3/16] %v813, 128
        %817 = vxpose.xlu0.b32.cont [4/16] 0.0, 128
        %818 = vxpose.xlu0.b32.cont [5/16] 0.0, 128
        %819 = vxpose.xlu0.b32.cont [6/16] 0.0, 128
        %820 = vxpose.xlu0.b32.cont [7/16] 0.0, 128
        %821 = vxpose.xlu0.b32.cont [8/16] 0.0, 128
        %822 = vxpose.xlu0.b32.cont [9/16] 0.0, 128
        %823 = vxpose.xlu0.b32.cont [10/16] 0.0, 128
        %824 = vxpose.xlu0.b32.cont [11/16] 0.0, 128
        %825 = vxpose.xlu0.b32.cont [12/16] 0.0, 128
        %826 = vxpose.xlu0.b32.cont [13/16] 0.0, 128
        %827 = vxpose.xlu0.b32.cont [14/16] 0.0, 128
        %828 = vxpose.xlu0.b32.cont [15/16] 0.0, 128
        %829 = vxpose.xlu0.b32.end [16/16] 0.0, 128
        %v830 = vpop.trf.xlu0
        %v831 = vpop.trf.xlu0
        %v832 = vpop.trf.xlu0
        %v833 = vpop.trf.xlu0
        %v834 = vpop.trf.xlu0
        %v835 = vpop.trf.xlu0
        %v836 = vpop.trf.xlu0
        %v837 = vpop.trf.xlu0
        %v838 = vpop.trf.xlu0
        %v839 = vpop.trf.xlu0
        %v840 = vpop.trf.xlu0
        %v841 = vpop.trf.xlu0
        %v842 = vpop.trf.xlu0
        %v843 = vpop.trf.xlu0
        %v844 = vpop.trf.xlu0
        %v845 = vpop.trf.xlu0
        %vm846 = vcmask 195584
        %v848 = vsel %vm846, %v830, 0
        %850 = vmatprep.subr.mxu0 0.0
        %851 = vmatpush1.msra.mxu0 %v567
        %852 = vmatprep.subr.mxu0 0.0
        %853 = vmatpush1.msra.mxu0 %v570
        %854 = vmatprep.subr.mxu0 0.0
        %855 = vmatpush1.msra.mxu0 %v575
        %856 = vmatprep.subr.mxu0 0.0
        %857 = vmatpush1.msra.mxu0 0.0
        %858 = vmatprep.subr.mxu0 0.0
        %859 = vmatpush1.msra.mxu0 0.0
        %860 = vmatprep.subr.mxu0 0.0
        %861 = vmatpush1.msra.mxu0 0.0
        %862 = vmatprep.subr.mxu0 0.0
        %863 = vmatpush1.msra.mxu0 0.0
        %864 = vmatprep.subr.mxu0 0.0
        %865 = vmatpush1.msra.mxu0 0.0
        %866 = vmatprep.subr.mxu0 0.0
        %867 = vmatpush1.msra.mxu0 0.0
        %868 = vmatprep.subr.mxu0 0.0
        %869 = vmatpush1.msra.mxu0 0.0
        %870 = vmatprep.subr.mxu0 0.0
        %871 = vmatpush1.msra.mxu0 0.0
        %872 = vmatprep.subr.mxu0 0.0
        %873 = vmatpush1.msra.mxu0 0.0
        %874 = vmatprep.subr.mxu0 0.0
        %875 = vmatpush1.msra.mxu0 0.0
        %876 = vmatprep.subr.mxu0 0.0
        %877 = vmatpush1.msra.mxu0 0.0
        %878 = vmatprep.subr.mxu0 0.0
        %879 = vmatpush1.msra.mxu0 0.0
        %880 = vmatprep.subr.mxu0 0.0
        %881 = vmatpush1.msra.mxu0 0.0
        %882 = vmatprep.subr.mxu0 0.0
        %883 = vmatpush1.msra.mxu0 0.0
        %884 = vmatprep.subr.mxu0 0.0
        %885 = vmatpush1.msra.mxu0 0.0
        %886 = vmatprep.subr.mxu0 0.0
        %887 = vmatpush1.msra.mxu0 0.0
        %888 = vmatprep.subr.mxu0 0.0
        %889 = vmatpush1.msra.mxu0 0.0
        %890 = vmatprep.subr.mxu0 0.0
        %891 = vmatpush1.msra.mxu0 0.0
        %892 = vmatprep.subr.mxu0 0.0
        %893 = vmatpush1.msra.mxu0 0.0
        %894 = vmatprep.subr.mxu0 0.0
        %895 = vmatpush1.msra.mxu0 0.0
        %896 = vmatprep.subr.mxu0 0.0
        %897 = vmatpush1.msra.mxu0 0.0
        %898 = vmatprep.subr.mxu0 0.0
        %899 = vmatpush1.msra.mxu0 0.0
        %900 = vmatprep.subr.mxu0 0.0
        %901 = vmatpush1.msra.mxu0 0.0
        %902 = vmatprep.subr.mxu0 0.0
        %903 = vmatpush1.msra.mxu0 0.0
        %904 = vmatprep.subr.mxu0 0.0
        %905 = vmatpush1.msra.mxu0 0.0
        %906 = vmatprep.subr.mxu0 0.0
        %907 = vmatpush1.msra.mxu0 0.0
        %908 = vmatprep.subr.mxu0 0.0
        %909 = vmatpush1.msra.mxu0 0.0
        %910 = vmatprep.subr.mxu0 0.0
        %911 = vmatpush1.msra.mxu0 0.0
        %912 = vmatprep.subr.mxu0 0.0
        %913 = vmatpush1.msra.mxu0 0.0
        %914 = vmatprep.mubr.f32.mxu0 0.0
        %915 = vmatmul.mubr.f32.gmra.mrb[0].mxu0 %v848
        %v916 = vpop.f32.mrb[0].mxu0
        %v917 = vadd.f32 0.0, %v916
        %v918 = vpop.f32.mrb[0].mxu0
        %919 = vdwg.mxu0
        %v921 = vrot.slane %v917, 7
        %vm923 = vcmask 1040384
        %v924 = vsel %vm923, %v567, %v921
        %v925 = vsel %vm923, %v921, 0.0
        %v926 = vsel %vm525, %v924, 0.0
        %927 = vadd.xlane.f32.xlu0 %v926
        %v928 = vpop.xlane.xlu0 %927
        %v929 = vsel %vm525, %v925, 0.0
        %930 = vadd.xlane.f32.xlu0 %v929
        %v931 = vpop.xlane.xlu0 %930
        %v932 = vmul.f32 %v928, %v589
        %v933 = vmul.f32 %v931, %v589
        %v934 = vsub.f32 %v924, %v932
        %v935 = vsub.f32 %v925, %v933
        %v936 = vmul.f32 %v934, %v934
        %v937 = vmul.f32 %v935, %v935
        %v938 = vsel %vm525, %v936, 0.0
        %939 = vadd.xlane.f32.xlu0 %v938
        %v940 = vpop.xlane.xlu0 %939
        %v941 = vsel %vm525, %v937, 0.0
        %942 = vadd.xlane.f32.xlu0 %v941
        %v943 = vpop.xlane.xlu0 %942
        %v944 = vmul.f32 %v940, %v589
        %v945 = vmul.f32 %v943, %v589
        %v946 = vadd.f32 %v944, 1e-05
        %v947 = vadd.f32 %v945, 1e-05
        %v948 = vrsqrt.pop %v946
        %v949 = vrsqrt.pop %v947
        %v950 = vmul.f32 %v934, %v948
        %v951 = vmul.f32 %v935, %v949
        %v952 = vlaneseq
        %v953 = vshrl.u32 %v952, 7
        %v954 = vsub.s32 4, %v953
        %v955 = vrot.slane %v413, %v954
        %v956 = vmul.f32 %v950, %v955
        %v957 = vmul.f32 %v951, %v955
        %v958 = vlaneseq
        %v959 = vshrl.u32 %v958, 7
        %v960 = vsub.s32 5, %v959
        %v961 = vrot.slane %v413, %v960
        %v962 = vadd.f32 %v956, %v961
        %v963 = vadd.f32 %v957, %v961
        %v964 = vcombine.high %v962, 0.0
        %v966 = vunpack.c.l.s4 1983009808
        %v967 = vunpack.c.0.s8 %v966
        %v968 = vlaneseq
        %v969 = vshrl.u32 %v968, 7
        %v970 = vsub.s32 %v967, %v969
        %v971 = vrot.slane %v962, %v970
        %v973 = vunpack.c.l.s4 1983009808
        %v974 = vunpack.c.0.s8 %v973
        %v975 = vlaneseq
        %v976 = vshrl.u32 %v975, 7
        %v977 = vsub.s32 %v974, %v976
        %v978 = vrot.slane %v964, %v977
        %v979 = vcombine.high %v971, 0.0
        %v981 = vunpack.c.l.s4 1934713408
        %v982 = vunpack.c.0.s8 %v981
        %v983 = vlaneseq
        %v984 = vshrl.u32 %v983, 7
        %v985 = vsub.s32 %v982, %v984
        %v986 = vrot.slane %v971, %v985
        %v988 = vunpack.c.l.s4 1934713408
        %v989 = vunpack.c.0.s8 %v988
        %v990 = vlaneseq
        %v991 = vshrl.u32 %v990, 7
        %v992 = vsub.s32 %v989, %v991
        %v993 = vrot.slane %v979, %v992
        %v994 = vcombine.high %v978, 0.0
        %v996 = vunpack.c.l.s4 1934713408
        %v997 = vunpack.c.0.s8 %v996
        %v998 = vlaneseq
        %v999 = vshrl.u32 %v998, 7
        %v1000 = vsub.s32 %v997, %v999
        %v1001 = vrot.slane %v978, %v1000
        %v1003 = vunpack.c.l.s4 1934713408
        %v1004 = vunpack.c.0.s8 %v1003
        %v1005 = vlaneseq
        %v1006 = vshrl.u32 %v1005, 7
        %v1007 = vsub.s32 %v1004, %v1006
        %v1008 = vrot.slane %v994, %v1007
        %v1009 = vcombine.high %v986, 0.0
        %v1010 = vcombine.high %v993, 0.0
        %v1011 = vcombine.high %v1001, 0.0
        %v1012 = vcombine.high %v1008, 0.0
        %v1013 = vcombine.high %v963, 0.0
        %v1015 = vunpack.c.l.s4 1983009808
        %v1016 = vunpack.c.0.s8 %v1015
        %v1017 = vlaneseq
        %v1018 = vshrl.u32 %v1017, 7
        %v1019 = vsub.s32 %v1016, %v1018
        %v1020 = vrot.slane %v963, %v1019
        %v1022 = vunpack.c.l.s4 1983009808
        %v1023 = vunpack.c.0.s8 %v1022
        %v1024 = vlaneseq
        %v1025 = vshrl.u32 %v1024, 7
        %v1026 = vsub.s32 %v1023, %v1025
        %v1027 = vrot.slane %v1013, %v1026
        %v1028 = vcombine.high %v1020, 0.0
        %v1030 = vunpack.c.l.s4 1934713408
        %v1031 = vunpack.c.0.s8 %v1030
        %v1032 = vlaneseq
        %v1033 = vshrl.u32 %v1032, 7
        %v1034 = vsub.s32 %v1031, %v1033
        %v1035 = vrot.slane %v1020, %v1034
        %v1037 = vunpack.c.l.s4 1934713408
        %v1038 = vunpack.c.0.s8 %v1037
        %v1039 = vlaneseq
        %v1040 = vshrl.u32 %v1039, 7
        %v1041 = vsub.s32 %v1038, %v1040
        %v1042 = vrot.slane %v1028, %v1041
        %v1043 = vcombine.high %v1027, 0.0
        %v1045 = vunpack.c.l.s4 1934713408
        %v1046 = vunpack.c.0.s8 %v1045
        %v1047 = vlaneseq
        %v1048 = vshrl.u32 %v1047, 7
        %v1049 = vsub.s32 %v1046, %v1048
        %v1050 = vrot.slane %v1027, %v1049
        %v1052 = vunpack.c.l.s4 1934713408
        %v1053 = vunpack.c.0.s8 %v1052
        %v1054 = vlaneseq
        %v1055 = vshrl.u32 %v1054, 7
        %v1056 = vsub.s32 %v1053, %v1055
        %v1057 = vrot.slane %v1043, %v1056
        %v1058 = vcombine.high %v1035, 0.0
        %v1059 = vcombine.high %v1042, 0.0
        %v1060 = vcombine.high %v1050, 0.0
        %v1061 = vcombine.high %v1057, 0.0
        %v1062 = vld [vmem:[%s7] sm:$0xf]
        %v1063 = vld [vmem:[%s7 + $0x4] sm:$0xf]
        %v1064 = vld [vmem:[%s7 + $0x8] sm:$0xf]
        %v1065 = vld [vmem:[%s7 + $0xc] sm:$0xf]
        %v1066 = vld [vmem:[%s7 + $0x10] sm:$0xf]
        %v1067 = vld [vmem:[%s8] sm:$0xf]
        %v1068 = vld [vmem:[%s8 + $0x4] sm:$0xf]
        %v1069 = vpack.c.bf16 %v986, %v986
        %v1070 = vpack.c.bf16 %v1009, %v1009
        %v1071 = vpack.c.bf16 %v993, %v993
        %v1072 = vpack.c.bf16 %v1010, %v1010
        %v1073 = vpack.c.bf16 %v1001, %v1001
        %v1074 = vpack.c.bf16 %v1011, %v1011
        %v1075 = vpack.c.bf16 %v1008, %v1008
        %v1076 = vpack.c.bf16 %v1012, %v1012
        %v1077 = vpack.c.bf16 %v1035, %v1035
        %v1078 = vpack.c.bf16 %v1058, %v1058
        %v1079 = vpack.c.bf16 %v1042, %v1042
        %v1080 = vpack.c.bf16 %v1059, %v1059
        %v1081 = vpack.c.bf16 %v1050, %v1050
        %v1082 = vpack.c.bf16 %v1060, %v1060
        %v1083 = vpack.c.bf16 %v1057, %v1057
        %v1084 = vpack.c.bf16 %v1061, %v1061
        %1086 = vset.pattern.permute.xlu0 0
        %1087 = vperm.xlu0 %1086, %v415
        %v1088 = vpop.permute.xlu0 %1087
        %1091 = vset.pattern.permute.xlu0 0
        %1092 = vperm.xlu0 %1091, %v416
        %v1093 = vpop.permute.xlu0 %1092
        %1096 = vset.pattern.permute.xlu0 0
        %1097 = vperm.xlu0 %1096, %v417
        %v1098 = vpop.permute.xlu0 %1097
        %1101 = vset.pattern.permute.xlu0 0
        %1102 = vperm.xlu0 %1101, %v418
        %v1103 = vpop.permute.xlu0 %1102
        %1106 = vset.pattern.permute.xlu0 0
        %1107 = vperm.xlu0 %1106, %v419
        %v1108 = vpop.permute.xlu0 %1107
        %v1115 = vunpack.c.l.b16 %v1062
        %v1116 = vunpack.c.l.b16 %v1063
        %v1117 = vunpack.c.l.b16 %v1064
        %v1118 = vunpack.c.l.b16 %v1065
        %v1119 = vunpack.c.l.b16 %v1066
        %v1120 = vpack.c.b16 %v1116, %v1115
        %v1121 = vpack.c.b16 %v1118, %v1117
        %v1122 = vpack.c.b16 %v1119, %v1119
        %v1139 = vunpack.c.l.b16 %v1069
        %v1140 = vunpack.c.l.b16 %v1070
        %v1141 = vunpack.c.l.b16 %v1071
        %v1142 = vunpack.c.l.b16 %v1072
        %v1143 = vunpack.c.l.b16 %v1073
        %v1144 = vunpack.c.l.b16 %v1074
        %v1145 = vunpack.c.l.b16 %v1075
        %v1146 = vunpack.c.l.b16 %v1076
        %v1147 = vunpack.c.l.b16 %v1077
        %v1148 = vunpack.c.l.b16 %v1078
        %v1149 = vunpack.c.l.b16 %v1079
        %v1150 = vunpack.c.l.b16 %v1080
        %v1151 = vunpack.c.l.b16 %v1081
        %v1152 = vunpack.c.l.b16 %v1082
        %v1153 = vunpack.c.l.b16 %v1083
        %v1154 = vunpack.c.l.b16 %v1084
        %v1155 = vrot.slane %v1140, 7
        %vm1156 = vcmask 1041409
        %v1157 = vsel %vm1156, %v1155, %v1139
        %v1158 = vrot.slane %v1141, 6
        %vm1159 = vcmask 1042434
        %v1160 = vsel %vm1159, %v1158, %v1157
        %v1161 = vrot.slane %v1142, 5
        %vm1162 = vcmask 1043459
        %v1163 = vsel %vm1162, %v1161, %v1160
        %v1164 = vrot.slane %v1143, 4
        %vm1165 = vcmask 1044484
        %v1166 = vsel %vm1165, %v1164, %v1163
        %v1167 = vrot.slane %v1144, 3
        %vm1168 = vcmask 1045509
        %v1169 = vsel %vm1168, %v1167, %v1166
        %v1170 = vrot.slane %v1145, 2
        %vm1171 = vcmask 1046534
        %v1172 = vsel %vm1171, %v1170, %v1169
        %v1173 = vrot.slane %v1146, 1
        %vm1174 = vcmask 1047559
        %v1175 = vsel %vm1174, %v1173, %v1172
        %v1176 = vrot.slane %v1148, 7
        %v1177 = vsel %vm1156, %v1176, %v1147
        %v1178 = vrot.slane %v1149, 6
        %v1179 = vsel %vm1159, %v1178, %v1177
        %v1180 = vrot.slane %v1150, 5
        %v1181 = vsel %vm1162, %v1180, %v1179
        %v1182 = vrot.slane %v1151, 4
        %v1183 = vsel %vm1165, %v1182, %v1181
        %v1184 = vrot.slane %v1152, 3
        %v1185 = vsel %vm1168, %v1184, %v1183
        %v1186 = vrot.slane %v1153, 2
        %v1187 = vsel %vm1171, %v1186, %v1185
        %v1188 = vrot.slane %v1154, 1
        %v1189 = vsel %vm1174, %v1188, %v1187
        %v1190 = vpack.c.b16 %v1189, %v1175
        %v1193 = vsel %vm525, %v1120, 0
        %v1196 = vsel %vm525, %v1121, 0
        %v1199 = vsel %vm525, %v1122, 0
        %1201 = vmatprep.subr.bf16.mxu0 0
        %1202 = vmatpush1.bf16.msra.mxu0 %v1190
        %1203 = vmatprep.subr.bf16.mxu0 0
        %1204 = vmatpush1.bf16.msra.mxu0 0
        %1205 = vmatprep.subr.bf16.mxu0 0
        %1206 = vmatpush1.bf16.msra.mxu0 0
        %1207 = vmatprep.subr.bf16.mxu0 0
        %1208 = vmatpush1.bf16.msra.mxu0 0
        %1209 = vmatprep.subr.bf16.mxu0 0
        %1210 = vmatpush1.bf16.msra.mxu0 0
        %1211 = vmatprep.subr.bf16.mxu0 0
        %1212 = vmatpush1.bf16.msra.mxu0 0
        %1213 = vmatprep.subr.bf16.mxu0 0
        %1214 = vmatpush1.bf16.msra.mxu0 0
        %1215 = vmatprep.subr.bf16.mxu0 0
        %1216 = vmatpush1.bf16.msra.mxu0 0
        %1217 = vmatprep.subr.bf16.mxu0 0
        %1218 = vmatpush1.bf16.msra.mxu0 0
        %1219 = vmatprep.subr.bf16.mxu0 0
        %1220 = vmatpush1.bf16.msra.mxu0 0
        %1221 = vmatprep.subr.bf16.mxu0 0
        %1222 = vmatpush1.bf16.msra.mxu0 0
        %1223 = vmatprep.subr.bf16.mxu0 0
        %1224 = vmatpush1.bf16.msra.mxu0 0
        %1225 = vmatprep.subr.bf16.mxu0 0
        %1226 = vmatpush1.bf16.msra.mxu0 0
        %1227 = vmatprep.subr.bf16.mxu0 0
        %1228 = vmatpush1.bf16.msra.mxu0 0
        %1229 = vmatprep.subr.bf16.mxu0 0
        %1230 = vmatpush1.bf16.msra.mxu0 0
        %1231 = vmatprep.subr.bf16.mxu0 0
        %1232 = vmatpush1.bf16.msra.mxu0 0
        %1233 = vmatprep.mubr.bf16.mxu0 0
        %1234 = vmatmul.mubr.bf16.gmra.mrb[0].mxu0 %v1193
        %v1235 = vpop.f32.mrb[0].mxu0
        %v1236 = vadd.f32 %v1088, %v1235
        %v1237 = vpop.f32.mrb[0].mxu0
        %v1238 = vpop.f32.mrb[0].mxu0
        %v1239 = vadd.f32 %v1093, %v1238
        %v1240 = vpop.f32.mrb[0].mxu0
        %1241 = vmatprep.mubr.bf16.mxu0 0
        %1242 = vmatmul.mubr.bf16.gmra.mrb[0].mxu0 %v1196
        %v1243 = vpop.f32.mrb[0].mxu0
        %v1244 = vadd.f32 %v1098, %v1243
        %v1245 = vpop.f32.mrb[0].mxu0
        %v1246 = vpop.f32.mrb[0].mxu0
        %v1247 = vadd.f32 %v1103, %v1246
        %v1248 = vpop.f32.mrb[0].mxu0
        %1249 = vmatprep.mubr.bf16.mxu0 0
        %1250 = vmatmul.mubr.bf16.gmra.mrb[0].mxu0 %v1199
        %v1251 = vpop.f32.mrb[0].mxu0
        %v1252 = vadd.f32 %v1108, %v1251
        %v1253 = vpop.f32.mrb[0].mxu0
        %v1254 = vpop.f32.mrb[0].mxu0
        %v1255 = vpop.f32.mrb[0].mxu0
        %1256 = vdwg.mxu0
        %v1257 = vmul.f32 %v1236, 0.5
        %v1258 = vmul.f32 %v1239, 0.5
        %v1259 = vmul.f32 %v1244, 0.5
        %v1260 = vmul.f32 %v1247, 0.5
        %v1261 = vmul.f32 %v1252, 0.5
        %v1262 = vmul.f32 %v1236, 0.70710677
        %v1263 = vmul.f32 %v1239, 0.70710677
        %v1264 = vmul.f32 %v1244, 0.70710677
        %v1265 = vmul.f32 %v1247, 0.70710677
        %v1266 = vmul.f32 %v1252, 0.70710677
        %v1267 = vand.u32 2147483647, %v1262
        %v1268 = vand.u32 2147483647, %v1263
        %v1269 = vand.u32 2147483647, %v1264
        %v1270 = vand.u32 2147483647, %v1265
        %v1271 = vand.u32 2147483647, %v1266
        %v1272 = vmul.f32 %v1267, 0.3275911
        %v1273 = vmul.f32 %v1268, 0.3275911
        %v1274 = vmul.f32 %v1269, 0.3275911
        %v1275 = vmul.f32 %v1270, 0.3275911
        %v1276 = vmul.f32 %v1271, 0.3275911
        %v1277 = vadd.f32 %v1272, 1.0
        %v1278 = vadd.f32 %v1273, 1.0
        %v1279 = vadd.f32 %v1274, 1.0
        %v1280 = vadd.f32 %v1275, 1.0
        %v1281 = vadd.f32 %v1276, 1.0
        %v1282 = vrcp.pop %v1277
        %v1283 = vrcp.pop %v1278
        %v1284 = vrcp.pop %v1279
        %v1285 = vrcp.pop %v1280
        %v1286 = vrcp.pop %v1281
        %v1287 = vmul.f32 %v1282, 1.0614054
        %v1288 = vmul.f32 %v1283, 1.0614054
        %v1289 = vmul.f32 %v1284, 1.0614054
        %v1290 = vmul.f32 %v1285, 1.0614054
        %v1291 = vmul.f32 %v1286, 1.0614054
        %v1292 = vadd.f32 %v1287, -1.4531521
        %v1293 = vadd.f32 %v1288, -1.4531521
        %v1294 = vadd.f32 %v1289, -1.4531521
        %v1295 = vadd.f32 %v1290, -1.4531521
        %v1296 = vadd.f32 %v1291, -1.4531521
        %v1297 = vmul.f32 %v1292, %v1282
        %v1298 = vmul.f32 %v1293, %v1283
        %v1299 = vmul.f32 %v1294, %v1284
        %v1300 = vmul.f32 %v1295, %v1285
        %v1301 = vmul.f32 %v1296, %v1286
        %v1302 = vadd.f32 %v1297, 1.4214138
        %v1303 = vadd.f32 %v1298, 1.4214138
        %v1304 = vadd.f32 %v1299, 1.4214138
        %v1305 = vadd.f32 %v1300, 1.4214138
        %v1306 = vadd.f32 %v1301, 1.4214138
        %v1307 = vmul.f32 %v1302, %v1282
        %v1308 = vmul.f32 %v1303, %v1283
        %v1309 = vmul.f32 %v1304, %v1284
        %v1310 = vmul.f32 %v1305, %v1285
        %v1311 = vmul.f32 %v1306, %v1286
        %v1312 = vadd.f32 %v1307, -0.28449672
        %v1313 = vadd.f32 %v1308, -0.28449672
        %v1314 = vadd.f32 %v1309, -0.28449672
        %v1315 = vadd.f32 %v1310, -0.28449672
        %v1316 = vadd.f32 %v1311, -0.28449672
        %v1317 = vmul.f32 %v1312, %v1282
        %v1318 = vmul.f32 %v1313, %v1283
        %v1319 = vmul.f32 %v1314, %v1284
        %v1320 = vmul.f32 %v1315, %v1285
        %v1321 = vmul.f32 %v1316, %v1286
        %v1322 = vadd.f32 %v1317, 0.2548296
        %v1323 = vadd.f32 %v1318, 0.2548296
        %v1324 = vadd.f32 %v1319, 0.2548296
        %v1325 = vadd.f32 %v1320, 0.2548296
        %v1326 = vadd.f32 %v1321, 0.2548296
        %v1327 = vmul.f32 %v1322, %v1282
        %v1328 = vmul.f32 %v1323, %v1283
        %v1329 = vmul.f32 %v1324, %v1284
        %v1330 = vmul.f32 %v1325, %v1285
        %v1331 = vmul.f32 %v1326, %v1286
        %v1332 = vsub.f32 0.0, %v1267
        %v1333 = vsub.f32 0.0, %v1268
        %v1334 = vsub.f32 0.0, %v1269
        %v1335 = vsub.f32 0.0, %v1270
        %v1336 = vsub.f32 0.0, %v1271
        %v1337 = vmul.f32 %v1332, %v1267
        %v1338 = vmul.f32 %v1333, %v1268
        %v1339 = vmul.f32 %v1334, %v1269
        %v1340 = vmul.f32 %v1335, %v1270
        %v1341 = vmul.f32 %v1336, %v1271
        %v1342 = vmul.f32 %v1337, 1.442695
        %v1343 = vpow.pop %v1342
        %v1344 = vmul.f32 %v1338, 1.442695
        %v1345 = vpow.pop %v1344
        %v1346 = vmul.f32 %v1339, 1.442695
        %v1347 = vpow.pop %v1346
        %v1348 = vmul.f32 %v1340, 1.442695
        %v1349 = vpow.pop %v1348
        %v1350 = vmul.f32 %v1341, 1.442695
        %v1351 = vpow.pop %v1350
        %v1352 = vmul.f32 %v1327, %v1343
        %v1353 = vmul.f32 %v1328, %v1345
        %v1354 = vmul.f32 %v1329, %v1347
        %v1355 = vmul.f32 %v1330, %v1349
        %v1356 = vmul.f32 %v1331, %v1351
        %v1357 = vsub.f32 1.0, %v1352
        %v1358 = vsub.f32 1.0, %v1353
        %v1359 = vsub.f32 1.0, %v1354
        %v1360 = vsub.f32 1.0, %v1355
        %v1361 = vsub.f32 1.0, %v1356
        %vm1362 = vcmp.ge.f32.partialorder %v1262, 0.0
        %vm1363 = vcmp.ge.f32.partialorder %v1263, 0.0
        %vm1364 = vcmp.ge.f32.partialorder %v1264, 0.0
        %vm1365 = vcmp.ge.f32.partialorder %v1265, 0.0
        %vm1366 = vcmp.ge.f32.partialorder %v1266, 0.0
        %v1367 = vsub.f32 0.0, %v1357
        %v1368 = vsub.f32 0.0, %v1358
        %v1369 = vsub.f32 0.0, %v1359
        %v1370 = vsub.f32 0.0, %v1360
        %v1371 = vsub.f32 0.0, %v1361
        %v1372 = vsel %vm1362, %v1357, %v1367
        %v1373 = vsel %vm1363, %v1358, %v1368
        %v1374 = vsel %vm1364, %v1359, %v1369
        %v1375 = vsel %vm1365, %v1360, %v1370
        %v1376 = vsel %vm1366, %v1361, %v1371
        %v1377 = vadd.f32 %v1372, 1.0
        %v1378 = vadd.f32 %v1373, 1.0
        %v1379 = vadd.f32 %v1374, 1.0
        %v1380 = vadd.f32 %v1375, 1.0
        %v1381 = vadd.f32 %v1376, 1.0
        %v1382 = vmul.f32 %v1257, %v1377
        %v1383 = vmul.f32 %v1258, %v1378
        %v1384 = vmul.f32 %v1259, %v1379
        %v1385 = vmul.f32 %v1260, %v1380
        %v1386 = vmul.f32 %v1261, %v1381
        %v1387 = vpack.c.bf16 %v1383, %v1382
        %v1388 = vpack.c.bf16 %v1385, %v1384
        %v1389 = vpack.c.bf16 %v1386, %v1386
        %1391 = vset.pattern.permute.xlu0 0
        %1392 = vperm.xlu0 %1391, %v420
        %v1393 = vpop.permute.xlu0 %1392
        %1396 = vset.pattern.permute.xlu0 0
        %1397 = vperm.xlu0 %1396, %v421
        %v1398 = vpop.permute.xlu0 %1397
        %v1402 = vunpack.c.l.b16 %v1067
        %v1403 = vunpack.c.l.b16 %v1068
        %v1404 = vpack.c.b16 %v1403, %v1402
        %vm1405 = vcmask 326656
        %v1407 = vsel %vm1405, %v1404, 0
        %vm1409 = vcmask 1043456
        %v1411 = vsel %vm1409, %v1389, 0
        %1413 = vmatprep.subr.bf16.mxu0 0
        %1414 = vmatpush1.bf16.msra.mxu0 %v1387
        %1415 = vmatprep.subr.bf16.mxu0 0
        %1416 = vmatpush1.bf16.msra.mxu0 %v1388
        %1417 = vmatprep.subr.bf16.mxu0 0
        %1418 = vmatpush1.bf16.msra.mxu0 %v1411
        %1419 = vmatprep.subr.bf16.mxu0 0
        %1420 = vmatpush1.bf16.msra.mxu0 0
        %1421 = vmatprep.subr.bf16.mxu0 0
        %1422 = vmatpush1.bf16.msra.mxu0 0
        %1423 = vmatprep.subr.bf16.mxu0 0
        %1424 = vmatpush1.bf16.msra.mxu0 0
        %1425 = vmatprep.subr.bf16.mxu0 0
        %1426 = vmatpush1.bf16.msra.mxu0 0
        %1427 = vmatprep.subr.bf16.mxu0 0
        %1428 = vmatpush1.bf16.msra.mxu0 0
        %1429 = vmatprep.subr.bf16.mxu0 0
        %1430 = vmatpush1.bf16.msra.mxu0 0
        %1431 = vmatprep.subr.bf16.mxu0 0
        %1432 = vmatpush1.bf16.msra.mxu0 0
        %1433 = vmatprep.subr.bf16.mxu0 0
        %1434 = vmatpush1.bf16.msra.mxu0 0
        %1435 = vmatprep.subr.bf16.mxu0 0
        %1436 = vmatpush1.bf16.msra.mxu0 0
        %1437 = vmatprep.subr.bf16.mxu0 0
        %1438 = vmatpush1.bf16.msra.mxu0 0
        %1439 = vmatprep.subr.bf16.mxu0 0
        %1440 = vmatpush1.bf16.msra.mxu0 0
        %1441 = vmatprep.subr.bf16.mxu0 0
        %1442 = vmatpush1.bf16.msra.mxu0 0
        %1443 = vmatprep.subr.bf16.mxu0 0
        %1444 = vmatpush1.bf16.msra.mxu0 0
        %1445 = vmatprep.mubr.bf16.mxu0 0
        %1446 = vmatmul.mubr.bf16.gmra.mrb[0].mxu0 %v1407
        %v1447 = vpop.f32.mrb[0].mxu0
        %v1448 = vadd.f32 %v1393, %v1447
        %v1449 = vpop.f32.mrb[0].mxu0
        %v1450 = vpop.f32.mrb[0].mxu0
        %v1451 = vadd.f32 %v1398, %v1450
        %v1452 = vpop.f32.mrb[0].mxu0
        %1453 = vdwg.mxu0
        %v1456 = vcombine.high %v1448, %v1448
        %v1458 = vunpack.c.l.s4 1966171168
        %v1459 = vunpack.c.0.s8 %v1458
        %v1460 = vlaneseq
        %v1461 = vshrl.u32 %v1460, 7
        %v1462 = vsub.s32 %v1459, %v1461
        %v1463 = vrot.slane %v1448, %v1462
        %v1465 = vunpack.c.l.s4 1966171168
        %v1466 = vunpack.c.0.s8 %v1465
        %v1467 = vlaneseq
        %v1468 = vshrl.u32 %v1467, 7
        %v1469 = vsub.s32 %v1466, %v1468
        %v1470 = vrot.slane %v1456, %v1469
        %v1471 = vcombine.high %v1463, %v1463
        %v1472 = vcombine.high %v1470, %v1470
        %v1474 = vunpack.c.l.s4 1966171168
        %v1475 = vunpack.c.0.s8 %v1474
        %v1476 = vlaneseq
        %v1477 = vshrl.u32 %v1476, 7
        %v1478 = vsub.s32 %v1475, %v1477
        %v1479 = vrot.slane %v1463, %v1478
        %v1481 = vunpack.c.l.s4 1966171168
        %v1482 = vunpack.c.0.s8 %v1481
        %v1483 = vlaneseq
        %v1484 = vshrl.u32 %v1483, 7
        %v1485 = vsub.s32 %v1482, %v1484
        %v1486 = vrot.slane %v1470, %v1485
        %v1488 = vunpack.c.l.s4 1966171168
        %v1489 = vunpack.c.0.s8 %v1488
        %v1490 = vlaneseq
        %v1491 = vshrl.u32 %v1490, 7
        %v1492 = vsub.s32 %v1489, %v1491
        %v1493 = vrot.slane %v1471, %v1492
        %v1495 = vunpack.c.l.s4 1966171168
        %v1496 = vunpack.c.0.s8 %v1495
        %v1497 = vlaneseq
        %v1498 = vshrl.u32 %v1497, 7
        %v1499 = vsub.s32 %v1496, %v1498
        %v1500 = vrot.slane %v1472, %v1499
        %v1501 = vcombine.high %v1479, %v1479
        %v1502 = vcombine.high %v1486, %v1486
        %v1503 = vcombine.high %v1493, %v1493
        %v1504 = vcombine.high %v1500, %v1500
        %v1505 = vcombine.high %v1451, %v1451
        %v1507 = vunpack.c.l.s4 1966171168
        %v1508 = vunpack.c.0.s8 %v1507
        %v1509 = vlaneseq
        %v1510 = vshrl.u32 %v1509, 7
        %v1511 = vsub.s32 %v1508, %v1510
        %v1512 = vrot.slane %v1451, %v1511
        %v1514 = vunpack.c.l.s4 1966171168
        %v1515 = vunpack.c.0.s8 %v1514
        %v1516 = vlaneseq
        %v1517 = vshrl.u32 %v1516, 7
        %v1518 = vsub.s32 %v1515, %v1517
        %v1519 = vrot.slane %v1505, %v1518
        %v1520 = vcombine.high %v1512, %v1512
        %v1521 = vcombine.high %v1519, %v1519
        %v1523 = vunpack.c.l.s4 1966171168
        %v1524 = vunpack.c.0.s8 %v1523
        %v1525 = vlaneseq
        %v1526 = vshrl.u32 %v1525, 7
        %v1527 = vsub.s32 %v1524, %v1526
        %v1528 = vrot.slane %v1512, %v1527
        %v1530 = vunpack.c.l.s4 1966171168
        %v1531 = vunpack.c.0.s8 %v1530
        %v1532 = vlaneseq
        %v1533 = vshrl.u32 %v1532, 7
        %v1534 = vsub.s32 %v1531, %v1533
        %v1535 = vrot.slane %v1519, %v1534
        %v1537 = vunpack.c.l.s4 1966171168
        %v1538 = vunpack.c.0.s8 %v1537
        %v1539 = vlaneseq
        %v1540 = vshrl.u32 %v1539, 7
        %v1541 = vsub.s32 %v1538, %v1540
        %v1542 = vrot.slane %v1520, %v1541
        %v1544 = vunpack.c.l.s4 1966171168
        %v1545 = vunpack.c.0.s8 %v1544
        %v1546 = vlaneseq
        %v1547 = vshrl.u32 %v1546, 7
        %v1548 = vsub.s32 %v1545, %v1547
        %v1549 = vrot.slane %v1521, %v1548
        %v1550 = vcombine.high %v1528, %v1528
        %v1551 = vcombine.high %v1535, %v1535
        %v1552 = vcombine.high %v1542, %v1542
        %v1553 = vcombine.high %v1549, %v1549
        %v1554 = vcombine.low %v1479, %v1493
        %v1555 = vcombine.low %v1501, %v1503
        %v1556 = vcombine.low %v1486, %v1500
        %v1557 = vcombine.low %v1502, %v1504
        %v1559 = vunpack.c.l.s4 1966171168
        %v1560 = vunpack.c.0.s8 %v1559
        %v1561 = vlaneseq
        %v1562 = vshrl.u32 %v1561, 7
        %v1563 = vsub.s32 %v1560, %v1562
        %v1564 = vrot.slane %v1554, %v1563
        %v1566 = vunpack.c.l.s4 1966171168
        %v1567 = vunpack.c.0.s8 %v1566
        %v1568 = vlaneseq
        %v1569 = vshrl.u32 %v1568, 7
        %v1570 = vsub.s32 %v1567, %v1569
        %v1571 = vrot.slane %v1555, %v1570
        %v1573 = vunpack.c.l.s4 1966171168
        %v1574 = vunpack.c.0.s8 %v1573
        %v1575 = vlaneseq
        %v1576 = vshrl.u32 %v1575, 7
        %v1577 = vsub.s32 %v1574, %v1576
        %v1578 = vrot.slane %v1556, %v1577
        %v1580 = vunpack.c.l.s4 1966171168
        %v1581 = vunpack.c.0.s8 %v1580
        %v1582 = vlaneseq
        %v1583 = vshrl.u32 %v1582, 7
        %v1584 = vsub.s32 %v1581, %v1583
        %v1585 = vrot.slane %v1557, %v1584
        %v1586 = vcombine.low %v1564, %v1571
        %v1587 = vcombine.low %v1578, %v1585
        %v1589 = vunpack.c.l.s4 1966171168
        %v1590 = vunpack.c.0.s8 %v1589
        %v1591 = vlaneseq
        %v1592 = vshrl.u32 %v1591, 7
        %v1593 = vsub.s32 %v1590, %v1592
        %v1594 = vrot.slane %v1586, %v1593
        %v1596 = vunpack.c.l.s4 1966171168
        %v1597 = vunpack.c.0.s8 %v1596
        %v1598 = vlaneseq
        %v1599 = vshrl.u32 %v1598, 7
        %v1600 = vsub.s32 %v1597, %v1599
        %v1601 = vrot.slane %v1587, %v1600
        %v1602 = vcombine.low %v1594, %v1601
        %v1603 = vcombine.low %v1528, %v1542
        %v1604 = vcombine.low %v1550, %v1552
        %v1605 = vcombine.low %v1535, %v1549
        %v1606 = vcombine.low %v1551, %v1553
        %v1608 = vunpack.c.l.s4 1966171168
        %v1609 = vunpack.c.0.s8 %v1608
        %v1610 = vlaneseq
        %v1611 = vshrl.u32 %v1610, 7
        %v1612 = vsub.s32 %v1609, %v1611
        %v1613 = vrot.slane %v1603, %v1612
        %v1615 = vunpack.c.l.s4 1966171168
        %v1616 = vunpack.c.0.s8 %v1615
        %v1617 = vlaneseq
        %v1618 = vshrl.u32 %v1617, 7
        %v1619 = vsub.s32 %v1616, %v1618
        %v1620 = vrot.slane %v1604, %v1619
        %v1622 = vunpack.c.l.s4 1966171168
        %v1623 = vunpack.c.0.s8 %v1622
        %v1624 = vlaneseq
        %v1625 = vshrl.u32 %v1624, 7
        %v1626 = vsub.s32 %v1623, %v1625
        %v1627 = vrot.slane %v1605, %v1626
        %v1629 = vunpack.c.l.s4 1966171168
        %v1630 = vunpack.c.0.s8 %v1629
        %v1631 = vlaneseq
        %v1632 = vshrl.u32 %v1631, 7
        %v1633 = vsub.s32 %v1630, %v1632
        %v1634 = vrot.slane %v1606, %v1633
        %v1635 = vcombine.low %v1613, %v1620
        %v1636 = vcombine.low %v1627, %v1634
        %v1638 = vunpack.c.l.s4 1966171168
        %v1639 = vunpack.c.0.s8 %v1638
        %v1640 = vlaneseq
        %v1641 = vshrl.u32 %v1640, 7
        %v1642 = vsub.s32 %v1639, %v1641
        %v1643 = vrot.slane %v1635, %v1642
        %v1645 = vunpack.c.l.s4 1966171168
        %v1646 = vunpack.c.0.s8 %v1645
        %v1647 = vlaneseq
        %v1648 = vshrl.u32 %v1647, 7
        %v1649 = vsub.s32 %v1646, %v1648
        %v1650 = vrot.slane %v1636, %v1649
        %v1651 = vcombine.low %v1643, %v1650
        %v1654 = vadd.f32 %v924, %v1602
        %v1655 = vadd.f32 %v925, %v1651
        %v1656 = vsel %vm525, %v1654, 0.0
        %1657 = vadd.xlane.f32.xlu0 %v1656
        %v1658 = vpop.xlane.xlu0 %1657
        %v1659 = vsel %vm525, %v1655, 0.0
        %1660 = vadd.xlane.f32.xlu0 %v1659
        %v1661 = vpop.xlane.xlu0 %1660
        %v1662 = vmul.f32 %v1658, %v589
        %v1663 = vmul.f32 %v1661, %v589
        %v1664 = vsub.f32 %v1654, %v1662
        %v1665 = vsub.f32 %v1655, %v1663
        %v1666 = vmul.f32 %v1664, %v1664
        %v1667 = vmul.f32 %v1665, %v1665
        %v1668 = vsel %vm525, %v1666, 0.0
        %1669 = vadd.xlane.f32.xlu0 %v1668
        %v1670 = vpop.xlane.xlu0 %1669
        %v1671 = vsel %vm525, %v1667, 0.0
        %1672 = vadd.xlane.f32.xlu0 %v1671
        %v1673 = vpop.xlane.xlu0 %1672
        %v1674 = vmul.f32 %v1670, %v589
        %v1675 = vmul.f32 %v1673, %v589
        %v1676 = vadd.f32 %v1674, 1e-05
        %v1677 = vadd.f32 %v1675, 1e-05
        %v1678 = vrsqrt.pop %v1676
        %v1679 = vrsqrt.pop %v1677
        %v1680 = vmul.f32 %v1664, %v1678
        %v1681 = vmul.f32 %v1665, %v1679
        %v1682 = vlaneseq
        %v1683 = vshrl.u32 %v1682, 7
        %v1684 = vsub.s32 6, %v1683
        %v1685 = vrot.slane %v413, %v1684
        %v1686 = vmul.f32 %v1680, %v1685
        %v1687 = vmul.f32 %v1681, %v1685
        %v1688 = vlaneseq
        %v1689 = vshrl.u32 %v1688, 7
        %v1690 = vsub.s32 7, %v1689
        %v1691 = vrot.slane %v413, %v1690
        %v1692 = vadd.f32 %v1686, %v1691
        %v1693 = vadd.f32 %v1687, %v1691
        %v1694 = vld [vmem:[%s5] sm:$0xf]
        %v1695 = vld [vmem:[%s5 + $0x4] sm:$0xf]
        %v1696 = vpack.c.bf16 %v1693, %v1692
        %v1697 = vld [vmem:[%s10] sm:$0x1]
        %v1699 = vlaneseq
        %v1700 = vshrl.u32 %v1699, 7
        %v1701 = vsub.s32 0, %v1700
        %v1702 = vrot.slane %v1697, %v1701
        %v1706 = vunpack.c.l.b16 %v1694
        %v1707 = vunpack.c.l.b16 %v1695
        %v1708 = vpack.c.b16 %v1707, %v1706
        %v1711 = vsel %vm525, %v1696, 0
        %1713 = vmatprep.subr.bf16.mxu0 0
        %1714 = vmatpush1.bf16.msra.mxu0 %v1708
        %1715 = vmatprep.subr.bf16.mxu0 0
        %1716 = vmatpush1.bf16.msra.mxu0 0
        %1717 = vmatprep.subr.bf16.mxu0 0
        %1718 = vmatpush1.bf16.msra.mxu0 0
        %1719 = vmatprep.subr.bf16.mxu0 0
        %1720 = vmatpush1.bf16.msra.mxu0 0
        %1721 = vmatprep.subr.bf16.mxu0 0
        %1722 = vmatpush1.bf16.msra.mxu0 0
        %1723 = vmatprep.subr.bf16.mxu0 0
        %1724 = vmatpush1.bf16.msra.mxu0 0
        %1725 = vmatprep.subr.bf16.mxu0 0
        %1726 = vmatpush1.bf16.msra.mxu0 0
        %1727 = vmatprep.subr.bf16.mxu0 0
        %1728 = vmatpush1.bf16.msra.mxu0 0
        %1729 = vmatprep.subr.bf16.mxu0 0
        %1730 = vmatpush1.bf16.msra.mxu0 0
        %1731 = vmatprep.subr.bf16.mxu0 0
        %1732 = vmatpush1.bf16.msra.mxu0 0
        %1733 = vmatprep.subr.bf16.mxu0 0
        %1734 = vmatpush1.bf16.msra.mxu0 0
        %1735 = vmatprep.subr.bf16.mxu0 0
        %1736 = vmatpush1.bf16.msra.mxu0 0
        %1737 = vmatprep.subr.bf16.mxu0 0
        %1738 = vmatpush1.bf16.msra.mxu0 0
        %1739 = vmatprep.subr.bf16.mxu0 0
        %1740 = vmatpush1.bf16.msra.mxu0 0
        %1741 = vmatprep.subr.bf16.mxu0 0
        %1742 = vmatpush1.bf16.msra.mxu0 0
        %1743 = vmatprep.subr.bf16.mxu0 0
        %1744 = vmatpush1.bf16.msra.mxu0 0
        %1745 = vmatprep.mubr.bf16.mxu0 0
        %1746 = vmatmul.mubr.bf16.gmra.mrb[0].mxu0 %v1711
        %v1747 = vpop.f32.mrb[0].mxu0
        %v1748 = vadd.f32 %v1702, %v1747
        %v1749 = vpop.f32.mrb[0].mxu0
        %v1750 = vpop.f32.mrb[0].mxu0
        %v1751 = vadd.f32 %v1702, %v1750
        %v1752 = vpop.f32.mrb[0].mxu0
        %1753 = vdwg.mxu0
        %v1754 = vmul.f32 %v1748, 0.5
        %v1755 = vmul.f32 %v1751, 0.5
        %v1756 = vmul.f32 %v1748, 0.70710677
        %v1757 = vmul.f32 %v1751, 0.70710677
        %v1758 = vand.u32 2147483647, %v1756
        %v1759 = vand.u32 2147483647, %v1757
        %v1760 = vmul.f32 %v1758, 0.3275911
        %v1761 = vmul.f32 %v1759, 0.3275911
        %v1762 = vadd.f32 %v1760, 1.0
        %v1763 = vadd.f32 %v1761, 1.0
        %v1764 = vrcp.pop %v1762
        %v1765 = vrcp.pop %v1763
        %v1766 = vmul.f32 %v1764, 1.0614054
        %v1767 = vmul.f32 %v1765, 1.0614054
        %v1768 = vadd.f32 %v1766, -1.4531521
        %v1769 = vadd.f32 %v1767, -1.4531521
        %v1770 = vmul.f32 %v1768, %v1764
        %v1771 = vmul.f32 %v1769, %v1765
        %v1772 = vadd.f32 %v1770, 1.4214138
        %v1773 = vadd.f32 %v1771, 1.4214138
        %v1774 = vmul.f32 %v1772, %v1764
        %v1775 = vmul.f32 %v1773, %v1765
        %v1776 = vadd.f32 %v1774, -0.28449672
        %v1777 = vadd.f32 %v1775, -0.28449672
        %v1778 = vmul.f32 %v1776, %v1764
        %v1779 = vmul.f32 %v1777, %v1765
        %v1780 = vadd.f32 %v1778, 0.2548296
        %v1781 = vadd.f32 %v1779, 0.2548296
        %v1782 = vmul.f32 %v1780, %v1764
        %v1783 = vmul.f32 %v1781, %v1765
        %v1784 = vsub.f32 0.0, %v1758
        %v1785 = vsub.f32 0.0, %v1759
        %v1786 = vmul.f32 %v1784, %v1758
        %v1787 = vmul.f32 %v1785, %v1759
        %v1788 = vmul.f32 %v1786, 1.442695
        %v1789 = vpow.pop %v1788
        %v1790 = vmul.f32 %v1787, 1.442695
        %v1791 = vpow.pop %v1790
        %v1792 = vmul.f32 %v1782, %v1789
        %v1793 = vmul.f32 %v1783, %v1791
        %v1794 = vsub.f32 1.0, %v1792
        %v1795 = vsub.f32 1.0, %v1793
        %vm1796 = vcmp.ge.f32.partialorder %v1756, 0.0
        %vm1797 = vcmp.ge.f32.partialorder %v1757, 0.0
        %v1798 = vsub.f32 0.0, %v1794
        %v1799 = vsub.f32 0.0, %v1795
        %v1800 = vsel %vm1796, %v1794, %v1798
        %v1801 = vsel %vm1797, %v1795, %v1799
        %v1802 = vadd.f32 %v1800, 1.0
        %v1803 = vadd.f32 %v1801, 1.0
        %v1804 = vmul.f32 %v1754, %v1802
        %v1805 = vmul.f32 %v1755, %v1803
        %v1806 = vld [vmem:[%s6] sm:$0xf]
        %v1807 = vld [vmem:[%s6 + $0x4] sm:$0xf]
        %v1808 = vld [vmem:[%s6 + $0x8] sm:$0xf]
        %v1809 = vld [vmem:[%s6 + $0xc] sm:$0xf]
        %v1810 = vld [vmem:[%s6 + $0x10] sm:$0xf]
        %v1811 = vld [vmem:[%s6 + $0x14] sm:$0xf]
        %v1812 = vld [vmem:[%s6 + $0x18] sm:$0xf]
        %v1813 = vld [vmem:[%s6 + $0x1c] sm:$0xf]
        %v1814 = vld [vmem:[%s6 + $0x20] sm:$0xf]
        %v1815 = vld [vmem:[%s6 + $0x24] sm:$0xf]
        %v1816 = vld [vmem:[%s6 + $0x28] sm:$0xf]
        %v1817 = vld [vmem:[%s6 + $0x2c] sm:$0xf]
        %v1818 = vld [vmem:[%s6 + $0x30] sm:$0xf]
        %v1819 = vld [vmem:[%s6 + $0x34] sm:$0xf]
        %v1820 = vld [vmem:[%s6 + $0x38] sm:$0xf]
        %v1821 = vld [vmem:[%s6 + $0x3c] sm:$0xf]
        %v1822 = vpack.c.bf16 %v1805, %v1804
        %v1823 = vlaneseq
        %v1824 = vshrl.u32 %v1823, 7
        %v1825 = vsub.s32 0, %v1824
        %v1826 = vrot.slane %v414, %v1825
        %v1843 = vunpack.c.l.b16 %v1806
        %v1844 = vunpack.c.l.b16 %v1807
        %v1845 = vunpack.c.l.b16 %v1808
        %v1846 = vunpack.c.l.b16 %v1809
        %v1847 = vunpack.c.l.b16 %v1810
        %v1848 = vunpack.c.l.b16 %v1811
        %v1849 = vunpack.c.l.b16 %v1812
        %v1850 = vunpack.c.l.b16 %v1813
        %v1851 = vunpack.c.l.b16 %v1814
        %v1852 = vunpack.c.l.b16 %v1815
        %v1853 = vunpack.c.l.b16 %v1816
        %v1854 = vunpack.c.l.b16 %v1817
        %v1855 = vunpack.c.l.b16 %v1818
        %v1856 = vunpack.c.l.b16 %v1819
        %v1857 = vunpack.c.l.b16 %v1820
        %v1858 = vunpack.c.l.b16 %v1821
        %v1859 = vpack.c.b16 %v1844, %v1843
        %v1860 = vpack.c.b16 %v1846, %v1845
        %v1861 = vpack.c.b16 %v1848, %v1847
        %v1862 = vpack.c.b16 %v1850, %v1849
        %v1863 = vpack.c.b16 %v1852, %v1851
        %v1864 = vpack.c.b16 %v1854, %v1853
        %v1865 = vpack.c.b16 %v1856, %v1855
        %v1866 = vpack.c.b16 %v1858, %v1857
        %1875 = vmatprep.subr.bf16.mxu0 0
        %1876 = vmatpush1.bf16.msra.mxu0 %v1859
        %1877 = vmatprep.subr.bf16.mxu0 0
        %1878 = vmatpush1.bf16.msra.mxu0 %v1860
        %1879 = vmatprep.subr.bf16.mxu0 0
        %1880 = vmatpush1.bf16.msra.mxu0 %v1861
        %1881 = vmatprep.subr.bf16.mxu0 0
        %1882 = vmatpush1.bf16.msra.mxu0 %v1862
        %1883 = vmatprep.subr.bf16.mxu0 0
        %1884 = vmatpush1.bf16.msra.mxu0 %v1863
        %1885 = vmatprep.subr.bf16.mxu0 0
        %1886 = vmatpush1.bf16.msra.mxu0 %v1864
        %1887 = vmatprep.subr.bf16.mxu0 0
        %1888 = vmatpush1.bf16.msra.mxu0 %v1865
        %1889 = vmatprep.subr.bf16.mxu0 0
        %1890 = vmatpush1.bf16.msra.mxu0 %v1866
        %1891 = vmatprep.subr.bf16.mxu0 0
        %1892 = vmatpush1.bf16.msra.mxu0 0
        %1893 = vmatprep.subr.bf16.mxu0 0
        %1894 = vmatpush1.bf16.msra.mxu0 0
        %1895 = vmatprep.subr.bf16.mxu0 0
        %1896 = vmatpush1.bf16.msra.mxu0 0
        %1897 = vmatprep.subr.bf16.mxu0 0
        %1898 = vmatpush1.bf16.msra.mxu0 0
        %1899 = vmatprep.subr.bf16.mxu0 0
        %1900 = vmatpush1.bf16.msra.mxu0 0
        %1901 = vmatprep.subr.bf16.mxu0 0
        %1902 = vmatpush1.bf16.msra.mxu0 0
        %1903 = vmatprep.subr.bf16.mxu0 0
        %1904 = vmatpush1.bf16.msra.mxu0 0
        %1905 = vmatprep.subr.bf16.mxu0 0
        %1906 = vmatpush1.bf16.msra.mxu0 0
        %1907 = vmatprep.mubr.bf16.mxu0 0
        %1908 = vmatmul.mubr.bf16.gmra.mrb[0].mxu0 %v1822
        %v1909 = vpop.f32.mrb[0].mxu0
        %v1910 = vadd.f32 %v1826, %v1909
        %v1911 = vpop.f32.mrb[0].mxu0
        %v1912 = vpop.f32.mrb[0].mxu0
        %v1913 = vadd.f32 %v1826, %v1912
        %v1914 = vpop.f32.mrb[0].mxu0
        %1915 = vdwg.mxu0
        %v1916 = vadd.f32 %v1654, %v1910
        %v1917 = vadd.f32 %v1655, %v1913
        %1918 = vst.msk [vmem:[%s406] sm:$0xff] %vm525, %v1916
        %1919 = vst.msk [vmem:[%s406 + $0x8] sm:$0xff] %vm525, %v1917
        %s1920 = sand.u32 %s291, 1
        %s1921 = scalar_lea.sflag [#allocation3], %s1920
        %s1922 = sand.u32 %s291, 1
        %s1923 = smul.addr %s1922, 16
        %s1924 = scalar_lea.vmem [#allocation2], %s1923
        // Predicated region
        $region69: #{tpu_custom_call.1} parent=67 // pred_check
          %p1925 = pneg %p301
        $region70: #{tpu_custom_call.1} parent=67 // pred_check_branch
          %1927 = sbr.rel (%p1925) target = $region72
        $region71: #{tpu_custom_call.1} parent=67 // pred_region
          %s1929 = ssub.s32 256, 256
          %1930 = vsyncadd %s1921, %s1929
          %s1931 = smul.addr %s26, 2
          %s1932 = smul.addr %s1931, 128
          %s1933 = scalar_lea.hbm %s12, %s1932
          %s1934 = sshll.u32 %s1924, 4
          %s1935 = int_to_ptr.vmem [resolvable:$true] %s1934
          %1940 = dma.vmem_to_hbm [thread:$0]  %s1935, 256, %s1933, %s1921, 128, 128, 8
        $region72: #{tpu_custom_call.1} parent=67 // pred_fallthru
          _
      $region68: #{tpu_custom_call.1} parent=5 // pred_fallthru
        _
      %p1941 = scmp.le.s32.totalorder 2, %s21
      // Predicated region
      $region73: #{tpu_custom_call.1} parent=5 // pred_check
        %p1942 = pneg %p1941
      $region74: #{tpu_custom_call.1} parent=5 // pred_check_branch
        %1944 = sbr.rel (%p1942) target = $region76
      $region75: #{tpu_custom_call.1} parent=5 // pred_region
        %s1945 = ssub.s32 %s21, 2
        // Predicated region
        $region77: #{tpu_custom_call.1} parent=75 // pred_check
          %p1946 = pneg %p307
        $region78: #{tpu_custom_call.1} parent=75 // pred_check_branch
          %1948 = sbr.rel (%p1946) target = $region80
        $region79: #{tpu_custom_call.1} parent=75 // pred_region
          %s1949 = sand.u32 %s292, 1
          %s1950 = scalar_lea.sflag [#allocation3], %s1949
          %s1951 = sand.u32 %s292, 1
          %s1952 = smul.addr %s1951, 16
          %s1953 = scalar_lea.vmem [#allocation2], %s1952
          %1954 = dma.done %s1950, 256
        $region80: #{tpu_custom_call.1} parent=75 // pred_fallthru
          _
      $region76: #{tpu_custom_call.1} parent=5 // pred_fallthru
        _
    $region6: #{tpu_custom_call.1} parent=1 // loop_footer
      %s25 = sadd.s32 1, %s21
    $region7: #{tpu_custom_call.1} parent=1 // loop_footer_branch
      %20 = sbr.rel target = $region3
    $region8: #{tpu_custom_call.1} parent=1 // loop_exit
      _
    %1955 = vsyncpa [#allocation3], 1
    %s1956 = scalar_lea.sflag [#allocation3], 1
    %1957 = vsyncpa %s1956, 1

// kernel: tpu_custom_call.1
$region0: #{tpu_custom_call.1}
  #allocation0 [shape = 'u32[]', space=smem, size = 0x4, offset = 0x4, fixed_abs, tag = 'smem constant byte address 0x4 - core index']
  #allocation1 [shape = 'u32[144,128]{1,0:T(1,128)}', space=vmem, size = 0x12000, scoped, tag = 'internal scratch']
  %s0 = inlined_call_operand.vmem [shape: bf16[2,24,32], index: 0, kind: input, shape index: {}]
  %s1 = inlined_call_operand.vmem [shape: bf16[32,16], index: 1, kind: input, shape index: {}]
  %s2 = inlined_call_operand.vmem [shape: bf16[16,16], index: 2, kind: input, shape index: {}]
  %s3 = inlined_call_operand.vmem [shape: bf16[16,16], index: 3, kind: input, shape index: {}]
  %s4 = inlined_call_operand.vmem [shape: bf16[16,8], index: 4, kind: input, shape index: {}]
  %s5 = inlined_call_operand.vmem [shape: bf16[16,128], index: 5, kind: input, shape index: {}]
  %s6 = inlined_call_operand.vmem [shape: bf16[128,16], index: 6, kind: input, shape index: {}]
  %s7 = inlined_call_operand.vmem [shape: bf16[40,16], index: 7, kind: input, shape index: {}]
  %s8 = inlined_call_operand.vmem [shape: bf16[16,40], index: 8, kind: input, shape index: {}]
  %s9 = inlined_call_operand.vmem [shape: f32[9,16], index: 9, kind: input, shape index: {}]
  %s10 = inlined_call_operand.vmem [shape: f32[1,128], index: 10, kind: input, shape index: {}]
  %s11 = inlined_call_operand.vmem [shape: f32[56,1], index: 11, kind: input, shape index: {}]
  %s12 = inlined_call_operand.hbm [shape: f32[2,16,16], index: 12, kind: output, shape index: {}]
  %s13 = sld [smem:[#allocation0]]
  $region81: #{tpu_custom_call.1} parent=0
    _
  %s15 = ssub.s32 1, %s13
  %s16 = scalar_select 0, %s15, %s13
  $region1: #{tpu_custom_call.1} parent=0
    #allocation2 [shape = 'u8[16384]{0}', space=vmem, size = 0x4000, scoped, tag = 'output window, operand 0']
    #allocation3 [shape = 's32[2]{0}', space=sflag, size = 0x8, scoped, tag = 'scoped memory for tpu_custom_call.1']
    %17 = vsyncpa [#allocation3], 0
    %s18 = scalar_lea.sflag [#allocation3], 1
    %19 = vsyncpa %s18, 0
    loop: start=0, step=1, limit=4
    $region2: #{tpu_custom_call.1} parent=1 // loop_pre_header
      _
    $region3: #{tpu_custom_call.1} parent=1 // loop_header
      %s21 = sphi 0, %s25
      %p22 = scmp.ge.s32.totalorder %s21, 4
      %s31 = sphi 0, %s33
      %s34 = sphi 0, %s31
      %s35 = sphi 0, %s34
      %s51 = sphi 0, %s35
      %s55 = sphi 0, %s55
      %s57 = sphi 0, %s55
      %s58 = sphi 0, %s57
      %s72 = sphi 0, %s58
      %s76 = sphi 0, %s76
      %s78 = sphi 0, %s76
      %s79 = sphi 0, %s78
      %s93 = sphi 0, %s79
      %s97 = sphi 0, %s97
      %s99 = sphi 0, %s97
      %s100 = sphi 0, %s99
      %s114 = sphi 0, %s100
      %s118 = sphi 0, %s118
      %s120 = sphi 0, %s118
      %s121 = sphi 0, %s120
      %s135 = sphi 0, %s121
      %s139 = sphi 0, %s139
      %s141 = sphi 0, %s139
      %s142 = sphi 0, %s141
      %s156 = sphi 0, %s142
      %s160 = sphi 0, %s160
      %s162 = sphi 0, %s160
      %s163 = sphi 0, %s162
      %s177 = sphi 0, %s163
      %s181 = sphi 0, %s181
      %s183 = sphi 0, %s181
      %s184 = sphi 0, %s183
      %s198 = sphi 0, %s184
      %s202 = sphi 0, %s202
      %s204 = sphi 0, %s202
      %s205 = sphi 0, %s204
      %s219 = sphi 0, %s205
      %s223 = sphi 0, %s223
      %s225 = sphi 0, %s223
      %s226 = sphi 0, %s225
      %s240 = sphi 0, %s226
      %s244 = sphi 0, %s244
      %s246 = sphi 0, %s244
      %s247 = sphi 0, %s246
      %s261 = sphi 0, %s247
      %s265 = sphi 0, %s265
      %s267 = sphi 0, %s265
      %s268 = sphi 0, %s267
      %s282 = sphi 0, %s268
      %s288 = sphi 0, %s290
      %s291 = sphi 0, %s288
      %s292 = sphi 0, %s291
      %s308 = sphi 0, %s292
    $region4: #{tpu_custom_call.1} parent=1 // loop_header_branch
      %24 = sbr.rel (%p22) target = $region8
    $region5: #{tpu_custom_call.1} parent=1 // loop_body
      %s26 = ssub.s32 %s21, 1
      %s27 = ssub.s32 %s21, 2
      %s28 = sadd.s32 %s21, 1
      %s29 = ssub.s32 %s21, %s28
      %p30 = scmp.eq.s32.totalorder %s29, 0
      %s32 = sadd.s32 %s31, 1
      %s33 = scalar_select %p30, %s31, %s32
      %p36 = pneg %p30
      %p37 = scmp.eq.s32.totalorder %s21, 1
      %p38 = por %p36, %p37
      %p39 = scmp.ne.s32.totalorder %s31, %s34
      %p40 = scmp.eq.s32.totalorder %s21, 0
      %p41 = por %p39, %p40
      %p42 = scmp.ne.s32.totalorder %s31, %s34
      %p43 = scmp.eq.s32.totalorder %s26, 1
      %p44 = por %p42, %p43
      %p45 = scmp.ne.s32.totalorder %s34, %s35
      %p46 = scmp.eq.s32.totalorder %s26, 0
      %p47 = por %p45, %p46
      %p48 = scmp.ne.s32.totalorder %s34, %s35
      %p49 = scmp.eq.s32.totalorder %s27, 1
      %p50 = por %p48, %p49
      %p52 = scmp.ne.s32.totalorder %s35, %s51
      %p53 = scmp.eq.s32.totalorder %s27, 0
      %p54 = por %p52, %p53
      %s56 = sadd.s32 %s55, 1
      %p59 = scmp.eq.s32.totalorder %s21, 1
      %p60 = scmp.ne.s32.totalorder %s55, %s57
      %p61 = scmp.eq.s32.totalorder %s21, 0
      %p62 = por %p60, %p61
      %p63 = scmp.ne.s32.totalorder %s55, %s57
      %p64 = scmp.eq.s32.totalorder %s26, 1
      %p65 = por %p63, %p64
      %p66 = scmp.ne.s32.totalorder %s57, %s58
      %p67 = scmp.eq.s32.totalorder %s26, 0
      %p68 = por %p66, %p67
      %p69 = scmp.ne.s32.totalorder %s57, %s58
      %p70 = scmp.eq.s32.totalorder %s27, 1
      %p71 = por %p69, %p70
      %p73 = scmp.ne.s32.totalorder %s58, %s72
      %p74 = scmp.eq.s32.totalorder %s27, 0
      %p75 = por %p73, %p74
      %s77 = sadd.s32 %s76, 1
      %p80 = scmp.eq.s32.totalorder %s21, 1
      %p81 = scmp.ne.s32.totalorder %s76, %s78
      %p82 = scmp.eq.s32.totalorder %s21, 0
      %p83 = por %p81, %p82
      %p84 = scmp.ne.s32.totalorder %s76, %s78
      %p85 = scmp.eq.s32.totalorder %s26, 1
      %p86 = por %p84, %p85
      %p87 = scmp.ne.s32.totalorder %s78, %s79
      %p88 = scmp.eq.s32.totalorder %s26, 0
      %p89 = por %p87, %p88
      %p90 = scmp.ne.s32.totalorder %s78, %s79
      %p91 = scmp.eq.s32.totalorder %s27, 1
      %p92 = por %p90, %p91
      %p94 = scmp.ne.s32.totalorder %s79, %s93
      %p95 = scmp.eq.s32.totalorder %s27, 0
      %p96 = por %p94, %p95
      %s98 = sadd.s32 %s97, 1
      %p101 = scmp.eq.s32.totalorder %s21, 1
      %p102 = scmp.ne.s32.totalorder %s97, %s99
      %p103 = scmp.eq.s32.totalorder %s21, 0
      %p104 = por %p102, %p103
      %p105 = scmp.ne.s32.totalorder %s97, %s99
      %p106 = scmp.eq.s32.totalorder %s26, 1
      %p107 = por %p105, %p106
      %p108 = scmp.ne.s32.totalorder %s99, %s100
      %p109 = scmp.eq.s32.totalorder %s26, 0
      %p110 = por %p108, %p109
      %p111 = scmp.ne.s32.totalorder %s99, %s100
      %p112 = scmp.eq.s32.totalorder %s27, 1
      %p113 = por %p111, %p112
      %p115 = scmp.ne.s32.totalorder %s100, %s114
      %p116 = scmp.eq.s32.totalorder %s27, 0
      %p117 = por %p115, %p116
      %s119 = sadd.s32 %s118, 1
      %p122 = scmp.eq.s32.totalorder %s21, 1
      %p123 = scmp.ne.s32.totalorder %s118, %s120
      %p124 = scmp.eq.s32.totalorder %s21, 0
      %p125 = por %p123, %p124
      %p126 = scmp.ne.s32.totalorder %s118, %s120
      %p127 = scmp.eq.s32.totalorder %s26, 1
      %p128 = por %p126, %p127
      %p129 = scmp.ne.s32.totalorder %s120, %s121
      %p130 = scmp.eq.s32.totalorder %s26, 0
      %p131 = por %p129, %p130
      %p132 = scmp.ne.s32.totalorder %s120, %s121
      %p133 = scmp.eq.s32.totalorder %s27, 1
      %p134 = por %p132, %p133
      %p136 = scmp.ne.s32.totalorder %s121, %s135
      %p137 = scmp.eq.s32.totalorder %s27, 0
      %p138 = por %p136, %p137
      %s140 = sadd.s32 %s139, 1
      %p143 = scmp.eq.s32.totalorder %s21, 1
      %p144 = scmp.ne.s32.totalorder %s139, %s141
      %p145 = scmp.eq.s32.totalorder %s21, 0
      %p146 = por %p144, %p145
      %p147 = scmp.ne.s32.totalorder %s139, %s141
      %p148 = scmp.eq.s32.totalorder %s26, 1
      %p149 = por %p147, %p148
      %p150 = scmp.ne.s32.totalorder %s141, %s142
      %p151 = scmp.eq.s32.totalorder %s26, 0
      %p152 = por %p150, %p151
      %p153 = scmp.ne.s32.totalorder %s141, %s142
      %p154 = scmp.eq.s32.totalorder %s27, 1
      %p155 = por %p153, %p154
      %p157 = scmp.ne.s32.totalorder %s142, %s156
      %p158 = scmp.eq.s32.totalorder %s27, 0
      %p159 = por %p157, %p158
      %s161 = sadd.s32 %s160, 1
      %p164 = scmp.eq.s32.totalorder %s21, 1
      %p165 = scmp.ne.s32.totalorder %s160, %s162
      %p166 = scmp.eq.s32.totalorder %s21, 0
      %p167 = por %p165, %p166
      %p168 = scmp.ne.s32.totalorder %s160, %s162
      %p169 = scmp.eq.s32.totalorder %s26, 1
      %p170 = por %p168, %p169
      %p171 = scmp.ne.s32.totalorder %s162, %s163
      %p172 = scmp.eq.s32.totalorder %s26, 0
      %p173 = por %p171, %p172
      %p174 = scmp.ne.s32.totalorder %s162, %s163
      %p175 = scmp.eq.s32.totalorder %s27, 1
      %p176 = por %p174, %p175
      %p178 = scmp.ne.s32.totalorder %s163, %s177
      %p179 = scmp.eq.s32.totalorder %s27, 0
      %p180 = por %p178, %p179
      %s182 = sadd.s32 %s181, 1
      %p185 = scmp.eq.s32.totalorder %s21, 1
      %p186 = scmp.ne.s32.totalorder %s181, %s183
      %p187 = scmp.eq.s32.totalorder %s21, 0
      %p188 = por %p186, %p187
      %p189 = scmp.ne.s32.totalorder %s181, %s183
      %p190 = scmp.eq.s32.totalorder %s26, 1
      %p191 = por %p189, %p190
      %p192 = scmp.ne.s32.totalorder %s183, %s184
      %p193 = scmp.eq.s32.totalorder %s26, 0
      %p194 = por %p192, %p193
      %p195 = scmp.ne.s32.totalorder %s183, %s184
      %p196 = scmp.eq.s32.totalorder %s27, 1
      %p197 = por %p195, %p196
      %p199 = scmp.ne.s32.totalorder %s184, %s198
      %p200 = scmp.eq.s32.totalorder %s27, 0
      %p201 = por %p199, %p200
      %s203 = sadd.s32 %s202, 1
      %p206 = scmp.eq.s32.totalorder %s21, 1
      %p207 = scmp.ne.s32.totalorder %s202, %s204
      %p208 = scmp.eq.s32.totalorder %s21, 0
      %p209 = por %p207, %p208
      %p210 = scmp.ne.s32.totalorder %s202, %s204
      %p211 = scmp.eq.s32.totalorder %s26, 1
      %p212 = por %p210, %p211
      %p213 = scmp.ne.s32.totalorder %s204, %s205
      %p214 = scmp.eq.s32.totalorder %s26, 0
      %p215 = por %p213, %p214
      %p216 = scmp.ne.s32.totalorder %s204, %s205
      %p217 = scmp.eq.s32.totalorder %s27, 1
      %p218 = por %p216, %p217
      %p220 = scmp.ne.s32.totalorder %s205, %s219
      %p221 = scmp.eq.s32.totalorder %s27, 0
      %p222 = por %p220, %p221
      %s224 = sadd.s32 %s223, 1
      %p227 = scmp.eq.s32.totalorder %s21, 1
      %p228 = scmp.ne.s32.totalorder %s223, %s225
      %p229 = scmp.eq.s32.totalorder %s21, 0
      %p230 = por %p228, %p229
      %p231 = scmp.ne.s32.totalorder %s223, %s225
      %p232 = scmp.eq.s32.totalorder %s26, 1
      %p233 = por %p231, %p232
      %p234 = scmp.ne.s32.totalorder %s225, %s226
      %p235 = scmp.eq.s32.totalorder %s26, 0
      %p236 = por %p234, %p235
      %p237 = scmp.ne.s32.totalorder %s225, %s226
      %p238 = scmp.eq.s32.totalorder %s27, 1
      %p239 = por %p237, %p238
      %p241 = scmp.ne.s32.totalorder %s226, %s240
      %p242 = scmp.eq.s32.totalorder %s27, 0
      %p243 = por %p241, %p242
      %s245 = sadd.s32 %s244, 1
      %p248 = scmp.eq.s32.totalorder %s21, 1
      %p249 = scmp.ne.s32.totalorder %s244, %s246
      %p250 = scmp.eq.s32.totalorder %s21, 0
      %p251 = por %p249, %p250
      %p252 = scmp.ne.s32.totalorder %s244, %s246
      %p253 = scmp.eq.s32.totalorder %s26, 1
      %p254 = por %p252, %p253
      %p255 = scmp.ne.s32.totalorder %s246, %s247
      %p256 = scmp.eq.s32.totalorder %s26, 0
      %p257 = por %p255, %p256
      %p258 = scmp.ne.s32.totalorder %s246, %s247
      %p259 = scmp.eq.s32.totalorder %s27, 1
      %p260 = por %p258, %p259
      %p262 = scmp.ne.s32.totalorder %s247, %s261
      %p263 = scmp.eq.s32.totalorder %s27, 0
      %p264 = por %p262, %p263
      %s266 = sadd.s32 %s265, 1
      %p269 = scmp.eq.s32.totalorder %s21, 1
      %p270 = scmp.ne.s32.totalorder %s265, %s267
      %p271 = scmp.eq.s32.totalorder %s21, 0
      %p272 = por %p270, %p271
      %p273 = scmp.ne.s32.totalorder %s265, %s267
      %p274 = scmp.eq.s32.totalorder %s26, 1
      %p275 = por %p273, %p274
      %p276 = scmp.ne.s32.totalorder %s267, %s268
      %p277 = scmp.eq.s32.totalorder %s26, 0
      %p278 = por %p276, %p277
      %p279 = scmp.ne.s32.totalorder %s267, %s268
      %p280 = scmp.eq.s32.totalorder %s27, 1
      %p281 = por %p279, %p280
      %p283 = scmp.ne.s32.totalorder %s268, %s282
      %p284 = scmp.eq.s32.totalorder %s27, 0
      %p285 = por %p283, %p284
      %s286 = ssub.s32 %s21, %s28
      %p287 = scmp.eq.s32.totalorder %s286, 0
      %s289 = sadd.s32 %s288, 1
      %s290 = scalar_select %p287, %s288, %s289
      %p293 = pneg %p287
      %p294 = scmp.eq.s32.totalorder %s21, 1
      %p295 = por %p293, %p294
      %p296 = scmp.ne.s32.totalorder %s288, %s291
      %p297 = scmp.eq.s32.totalorder %s21, 0
      %p298 = por %p296, %p297
      %p299 = scmp.ne.s32.totalorder %s288, %s291
      %p300 = scmp.eq.s32.totalorder %s26, 1
      %p301 = por %p299, %p300
      %p302 = scmp.ne.s32.totalorder %s291, %s292
      %p303 = scmp.eq.s32.totalorder %s26, 0
      %p304 = por %p302, %p303
      %p305 = scmp.ne.s32.totalorder %s291, %s292
      %p306 = scmp.eq.s32.totalorder %s27, 1
      %p307 = por %p305, %p306
      %p309 = scmp.ne.s32.totalorder %s292, %s308
      %p310 = scmp.eq.s32.totalorder %s27, 0
      %p311 = por %p309, %p310
      %p312 = scmp.le.s32.totalorder 1, %s21
      %p313 = scmp.lt.s32.totalorder %s21, 3
      %p314 = pnand %p312, %p313
      %p315 = pneg %p314
      // Predicated region
      $region9: #{tpu_custom_call.1} parent=5 // pred_check
        _
      $region10: #{tpu_custom_call.1} parent=5 // pred_check_branch
        %317 = sbr.rel (%p314) target = $region12
      $region11: #{tpu_custom_call.1} parent=5 // pred_region
        %s318 = ssub.s32 %s21, 1
        // Predicated region
        $region13: #{tpu_custom_call.1} parent=11 // pred_check
          %p319 = pneg %p68
        $region14: #{tpu_custom_call.1} parent=11 // pred_check_branch
          %321 = sbr.rel (%p319) target = $region16
        $region15: #{tpu_custom_call.1} parent=11 // pred_region
          _
        $region16: #{tpu_custom_call.1} parent=11 // pred_fallthru
          _
        // Predicated region
        $region17: #{tpu_custom_call.1} parent=11 // pred_check
          %p322 = pneg %p89
        $region18: #{tpu_custom_call.1} parent=11 // pred_check_branch
          %324 = sbr.rel (%p322) target = $region20
        $region19: #{tpu_custom_call.1} parent=11 // pred_region
          _
        $region20: #{tpu_custom_call.1} parent=11 // pred_fallthru
          _
        // Predicated region
        $region21: #{tpu_custom_call.1} parent=11 // pred_check
          %p325 = pneg %p110
        $region22: #{tpu_custom_call.1} parent=11 // pred_check_branch
          %327 = sbr.rel (%p325) target = $region24
        $region23: #{tpu_custom_call.1} parent=11 // pred_region
          _
        $region24: #{tpu_custom_call.1} parent=11 // pred_fallthru
          _
        // Predicated region
        $region25: #{tpu_custom_call.1} parent=11 // pred_check
          %p328 = pneg %p131
        $region26: #{tpu_custom_call.1} parent=11 // pred_check_branch
          %330 = sbr.rel (%p328) target = $region28
        $region27: #{tpu_custom_call.1} parent=11 // pred_region
          _
        $region28: #{tpu_custom_call.1} parent=11 // pred_fallthru
          _
        // Predicated region
        $region29: #{tpu_custom_call.1} parent=11 // pred_check
          %p331 = pneg %p152
        $region30: #{tpu_custom_call.1} parent=11 // pred_check_branch
          %333 = sbr.rel (%p331) target = $region32
        $region31: #{tpu_custom_call.1} parent=11 // pred_region
          _
        $region32: #{tpu_custom_call.1} parent=11 // pred_fallthru
          _
        // Predicated region
        $region33: #{tpu_custom_call.1} parent=11 // pred_check
          %p334 = pneg %p173
        $region34: #{tpu_custom_call.1} parent=11 // pred_check_branch
          %336 = sbr.rel (%p334) target = $region36
        $region35: #{tpu_custom_call.1} parent=11 // pred_region
          _
        $region36: #{tpu_custom_call.1} parent=11 // pred_fallthru
          _
        // Predicated region
        $region37: #{tpu_custom_call.1} parent=11 // pred_check
          %p337 = pneg %p194
        $region38: #{tpu_custom_call.1} parent=11 // pred_check_branch
          %339 = sbr.rel (%p337) target = $region40
        $region39: #{tpu_custom_call.1} parent=11 // pred_region
          _
        $region40: #{tpu_custom_call.1} parent=11 // pred_fallthru
          _
        // Predicated region
        $region41: #{tpu_custom_call.1} parent=11 // pred_check
          %p340 = pneg %p215
        $region42: #{tpu_custom_call.1} parent=11 // pred_check_branch
          %342 = sbr.rel (%p340) target = $region44
        $region43: #{tpu_custom_call.1} parent=11 // pred_region
          _
        $region44: #{tpu_custom_call.1} parent=11 // pred_fallthru
          _
        // Predicated region
        $region45: #{tpu_custom_call.1} parent=11 // pred_check
          %p343 = pneg %p236
        $region46: #{tpu_custom_call.1} parent=11 // pred_check_branch
          %345 = sbr.rel (%p343) target = $region48
        $region47: #{tpu_custom_call.1} parent=11 // pred_region
          _
        $region48: #{tpu_custom_call.1} parent=11 // pred_fallthru
          _
        // Predicated region
        $region49: #{tpu_custom_call.1} parent=11 // pred_check
          %p346 = pneg %p257
        $region50: #{tpu_custom_call.1} parent=11 // pred_check_branch
          %348 = sbr.rel (%p346) target = $region52
        $region51: #{tpu_custom_call.1} parent=11 // pred_region
          _
        $region52: #{tpu_custom_call.1} parent=11 // pred_fallthru
          _
        // Predicated region
        $region53: #{tpu_custom_call.1} parent=11 // pred_check
          %p349 = pneg %p278
        $region54: #{tpu_custom_call.1} parent=11 // pred_check_branch
          %351 = sbr.rel (%p349) target = $region56
        $region55: #{tpu_custom_call.1} parent=11 // pred_region
          _
        $region56: #{tpu_custom_call.1} parent=11 // pred_fallthru
          _
      $region12: #{tpu_custom_call.1} parent=5 // pred_fallthru
        _
      %p352 = scmp.lt.s32.totalorder %s21, 2
      // Predicated region
      $region57: #{tpu_custom_call.1} parent=5 // pred_check
        %p353 = pneg %p352
      $region58: #{tpu_custom_call.1} parent=5 // pred_check_branch
        %355 = sbr.rel (%p353) target = $region60
      $region59: #{tpu_custom_call.1} parent=5 // pred_region
        // Predicated region
        $region61: #{tpu_custom_call.1} parent=59 // pred_check
          %p356 = pneg %p41
        $region62: #{tpu_custom_call.1} parent=59 // pred_check_branch
          %358 = sbr.rel (%p356) target = $region64
        $region63: #{tpu_custom_call.1} parent=59 // pred_region
          %p359 = scmp.lt.s32.totalorder %s21, 1
          %s360 = scalar_select %p359, %s21, 1
          %s361 = smul.addr %s360, 3
          %s362 = smul.addr %s361, 4
          %s363 = scalar_lea.vmem %s0, %s362
        $region64: #{tpu_custom_call.1} parent=59 // pred_fallthru
          _
      $region60: #{tpu_custom_call.1} parent=5 // pred_fallthru
        _
      %p364 = scmp.le.s32.totalorder 1, %s21
      %p365 = scmp.lt.s32.totalorder %s21, 3
      %p366 = pnand %p364, %p365
      %p367 = pneg %p366
      // Predicated region
      $region65: #{tpu_custom_call.1} parent=5 // pred_check
        _
      $region66: #{tpu_custom_call.1} parent=5 // pred_check_branch
        %369 = sbr.rel (%p366) target = $region68
      $region67: #{tpu_custom_call.1} parent=5 // pred_region
        %s370 = ssub.s32 %s21, 1
        %p371 = scmp.lt.s32.totalorder %s26, 1
        %s372 = scalar_select %p371, %s26, 1
        %s373 = smul.addr %s372, 3
        %s374 = smul.addr %s373, 4
        %s375 = scalar_lea.vmem %s0, %s374
        %p376 = pneg %p47
        %p377 = pneg %p44
        %p378 = pneg %p68
        %p379 = pneg %p65
        %p380 = pneg %p89
        %p381 = pneg %p86
        %p382 = pneg %p110
        %p383 = pneg %p107
        %p384 = pneg %p131
        %p385 = pneg %p128
        %p386 = pneg %p152
        %p387 = pneg %p149
        %p388 = pneg %p173
        %p389 = pneg %p170
        %p390 = pneg %p194
        %p391 = pneg %p191
        %p392 = pneg %p215
        %p393 = pneg %p212
        %p394 = pneg %p236
        %p395 = pneg %p233
        %p396 = pneg %p257
        %p397 = pneg %p254
        %p398 = pneg %p278
        %p399 = pneg %p275
        %p400 = pneg %p304
        %p401 = pneg %p301
        %s402 = sand.u32 %s291, 1
        %s403 = scalar_lea.sflag [#allocation3], %s402
        %s404 = sand.u32 %s291, 1
        %s405 = smul.addr %s404, 16
        %s406 = scalar_lea.vmem [#allocation2], %s405
        %p407 = scmp.lt.s32.totalorder %s26, 1
        %s408 = scalar_select %p407, %s26, 1
        %s409 = smul.addr %s408, 3
        %s410 = smul.addr %s409, 4
        %s411 = scalar_lea.vmem %s0, %s410
        %v413 = vld [vmem:[%s9] sm:$0xff]
        %v414 = vld [vmem:[%s9 + $0x8] sm:$0x1]
        %v415 = vld [vmem:[%s11] sm:$0xff]
        %v416 = vld [vmem:[%s11 + $0x8] sm:$0xff]
        %v417 = vld [vmem:[%s11 + $0x10] sm:$0xff]
        %v418 = vld [vmem:[%s11 + $0x18] sm:$0xff]
        %v419 = vld [vmem:[%s11 + $0x20] sm:$0xff]
        %v420 = vld [vmem:[%s11 + $0x28] sm:$0xff]
        %v421 = vld [vmem:[%s11 + $0x30] sm:$0xff]
        %v422 = vld [vmem:[%s411] sm:$0xf]
        %v423 = vld [vmem:[%s411 + $0x4] sm:$0xf]
        %v424 = vld [vmem:[%s411 + $0x8] sm:$0xf]
        %v425 = vld [vmem:[%s1] sm:$0xf]
        %v426 = vld [vmem:[%s1 + $0x4] sm:$0xf]
        %v427 = vld [vmem:[%s1 + $0x8] sm:$0xf]
        %v428 = vld [vmem:[%s1 + $0xc] sm:$0xf]
        %v429 = vlaneseq
        %v430 = vshrl.u32 %v429, 7
        %v431 = vsub.s32 0, %v430
        %v432 = vrot.slane %v413, %v431
        %v436 = vunpack.c.l.b16 %v422
        %v437 = vunpack.c.l.b16 %v423
        %v438 = vunpack.c.l.b16 %v424
        %v439 = vpack.c.b16 %v437, %v436
        %v440 = vpack.c.b16 %v438, %v438
        %v445 = vunpack.c.l.b16 %v425
        %v446 = vunpack.c.l.b16 %v426
        %v447 = vunpack.c.l.b16 %v427
        %v448 = vunpack.c.l.b16 %v428
        %v449 = vpack.c.b16 %v446, %v445
        %v450 = vpack.c.b16 %v448, %v447
        %vm453 = vcmask 261120
        %v455 = vsel %vm453, %v439, 0
        %v458 = vsel %vm453, %v440, 0
        %460 = vmatprep.subr.bf16.mxu0 0
        %461 = vmatpush1.bf16.msra.mxu0 %v449
        %462 = vmatprep.subr.bf16.mxu0 0
        %463 = vmatpush1.bf16.msra.mxu0 %v450
        %464 = vmatprep.subr.bf16.mxu0 0
        %465 = vmatpush1.bf16.msra.mxu0 0
        %466 = vmatprep.subr.bf16.mxu0 0
        %467 = vmatpush1.bf16.msra.mxu0 0
        %468 = vmatprep.subr.bf16.mxu0 0
        %469 = vmatpush1.bf16.msra.mxu0 0
        %470 = vmatprep.subr.bf16.mxu0 0
        %471 = vmatpush1.bf16.msra.mxu0 0
        %472 = vmatprep.subr.bf16.mxu0 0
        %473 = vmatpush1.bf16.msra.mxu0 0
        %474 = vmatprep.subr.bf16.mxu0 0
        %475 = vmatpush1.bf16.msra.mxu0 0
        %476 = vmatprep.subr.bf16.mxu0 0
        %477 = vmatpush1.bf16.msra.mxu0 0
        %478 = vmatprep.subr.bf16.mxu0 0
        %479 = vmatpush1.bf16.msra.mxu0 0
        %480 = vmatprep.subr.bf16.mxu0 0
        %481 = vmatpush1.bf16.msra.mxu0 0
        %482 = vmatprep.subr.bf16.mxu0 0
        %483 = vmatpush1.bf16.msra.mxu0 0
        %484 = vmatprep.subr.bf16.mxu0 0
        %485 = vmatpush1.bf16.msra.mxu0 0
        %486 = vmatprep.subr.bf16.mxu0 0
        %487 = vmatpush1.bf16.msra.mxu0 0
        %488 = vmatprep.subr.bf16.mxu0 0
        %489 = vmatpush1.bf16.msra.mxu0 0
        %490 = vmatprep.subr.bf16.mxu0 0
        %491 = vmatpush1.bf16.msra.mxu0 0
        %492 = vmatprep.mubr.bf16.mxu0 0
        %493 = vmatmul.mubr.bf16.gmra.mrb[0].mxu0 %v455
        %v494 = vpop.f32.mrb[0].mxu0
        %v495 = vadd.f32 %v432, %v494
        %v496 = vpop.f32.mrb[0].mxu0
        %v497 = vpop.f32.mrb[0].mxu0
        %v498 = vadd.f32 %v432, %v497
        %v499 = vpop.f32.mrb[0].mxu0
        %500 = vmatprep.mubr.bf16.mxu0 0
        %501 = vmatmul.mubr.bf16.gmra.mrb[0].mxu0 %v458
        %v502 = vpop.f32.mrb[0].mxu0
        %v503 = vadd.f32 %v432, %v502
        %v504 = vpop.f32.mrb[0].mxu0
        %v505 = vpop.f32.mrb[0].mxu0
        %v506 = vpop.f32.mrb[0].mxu0
        %507 = vdwg.mxu0
        %v508 = vmax.f32 %v495, 0.0
        %v509 = vmax.f32 %v498, 0.0
        %v510 = vmax.f32 %v503, 0.0
        %v511 = vld [vmem:[%s2] sm:$0xf]
        %v512 = vld [vmem:[%s2 + $0x4] sm:$0xf]
        %v513 = vpack.c.bf16 %v509, %v508
        %v514 = vpack.c.bf16 %v510, %v510
        %v515 = vlaneseq
        %v516 = vshrl.u32 %v515, 7
        %v517 = vsub.s32 1, %v516
        %v518 = vrot.slane %v413, %v517
        %v521 = vunpack.c.l.b16 %v511
        %v522 = vunpack.c.l.b16 %v512
        %v523 = vpack.c.b16 %v522, %v521
        %vm525 = vcmask 130048
        %v527 = vsel %vm525, %v513, 0
        %v530 = vsel %vm525, %v514, 0
        %532 = vmatprep.subr.bf16.mxu0 0
        %533 = vmatpush1.bf16.msra.mxu0 %v523
        %534 = vmatprep.subr.bf16.mxu0 0
        %535 = vmatpush1.bf16.msra.mxu0 0
        %536 = vmatprep.subr.bf16.mxu0 0
        %537 = vmatpush1.bf16.msra.mxu0 0
        %538 = vmatprep.subr.bf16.mxu0 0
        %539 = vmatpush1.bf16.msra.mxu0 0
        %540 = vmatprep.subr.bf16.mxu0 0
        %541 = vmatpush1.bf16.msra.mxu0 0
        %542 = vmatprep.subr.bf16.mxu0 0
        %543 = vmatpush1.bf16.msra.mxu0 0
        %544 = vmatprep.subr.bf16.mxu0 0
        %545 = vmatpush1.bf16.msra.mxu0 0
        %546 = vmatprep.subr.bf16.mxu0 0
        %547 = vmatpush1.bf16.msra.mxu0 0
        %548 = vmatprep.subr.bf16.mxu0 0
        %549 = vmatpush1.bf16.msra.mxu0 0
        %550 = vmatprep.subr.bf16.mxu0 0
        %551 = vmatpush1.bf16.msra.mxu0 0
        %552 = vmatprep.subr.bf16.mxu0 0
        %553 = vmatpush1.bf16.msra.mxu0 0
        %554 = vmatprep.subr.bf16.mxu0 0
        %555 = vmatpush1.bf16.msra.mxu0 0
        %556 = vmatprep.subr.bf16.mxu0 0
        %557 = vmatpush1.bf16.msra.mxu0 0
        %558 = vmatprep.subr.bf16.mxu0 0
        %559 = vmatpush1.bf16.msra.mxu0 0
        %560 = vmatprep.subr.bf16.mxu0 0
        %561 = vmatpush1.bf16.msra.mxu0 0
        %562 = vmatprep.subr.bf16.mxu0 0
        %563 = vmatpush1.bf16.msra.mxu0 0
        %564 = vmatprep.mubr.bf16.mxu0 0
        %565 = vmatmul.mubr.bf16.gmra.mrb[0].mxu0 %v527
        %v566 = vpop.f32.mrb[0].mxu0
        %v567 = vadd.f32 %v518, %v566
        %v568 = vpop.f32.mrb[0].mxu0
        %v569 = vpop.f32.mrb[0].mxu0
        %v570 = vadd.f32 %v518, %v569
        %v571 = vpop.f32.mrb[0].mxu0
        %572 = vmatprep.mubr.bf16.mxu0 0
        %573 = vmatmul.mubr.bf16.gmra.mrb[0].mxu0 %v530
        %v574 = vpop.f32.mrb[0].mxu0
        %v575 = vadd.f32 %v518, %v574
        %v576 = vpop.f32.mrb[0].mxu0
        %v577 = vpop.f32.mrb[0].mxu0
        %v578 = vpop.f32.mrb[0].mxu0
        %579 = vdwg.mxu0
        %v580 = vsel %vm525, %v567, 0.0
        %581 = vadd.xlane.f32.xlu0 %v580
        %v582 = vpop.xlane.xlu0 %581
        %v583 = vsel %vm525, %v570, 0.0
        %584 = vadd.xlane.f32.xlu0 %v583
        %v585 = vpop.xlane.xlu0 %584
        %v586 = vsel %vm525, %v575, 0.0
        %587 = vadd.xlane.f32.xlu0 %v586
        %v588 = vpop.xlane.xlu0 %587
        %v589 = vrcp.pop 16.0
        %v590 = vmul.f32 %v582, %v589
        %v591 = vmul.f32 %v585, %v589
        %v592 = vmul.f32 %v588, %v589
        %v593 = vsub.f32 %v567, %v590
        %v594 = vsub.f32 %v570, %v591
        %v595 = vsub.f32 %v575, %v592
        %v596 = vmul.f32 %v593, %v593
        %v597 = vmul.f32 %v594, %v594
        %v598 = vmul.f32 %v595, %v595
        %v599 = vsel %vm525, %v596, 0.0
        %600 = vadd.xlane.f32.xlu0 %v599
        %v601 = vpop.xlane.xlu0 %600
        %v602 = vsel %vm525, %v597, 0.0
        %603 = vadd.xlane.f32.xlu0 %v602
        %v604 = vpop.xlane.xlu0 %603
        %v605 = vsel %vm525, %v598, 0.0
        %606 = vadd.xlane.f32.xlu0 %v605
        %v607 = vpop.xlane.xlu0 %606
        %v608 = vmul.f32 %v601, %v589
        %v609 = vmul.f32 %v604, %v589
        %v610 = vmul.f32 %v607, %v589
        %v611 = vadd.f32 %v608, 1e-05
        %v612 = vadd.f32 %v609, 1e-05
        %v613 = vadd.f32 %v610, 1e-05
        %v614 = vrsqrt.pop %v611
        %v615 = vrsqrt.pop %v612
        %v616 = vrsqrt.pop %v613
        %v617 = vmul.f32 %v593, %v614
        %v618 = vmul.f32 %v594, %v615
        %v619 = vmul.f32 %v595, %v616
        %v620 = vlaneseq
        %v621 = vshrl.u32 %v620, 7
        %v622 = vsub.s32 2, %v621
        %v623 = vrot.slane %v413, %v622
        %v624 = vmul.f32 %v617, %v623
        %v625 = vmul.f32 %v618, %v623
        %v626 = vmul.f32 %v619, %v623
        %v627 = vlaneseq
        %v628 = vshrl.u32 %v627, 7
        %v629 = vsub.s32 3, %v628
        %v630 = vrot.slane %v413, %v629
        %v631 = vadd.f32 %v624, %v630
        %v632 = vadd.f32 %v625, %v630
        %v633 = vadd.f32 %v626, %v630
        %v634 = vld [vmem:[%s3] sm:$0xf]
        %v635 = vld [vmem:[%s3 + $0x4] sm:$0xf]
        %v636 = vpack.c.bf16 %v632, %v631
        %v637 = vpack.c.bf16 %v633, %v633
        %v640 = vunpack.c.l.b16 %v634
        %v641 = vunpack.c.l.b16 %v635
        %v642 = vpack.c.b16 %v641, %v640
        %v645 = vsel %vm525, %v636, 0
        %v648 = vsel %vm525, %v637, 0
        %650 = vmatprep.subr.bf16.mxu0 0
        %651 = vmatpush1.bf16.msra.mxu0 %v642
        %652 = vmatprep.subr.bf16.mxu0 0
        %653 = vmatpush1.bf16.msra.mxu0 0
        %654 = vmatprep.subr.bf16.mxu0 0
        %655 = vmatpush1.bf16.msra.mxu0 0
        %656 = vmatprep.subr.bf16.mxu0 0
        %657 = vmatpush1.bf16.msra.mxu0 0
        %658 = vmatprep.subr.bf16.mxu0 0
        %659 = vmatpush1.bf16.msra.mxu0 0
        %660 = vmatprep.subr.bf16.mxu0 0
        %661 = vmatpush1.bf16.msra.mxu0 0
        %662 = vmatprep.subr.bf16.mxu0 0
        %663 = vmatpush1.bf16.msra.mxu0 0
        %664 = vmatprep.subr.bf16.mxu0 0
        %665 = vmatpush1.bf16.msra.mxu0 0
        %666 = vmatprep.subr.bf16.mxu0 0
        %667 = vmatpush1.bf16.msra.mxu0 0
        %668 = vmatprep.subr.bf16.mxu0 0
        %669 = vmatpush1.bf16.msra.mxu0 0
        %670 = vmatprep.subr.bf16.mxu0 0
        %671 = vmatpush1.bf16.msra.mxu0 0
        %672 = vmatprep.subr.bf16.mxu0 0
        %673 = vmatpush1.bf16.msra.mxu0 0
        %674 = vmatprep.subr.bf16.mxu0 0
        %675 = vmatpush1.bf16.msra.mxu0 0
        %676 = vmatprep.subr.bf16.mxu0 0
        %677 = vmatpush1.bf16.msra.mxu0 0
        %678 = vmatprep.subr.bf16.mxu0 0
        %679 = vmatpush1.bf16.msra.mxu0 0
        %680 = vmatprep.subr.bf16.mxu0 0
        %681 = vmatpush1.bf16.msra.mxu0 0
        %682 = vmatprep.mubr.bf16.mxu0 0
        %683 = vmatmul.mubr.bf16.gmra.mrb[0].mxu0 %v645
        %v684 = vpop.f32.mrb[0].mxu0
        %v685 = vadd.f32 0.0, %v684
        %v686 = vpop.f32.mrb[0].mxu0
        %v687 = vpop.f32.mrb[0].mxu0
        %v688 = vadd.f32 0.0, %v687
        %v689 = vpop.f32.mrb[0].mxu0
        %690 = vmatprep.mubr.bf16.mxu0 0
        %691 = vmatmul.mubr.bf16.gmra.mrb[0].mxu0 %v648
        %v692 = vpop.f32.mrb[0].mxu0
        %v693 = vadd.f32 0.0, %v692
        %v694 = vpop.f32.mrb[0].mxu0
        %v695 = vpop.f32.mrb[0].mxu0
        %v696 = vpop.f32.mrb[0].mxu0
        %697 = vdwg.mxu0
        %v698 = vld [vmem:[%s4] sm:$0xf]
        %v699 = vld [vmem:[%s4 + $0x4] sm:$0xf]
        %v700 = vpack.c.bf16 %v688, %v685
        %v701 = vpack.c.bf16 %v693, %v693
        %v704 = vunpack.c.l.b16 %v698
        %v705 = vunpack.c.l.b16 %v699
        %v706 = vpack.c.b16 %v705, %v704
        %v709 = vsel %vm525, %v700, 0
        %v712 = vsel %vm525, %v701, 0
        %714 = vmatprep.subr.bf16.mxu0 0
        %715 = vmatpush1.bf16.msra.mxu0 %v706
        %716 = vmatprep.subr.bf16.mxu0 0
        %717 = vmatpush1.bf16.msra.mxu0 0
        %718 = vmatprep.subr.bf16.mxu0 0
        %719 = vmatpush1.bf16.msra.mxu0 0
        %720 = vmatprep.subr.bf16.mxu0 0
        %721 = vmatpush1.bf16.msra.mxu0 0
        %722 = vmatprep.subr.bf16.mxu0 0
        %723 = vmatpush1.bf16.msra.mxu0 0
        %724 = vmatprep.subr.bf16.mxu0 0
        %725 = vmatpush1.bf16.msra.mxu0 0
        %726 = vmatprep.subr.bf16.mxu0 0
        %727 = vmatpush1.bf16.msra.mxu0 0
        %728 = vmatprep.subr.bf16.mxu0 0
        %729 = vmatpush1.bf16.msra.mxu0 0
        %730 = vmatprep.subr.bf16.mxu0 0
        %731 = vmatpush1.bf16.msra.mxu0 0
        %732 = vmatprep.subr.bf16.mxu0 0
        %733 = vmatpush1.bf16.msra.mxu0 0
        %734 = vmatprep.subr.bf16.mxu0 0
        %735 = vmatpush1.bf16.msra.mxu0 0
        %736 = vmatprep.subr.bf16.mxu0 0
        %737 = vmatpush1.bf16.msra.mxu0 0
        %738 = vmatprep.subr.bf16.mxu0 0
        %739 = vmatpush1.bf16.msra.mxu0 0
        %740 = vmatprep.subr.bf16.mxu0 0
        %741 = vmatpush1.bf16.msra.mxu0 0
        %742 = vmatprep.subr.bf16.mxu0 0
        %743 = vmatpush1.bf16.msra.mxu0 0
        %744 = vmatprep.subr.bf16.mxu0 0
        %745 = vmatpush1.bf16.msra.mxu0 0
        %746 = vmatprep.mubr.bf16.mxu0 0
        %747 = vmatmul.mubr.bf16.gmra.mrb[0].mxu0 %v709
        %v748 = vpop.f32.mrb[0].mxu0
        %v749 = vadd.f32 0.0, %v748
        %v750 = vpop.f32.mrb[0].mxu0
        %v751 = vpop.f32.mrb[0].mxu0
        %v752 = vadd.f32 0.0, %v751
        %v753 = vpop.f32.mrb[0].mxu0
        %754 = vmatprep.mubr.bf16.mxu0 0
        %755 = vmatmul.mubr.bf16.gmra.mrb[0].mxu0 %v712
        %v756 = vpop.f32.mrb[0].mxu0
        %v757 = vadd.f32 0.0, %v756
        %v758 = vpop.f32.mrb[0].mxu0
        %v759 = vpop.f32.mrb[0].mxu0
        %v760 = vpop.f32.mrb[0].mxu0
        %761 = vdwg.mxu0
        %v762 = vlaneseq
        %v763 = vshrl.u32 %v762, 7
        %v764 = vadd.s32 %v763, 8
        %v765 = vadd.s32 %v763, 16
        %vm766 = vcmp.eq.s32.totalorder %v763, 0
        %vm767 = vcmp.eq.s32.totalorder %v764, 0
        %vm768 = vcmp.eq.s32.totalorder %v765, 0
        %vm769 = vcmp.ge.s32.totalorder %v763, 17
        %vm770 = vcmp.ge.s32.totalorder %v764, 17
        %vm771 = vcmp.ge.s32.totalorder %v765, 17
        %vm772 = vmor %vm766, %vm769
        %vm773 = vmor %vm767, %vm770
        %vm774 = vmor %vm768, %vm771
        %v775 = vsel %vm772, -1e+30, %v749
        %v776 = vsel %vm773, -1e+30, %v752
        %v777 = vsel %vm774, -1e+30, %v757
        %vm778 = vcmask 64512
        %v779 = vsel %vm778, %v775, -inf
        %v780 = vsel %vm778, %v776, -inf
        %v781 = vsel %vm778, %v777, -inf
        %v782 = vmax.f32 %v779, %v780
        %v783 = vmax.f32 %v782, %v781
        %v784 = vrot.slane %v783, 4
        %v785 = vmax.f32 %v783, %v784
        %v786 = vrot.slane %v785, 2
        %v787 = vmax.f32 %v785, %v786
        %v788 = vrot.slane %v787, 1
        %v789 = vmax.f32 %v787, %v788
        %v790 = vsub.f32 %v775, %v789
        %v791 = vsub.f32 %v776, %v789
        %v792 = vsub.f32 %v777, %v789
        %v793 = vmul.f32 %v790, 1.442695
        %v794 = vpow.pop %v793
        %v795 = vmul.f32 %v791, 1.442695
        %v796 = vpow.pop %v795
        %v797 = vmul.f32 %v792, 1.442695
        %v798 = vpow.pop %v797
        %v799 = vsel %vm778, %v794, 0.0
        %v800 = vsel %vm778, %v796, 0.0
        %v801 = vadd.f32 %v799, %v800
        %v802 = vsel %vm778, %v798, 0.0
        %v803 = vadd.f32 %v801, %v802
        %v804 = vrot.slane %v803, 4
        %v805 = vadd.f32 %v803, %v804
        %v806 = vrot.slane %v805, 2
        %v807 = vadd.f32 %v805, %v806
        %v808 = vrot.slane %v807, 1
        %v809 = vadd.f32 %v807, %v808
        %v810 = vrcp.pop %v809
        %v811 = vmul.f32 %v794, %v810
        %v812 = vmul.f32 %v796, %v810
        %v813 = vmul.f32 %v798, %v810
        %814 = vxpose.xlu0.b32.start [1/16] %v811, 128
        %815 = vxpose.xlu0.b32.cont [2/16] %v812, 128
        %816 = vxpose.xlu0.b32.cont [3/16] %v813, 128
        %817 = vxpose.xlu0.b32.cont [4/16] 0.0, 128
        %818 = vxpose.xlu0.b32.cont [5/16] 0.0, 128
        %819 = vxpose.xlu0.b32.cont [6/16] 0.0, 128
        %820 = vxpose.xlu0.b32.cont [7/16] 0.0, 128
        %821 = vxpose.xlu0.b32.cont [8/16] 0.0, 128
        %822 = vxpose.xlu0.b32.cont [9/16] 0.0, 128
        %823 = vxpose.xlu0.b32.cont [10/16] 0.0, 128
        %824 = vxpose.xlu0.b32.cont [11/16] 0.0, 128
        %825 = vxpose.xlu0.b32.cont [12/16] 0.0, 128
        %826 = vxpose.xlu0.b32.cont [13/16] 0.0, 128
        %827 = vxpose.xlu0.b32.cont [14/16] 0.0, 128
        %828 = vxpose.xlu0.b32.cont [15/16] 0.0, 128
        %829 = vxpose.xlu0.b32.end [16/16] 0.0, 128
        %v830 = vpop.trf.xlu0
        %v831 = vpop.trf.xlu0
        %v832 = vpop.trf.xlu0
        %v833 = vpop.trf.xlu0
        %v834 = vpop.trf.xlu0
        %v835 = vpop.trf.xlu0
        %v836 = vpop.trf.xlu0
        %v837 = vpop.trf.xlu0
        %v838 = vpop.trf.xlu0
        %v839 = vpop.trf.xlu0
        %v840 = vpop.trf.xlu0
        %v841 = vpop.trf.xlu0
        %v842 = vpop.trf.xlu0
        %v843 = vpop.trf.xlu0
        %v844 = vpop.trf.xlu0
        %v845 = vpop.trf.xlu0
        %vm846 = vcmask 195584
        %v848 = vsel %vm846, %v830, 0
        %850 = vmatprep.subr.mxu0 0.0
        %851 = vmatpush1.msra.mxu0 %v567
        %852 = vmatprep.subr.mxu0 0.0
        %853 = vmatpush1.msra.mxu0 %v570
        %854 = vmatprep.subr.mxu0 0.0
        %855 = vmatpush1.msra.mxu0 %v575
        %856 = vmatprep.subr.mxu0 0.0
        %857 = vmatpush1.msra.mxu0 0.0
        %858 = vmatprep.subr.mxu0 0.0
        %859 = vmatpush1.msra.mxu0 0.0
        %860 = vmatprep.subr.mxu0 0.0
        %861 = vmatpush1.msra.mxu0 0.0
        %862 = vmatprep.subr.mxu0 0.0
        %863 = vmatpush1.msra.mxu0 0.0
        %864 = vmatprep.subr.mxu0 0.0
        %865 = vmatpush1.msra.mxu0 0.0
        %866 = vmatprep.subr.mxu0 0.0
        %867 = vmatpush1.msra.mxu0 0.0
        %868 = vmatprep.subr.mxu0 0.0
        %869 = vmatpush1.msra.mxu0 0.0
        %870 = vmatprep.subr.mxu0 0.0
        %871 = vmatpush1.msra.mxu0 0.0
        %872 = vmatprep.subr.mxu0 0.0
        %873 = vmatpush1.msra.mxu0 0.0
        %874 = vmatprep.subr.mxu0 0.0
        %875 = vmatpush1.msra.mxu0 0.0
        %876 = vmatprep.subr.mxu0 0.0
        %877 = vmatpush1.msra.mxu0 0.0
        %878 = vmatprep.subr.mxu0 0.0
        %879 = vmatpush1.msra.mxu0 0.0
        %880 = vmatprep.subr.mxu0 0.0
        %881 = vmatpush1.msra.mxu0 0.0
        %882 = vmatprep.subr.mxu0 0.0
        %883 = vmatpush1.msra.mxu0 0.0
        %884 = vmatprep.subr.mxu0 0.0
        %885 = vmatpush1.msra.mxu0 0.0
        %886 = vmatprep.subr.mxu0 0.0
        %887 = vmatpush1.msra.mxu0 0.0
        %888 = vmatprep.subr.mxu0 0.0
        %889 = vmatpush1.msra.mxu0 0.0
        %890 = vmatprep.subr.mxu0 0.0
        %891 = vmatpush1.msra.mxu0 0.0
        %892 = vmatprep.subr.mxu0 0.0
        %893 = vmatpush1.msra.mxu0 0.0
        %894 = vmatprep.subr.mxu0 0.0
        %895 = vmatpush1.msra.mxu0 0.0
        %896 = vmatprep.subr.mxu0 0.0
        %897 = vmatpush1.msra.mxu0 0.0
        %898 = vmatprep.subr.mxu0 0.0
        %899 = vmatpush1.msra.mxu0 0.0
        %900 = vmatprep.subr.mxu0 0.0
        %901 = vmatpush1.msra.mxu0 0.0
        %902 = vmatprep.subr.mxu0 0.0
        %903 = vmatpush1.msra.mxu0 0.0
        %904 = vmatprep.subr.mxu0 0.0
        %905 = vmatpush1.msra.mxu0 0.0
        %906 = vmatprep.subr.mxu0 0.0
        %907 = vmatpush1.msra.mxu0 0.0
        %908 = vmatprep.subr.mxu0 0.0
        %909 = vmatpush1.msra.mxu0 0.0
        %910 = vmatprep.subr.mxu0 0.0
        %911 = vmatpush1.msra.mxu0 0.0
        %912 = vmatprep.subr.mxu0 0.0
        %913 = vmatpush1.msra.mxu0 0.0
        %914 = vmatprep.mubr.f32.mxu0 0.0
        %915 = vmatmul.mubr.f32.gmra.mrb[0].mxu0 %v848
        %v916 = vpop.f32.mrb[0].mxu0
        %v917 = vadd.f32 0.0, %v916
        %v918 = vpop.f32.mrb[0].mxu0
        %919 = vdwg.mxu0
        %v921 = vrot.slane %v917, 7
        %vm923 = vcmask 1040384
        %v924 = vsel %vm923, %v567, %v921
        %v925 = vsel %vm923, %v921, 0.0
        %v926 = vsel %vm525, %v924, 0.0
        %927 = vadd.xlane.f32.xlu0 %v926
        %v928 = vpop.xlane.xlu0 %927
        %v929 = vsel %vm525, %v925, 0.0
        %930 = vadd.xlane.f32.xlu0 %v929
        %v931 = vpop.xlane.xlu0 %930
        %v932 = vmul.f32 %v928, %v589
        %v933 = vmul.f32 %v931, %v589
        %v934 = vsub.f32 %v924, %v932
        %v935 = vsub.f32 %v925, %v933
        %v936 = vmul.f32 %v934, %v934
        %v937 = vmul.f32 %v935, %v935
        %v938 = vsel %vm525, %v936, 0.0
        %939 = vadd.xlane.f32.xlu0 %v938
        %v940 = vpop.xlane.xlu0 %939
        %v941 = vsel %vm525, %v937, 0.0
        %942 = vadd.xlane.f32.xlu0 %v941
        %v943 = vpop.xlane.xlu0 %942
        %v944 = vmul.f32 %v940, %v589
        %v945 = vmul.f32 %v943, %v589
        %v946 = vadd.f32 %v944, 1e-05
        %v947 = vadd.f32 %v945, 1e-05
        %v948 = vrsqrt.pop %v946
        %v949 = vrsqrt.pop %v947
        %v950 = vmul.f32 %v934, %v948
        %v951 = vmul.f32 %v935, %v949
        %v952 = vlaneseq
        %v953 = vshrl.u32 %v952, 7
        %v954 = vsub.s32 4, %v953
        %v955 = vrot.slane %v413, %v954
        %v956 = vmul.f32 %v950, %v955
        %v957 = vmul.f32 %v951, %v955
        %v958 = vlaneseq
        %v959 = vshrl.u32 %v958, 7
        %v960 = vsub.s32 5, %v959
        %v961 = vrot.slane %v413, %v960
        %v962 = vadd.f32 %v956, %v961
        %v963 = vadd.f32 %v957, %v961
        %v964 = vcombine.high %v962, 0.0
        %v966 = vunpack.c.l.s4 1983009808
        %v967 = vunpack.c.0.s8 %v966
        %v968 = vlaneseq
        %v969 = vshrl.u32 %v968, 7
        %v970 = vsub.s32 %v967, %v969
        %v971 = vrot.slane %v962, %v970
        %v973 = vunpack.c.l.s4 1983009808
        %v974 = vunpack.c.0.s8 %v973
        %v975 = vlaneseq
        %v976 = vshrl.u32 %v975, 7
        %v977 = vsub.s32 %v974, %v976
        %v978 = vrot.slane %v964, %v977
        %v979 = vcombine.high %v971, 0.0
        %v981 = vunpack.c.l.s4 1934713408
        %v982 = vunpack.c.0.s8 %v981
        %v983 = vlaneseq
        %v984 = vshrl.u32 %v983, 7
        %v985 = vsub.s32 %v982, %v984
        %v986 = vrot.slane %v971, %v985
        %v988 = vunpack.c.l.s4 1934713408
        %v989 = vunpack.c.0.s8 %v988
        %v990 = vlaneseq
        %v991 = vshrl.u32 %v990, 7
        %v992 = vsub.s32 %v989, %v991
        %v993 = vrot.slane %v979, %v992
        %v994 = vcombine.high %v978, 0.0
        %v996 = vunpack.c.l.s4 1934713408
        %v997 = vunpack.c.0.s8 %v996
        %v998 = vlaneseq
        %v999 = vshrl.u32 %v998, 7
        %v1000 = vsub.s32 %v997, %v999
        %v1001 = vrot.slane %v978, %v1000
        %v1003 = vunpack.c.l.s4 1934713408
        %v1004 = vunpack.c.0.s8 %v1003
        %v1005 = vlaneseq
        %v1006 = vshrl.u32 %v1005, 7
        %v1007 = vsub.s32 %v1004, %v1006
        %v1008 = vrot.slane %v994, %v1007
        %v1009 = vcombine.high %v986, 0.0
        %v1010 = vcombine.high %v993, 0.0
        %v1011 = vcombine.high %v1001, 0.0
        %v1012 = vcombine.high %v1008, 0.0
        %v1013 = vcombine.high %v963, 0.0
        %v1015 = vunpack.c.l.s4 1983009808
        %v1016 = vunpack.c.0.s8 %v1015
        %v1017 = vlaneseq
        %v1018 = vshrl.u32 %v1017, 7
        %v1019 = vsub.s32 %v1016, %v1018
        %v1020 = vrot.slane %v963, %v1019
        %v1022 = vunpack.c.l.s4 1983009808
        %v1023 = vunpack.c.0.s8 %v1022
        %v1024 = vlaneseq
        %v1025 = vshrl.u32 %v1024, 7
        %v1026 = vsub.s32 %v1023, %v1025
        %v1027 = vrot.slane %v1013, %v1026
        %v1028 = vcombine.high %v1020, 0.0
        %v1030 = vunpack.c.l.s4 1934713408
        %v1031 = vunpack.c.0.s8 %v1030
        %v1032 = vlaneseq
        %v1033 = vshrl.u32 %v1032, 7
        %v1034 = vsub.s32 %v1031, %v1033
        %v1035 = vrot.slane %v1020, %v1034
        %v1037 = vunpack.c.l.s4 1934713408
        %v1038 = vunpack.c.0.s8 %v1037
        %v1039 = vlaneseq
        %v1040 = vshrl.u32 %v1039, 7
        %v1041 = vsub.s32 %v1038, %v1040
        %v1042 = vrot.slane %v1028, %v1041
        %v1043 = vcombine.high %v1027, 0.0
        %v1045 = vunpack.c.l.s4 1934713408
        %v1046 = vunpack.c.0.s8 %v1045
        %v1047 = vlaneseq
        %v1048 = vshrl.u32 %v1047, 7
        %v1049 = vsub.s32 %v1046, %v1048
        %v1050 = vrot.slane %v1027, %v1049
        %v1052 = vunpack.c.l.s4 1934713408
        %v1053 = vunpack.c.0.s8 %v1052
        %v1054 = vlaneseq
        %v1055 = vshrl.u32 %v1054, 7
        %v1056 = vsub.s32 %v1053, %v1055
        %v1057 = vrot.slane %v1043, %v1056
        %v1058 = vcombine.high %v1035, 0.0
        %v1059 = vcombine.high %v1042, 0.0
        %v1060 = vcombine.high %v1050, 0.0
        %v1061 = vcombine.high %v1057, 0.0
        %v1062 = vld [vmem:[%s7] sm:$0xf]
        %v1063 = vld [vmem:[%s7 + $0x4] sm:$0xf]
        %v1064 = vld [vmem:[%s7 + $0x8] sm:$0xf]
        %v1065 = vld [vmem:[%s7 + $0xc] sm:$0xf]
        %v1066 = vld [vmem:[%s7 + $0x10] sm:$0xf]
        %v1067 = vld [vmem:[%s8] sm:$0xf]
        %v1068 = vld [vmem:[%s8 + $0x4] sm:$0xf]
        %v1069 = vpack.c.bf16 %v986, %v986
        %v1070 = vpack.c.bf16 %v1009, %v1009
        %v1071 = vpack.c.bf16 %v993, %v993
        %v1072 = vpack.c.bf16 %v1010, %v1010
        %v1073 = vpack.c.bf16 %v1001, %v1001
        %v1074 = vpack.c.bf16 %v1011, %v1011
        %v1075 = vpack.c.bf16 %v1008, %v1008
        %v1076 = vpack.c.bf16 %v1012, %v1012
        %v1077 = vpack.c.bf16 %v1035, %v1035
        %v1078 = vpack.c.bf16 %v1058, %v1058
        %v1079 = vpack.c.bf16 %v1042, %v1042
        %v1080 = vpack.c.bf16 %v1059, %v1059
        %v1081 = vpack.c.bf16 %v1050, %v1050
        %v1082 = vpack.c.bf16 %v1060, %v1060
        %v1083 = vpack.c.bf16 %v1057, %v1057
        %v1084 = vpack.c.bf16 %v1061, %v1061
        %1086 = vset.pattern.permute.xlu0 0
        %1087 = vperm.xlu0 %1086, %v415
        %v1088 = vpop.permute.xlu0 %1087
        %1091 = vset.pattern.permute.xlu0 0
        %1092 = vperm.xlu0 %1091, %v416
        %v1093 = vpop.permute.xlu0 %1092
        %1096 = vset.pattern.permute.xlu0 0
        %1097 = vperm.xlu0 %1096, %v417
        %v1098 = vpop.permute.xlu0 %1097
        %1101 = vset.pattern.permute.xlu0 0
        %1102 = vperm.xlu0 %1101, %v418
        %v1103 = vpop.permute.xlu0 %1102
        %1106 = vset.pattern.permute.xlu0 0
        %1107 = vperm.xlu0 %1106, %v419
        %v1108 = vpop.permute.xlu0 %1107
        %v1115 = vunpack.c.l.b16 %v1062
        %v1116 = vunpack.c.l.b16 %v1063
        %v1117 = vunpack.c.l.b16 %v1064
        %v1118 = vunpack.c.l.b16 %v1065
        %v1119 = vunpack.c.l.b16 %v1066
        %v1120 = vpack.c.b16 %v1116, %v1115
        %v1121 = vpack.c.b16 %v1118, %v1117
        %v1122 = vpack.c.b16 %v1119, %v1119
        %v1139 = vunpack.c.l.b16 %v1069
        %v1140 = vunpack.c.l.b16 %v1070
        %v1141 = vunpack.c.l.b16 %v1071
        %v1142 = vunpack.c.l.b16 %v1072
        %v1143 = vunpack.c.l.b16 %v1073
        %v1144 = vunpack.c.l.b16 %v1074
        %v1145 = vunpack.c.l.b16 %v1075
        %v1146 = vunpack.c.l.b16 %v1076
        %v1147 = vunpack.c.l.b16 %v1077
        %v1148 = vunpack.c.l.b16 %v1078
        %v1149 = vunpack.c.l.b16 %v1079
        %v1150 = vunpack.c.l.b16 %v1080
        %v1151 = vunpack.c.l.b16 %v1081
        %v1152 = vunpack.c.l.b16 %v1082
        %v1153 = vunpack.c.l.b16 %v1083
        %v1154 = vunpack.c.l.b16 %v1084
        %v1155 = vrot.slane %v1140, 7
        %vm1156 = vcmask 1041409
        %v1157 = vsel %vm1156, %v1155, %v1139
        %v1158 = vrot.slane %v1141, 6
        %vm1159 = vcmask 1042434
        %v1160 = vsel %vm1159, %v1158, %v1157
        %v1161 = vrot.slane %v1142, 5
        %vm1162 = vcmask 1043459
        %v1163 = vsel %vm1162, %v1161, %v1160
        %v1164 = vrot.slane %v1143, 4
        %vm1165 = vcmask 1044484
        %v1166 = vsel %vm1165, %v1164, %v1163
        %v1167 = vrot.slane %v1144, 3
        %vm1168 = vcmask 1045509
        %v1169 = vsel %vm1168, %v1167, %v1166
        %v1170 = vrot.slane %v1145, 2
        %vm1171 = vcmask 1046534
        %v1172 = vsel %vm1171, %v1170, %v1169
        %v1173 = vrot.slane %v1146, 1
        %vm1174 = vcmask 1047559
        %v1175 = vsel %vm1174, %v1173, %v1172
        %v1176 = vrot.slane %v1148, 7
        %v1177 = vsel %vm1156, %v1176, %v1147
        %v1178 = vrot.slane %v1149, 6
        %v1179 = vsel %vm1159, %v1178, %v1177
        %v1180 = vrot.slane %v1150, 5
        %v1181 = vsel %vm1162, %v1180, %v1179
        %v1182 = vrot.slane %v1151, 4
        %v1183 = vsel %vm1165, %v1182, %v1181
        %v1184 = vrot.slane %v1152, 3
        %v1185 = vsel %vm1168, %v1184, %v1183
        %v1186 = vrot.slane %v1153, 2
        %v1187 = vsel %vm1171, %v1186, %v1185
        %v1188 = vrot.slane %v1154, 1
        %v1189 = vsel %vm1174, %v1188, %v1187
        %v1190 = vpack.c.b16 %v1189, %v1175
        %v1193 = vsel %vm525, %v1120, 0
        %v1196 = vsel %vm525, %v1121, 0
        %v1199 = vsel %vm525, %v1122, 0
        %1201 = vmatprep.subr.bf16.mxu0 0
        %1202 = vmatpush1.bf16.msra.mxu0 %v1190
        %1203 = vmatprep.subr.bf16.mxu0 0
        %1204 = vmatpush1.bf16.msra.mxu0 0
        %1205 = vmatprep.subr.bf16.mxu0 0
        %1206 = vmatpush1.bf16.msra.mxu0 0
        %1207 = vmatprep.subr.bf16.mxu0 0
        %1208 = vmatpush1.bf16.msra.mxu0 0
        %1209 = vmatprep.subr.bf16.mxu0 0
        %1210 = vmatpush1.bf16.msra.mxu0 0
        %1211 = vmatprep.subr.bf16.mxu0 0
        %1212 = vmatpush1.bf16.msra.mxu0 0
        %1213 = vmatprep.subr.bf16.mxu0 0
        %1214 = vmatpush1.bf16.msra.mxu0 0
        %1215 = vmatprep.subr.bf16.mxu0 0
        %1216 = vmatpush1.bf16.msra.mxu0 0
        %1217 = vmatprep.subr.bf16.mxu0 0
        %1218 = vmatpush1.bf16.msra.mxu0 0
        %1219 = vmatprep.subr.bf16.mxu0 0
        %1220 = vmatpush1.bf16.msra.mxu0 0
        %1221 = vmatprep.subr.bf16.mxu0 0
        %1222 = vmatpush1.bf16.msra.mxu0 0
        %1223 = vmatprep.subr.bf16.mxu0 0
        %1224 = vmatpush1.bf16.msra.mxu0 0
        %1225 = vmatprep.subr.bf16.mxu0 0
        %1226 = vmatpush1.bf16.msra.mxu0 0
        %1227 = vmatprep.subr.bf16.mxu0 0
        %1228 = vmatpush1.bf16.msra.mxu0 0
        %1229 = vmatprep.subr.bf16.mxu0 0
        %1230 = vmatpush1.bf16.msra.mxu0 0
        %1231 = vmatprep.subr.bf16.mxu0 0
        %1232 = vmatpush1.bf16.msra.mxu0 0
        %1233 = vmatprep.mubr.bf16.mxu0 0
        %1234 = vmatmul.mubr.bf16.gmra.mrb[0].mxu0 %v1193
        %v1235 = vpop.f32.mrb[0].mxu0
        %v1236 = vadd.f32 %v1088, %v1235
        %v1237 = vpop.f32.mrb[0].mxu0
        %v1238 = vpop.f32.mrb[0].mxu0
        %v1239 = vadd.f32 %v1093, %v1238
        %v1240 = vpop.f32.mrb[0].mxu0
        %1241 = vmatprep.mubr.bf16.mxu0 0
        %1242 = vmatmul.mubr.bf16.gmra.mrb[0].mxu0 %v1196
        %v1243 = vpop.f32.mrb[0].mxu0
        %v1244 = vadd.f32 %v1098, %v1243
        %v1245 = vpop.f32.mrb[0].mxu0
        %v1246 = vpop.f32.mrb[0].mxu0
        %v1247 = vadd.f32 %v1103, %v1246
        %v1248 = vpop.f32.mrb[0].mxu0
        %1249 = vmatprep.mubr.bf16.mxu0 0
        %1250 = vmatmul.mubr.bf16.gmra.mrb[0].mxu0 %v1199
        %v1251 = vpop.f32.mrb[0].mxu0
        %v1252 = vadd.f32 %v1108, %v1251
        %v1253 = vpop.f32.mrb[0].mxu0
        %v1254 = vpop.f32.mrb[0].mxu0
        %v1255 = vpop.f32.mrb[0].mxu0
        %1256 = vdwg.mxu0
        %v1257 = vmul.f32 %v1236, 0.5
        %v1258 = vmul.f32 %v1239, 0.5
        %v1259 = vmul.f32 %v1244, 0.5
        %v1260 = vmul.f32 %v1247, 0.5
        %v1261 = vmul.f32 %v1252, 0.5
        %v1262 = vmul.f32 %v1236, 0.70710677
        %v1263 = vmul.f32 %v1239, 0.70710677
        %v1264 = vmul.f32 %v1244, 0.70710677
        %v1265 = vmul.f32 %v1247, 0.70710677
        %v1266 = vmul.f32 %v1252, 0.70710677
        %v1267 = vand.u32 2147483647, %v1262
        %v1268 = vand.u32 2147483647, %v1263
        %v1269 = vand.u32 2147483647, %v1264
        %v1270 = vand.u32 2147483647, %v1265
        %v1271 = vand.u32 2147483647, %v1266
        %v1272 = vmul.f32 %v1267, 0.3275911
        %v1273 = vmul.f32 %v1268, 0.3275911
        %v1274 = vmul.f32 %v1269, 0.3275911
        %v1275 = vmul.f32 %v1270, 0.3275911
        %v1276 = vmul.f32 %v1271, 0.3275911
        %v1277 = vadd.f32 %v1272, 1.0
        %v1278 = vadd.f32 %v1273, 1.0
        %v1279 = vadd.f32 %v1274, 1.0
        %v1280 = vadd.f32 %v1275, 1.0
        %v1281 = vadd.f32 %v1276, 1.0
        %v1282 = vrcp.pop %v1277
        %v1283 = vrcp.pop %v1278
        %v1284 = vrcp.pop %v1279
        %v1285 = vrcp.pop %v1280
        %v1286 = vrcp.pop %v1281
        %v1287 = vmul.f32 %v1282, 1.0614054
        %v1288 = vmul.f32 %v1283, 1.0614054
        %v1289 = vmul.f32 %v1284, 1.0614054
        %v1290 = vmul.f32 %v1285, 1.0614054
        %v1291 = vmul.f32 %v1286, 1.0614054
        %v1292 = vadd.f32 %v1287, -1.4531521
        %v1293 = vadd.f32 %v1288, -1.4531521
        %v1294 = vadd.f32 %v1289, -1.4531521
        %v1295 = vadd.f32 %v1290, -1.4531521
        %v1296 = vadd.f32 %v1291, -1.4531521
        %v1297 = vmul.f32 %v1292, %v1282
        %v1298 = vmul.f32 %v1293, %v1283
        %v1299 = vmul.f32 %v1294, %v1284
        %v1300 = vmul.f32 %v1295, %v1285
        %v1301 = vmul.f32 %v1296, %v1286
        %v1302 = vadd.f32 %v1297, 1.4214138
        %v1303 = vadd.f32 %v1298, 1.4214138
        %v1304 = vadd.f32 %v1299, 1.4214138
        %v1305 = vadd.f32 %v1300, 1.4214138
        %v1306 = vadd.f32 %v1301, 1.4214138
        %v1307 = vmul.f32 %v1302, %v1282
        %v1308 = vmul.f32 %v1303, %v1283
        %v1309 = vmul.f32 %v1304, %v1284
        %v1310 = vmul.f32 %v1305, %v1285
        %v1311 = vmul.f32 %v1306, %v1286
        %v1312 = vadd.f32 %v1307, -0.28449672
        %v1313 = vadd.f32 %v1308, -0.28449672
        %v1314 = vadd.f32 %v1309, -0.28449672
        %v1315 = vadd.f32 %v1310, -0.28449672
        %v1316 = vadd.f32 %v1311, -0.28449672
        %v1317 = vmul.f32 %v1312, %v1282
        %v1318 = vmul.f32 %v1313, %v1283
        %v1319 = vmul.f32 %v1314, %v1284
        %v1320 = vmul.f32 %v1315, %v1285
        %v1321 = vmul.f32 %v1316, %v1286
        %v1322 = vadd.f32 %v1317, 0.2548296
        %v1323 = vadd.f32 %v1318, 0.2548296
        %v1324 = vadd.f32 %v1319, 0.2548296
        %v1325 = vadd.f32 %v1320, 0.2548296
        %v1326 = vadd.f32 %v1321, 0.2548296
        %v1327 = vmul.f32 %v1322, %v1282
        %v1328 = vmul.f32 %v1323, %v1283
        %v1329 = vmul.f32 %v1324, %v1284
        %v1330 = vmul.f32 %v1325, %v1285
        %v1331 = vmul.f32 %v1326, %v1286
        %v1332 = vsub.f32 0.0, %v1267
        %v1333 = vsub.f32 0.0, %v1268
        %v1334 = vsub.f32 0.0, %v1269
        %v1335 = vsub.f32 0.0, %v1270
        %v1336 = vsub.f32 0.0, %v1271
        %v1337 = vmul.f32 %v1332, %v1267
        %v1338 = vmul.f32 %v1333, %v1268
        %v1339 = vmul.f32 %v1334, %v1269
        %v1340 = vmul.f32 %v1335, %v1270
        %v1341 = vmul.f32 %v1336, %v1271
        %v1342 = vmul.f32 %v1337, 1.442695
        %v1343 = vpow.pop %v1342
        %v1344 = vmul.f32 %v1338, 1.442695
        %v1345 = vpow.pop %v1344
        %v1346 = vmul.f32 %v1339, 1.442695
        %v1347 = vpow.pop %v1346
        %v1348 = vmul.f32 %v1340, 1.442695
        %v1349 = vpow.pop %v1348
        %v1350 = vmul.f32 %v1341, 1.442695
        %v1351 = vpow.pop %v1350
        %v1352 = vmul.f32 %v1327, %v1343
        %v1353 = vmul.f32 %v1328, %v1345
        %v1354 = vmul.f32 %v1329, %v1347
        %v1355 = vmul.f32 %v1330, %v1349
        %v1356 = vmul.f32 %v1331, %v1351
        %v1357 = vsub.f32 1.0, %v1352
        %v1358 = vsub.f32 1.0, %v1353
        %v1359 = vsub.f32 1.0, %v1354
        %v1360 = vsub.f32 1.0, %v1355
        %v1361 = vsub.f32 1.0, %v1356
        %vm1362 = vcmp.ge.f32.partialorder %v1262, 0.0
        %vm1363 = vcmp.ge.f32.partialorder %v1263, 0.0
        %vm1364 = vcmp.ge.f32.partialorder %v1264, 0.0
        %vm1365 = vcmp.ge.f32.partialorder %v1265, 0.0
        %vm1366 = vcmp.ge.f32.partialorder %v1266, 0.0
        %v1367 = vsub.f32 0.0, %v1357
        %v1368 = vsub.f32 0.0, %v1358
        %v1369 = vsub.f32 0.0, %v1359
        %v1370 = vsub.f32 0.0, %v1360
        %v1371 = vsub.f32 0.0, %v1361
        %v1372 = vsel %vm1362, %v1357, %v1367
        %v1373 = vsel %vm1363, %v1358, %v1368
        %v1374 = vsel %vm1364, %v1359, %v1369
        %v1375 = vsel %vm1365, %v1360, %v1370
        %v1376 = vsel %vm1366, %v1361, %v1371
        %v1377 = vadd.f32 %v1372, 1.0
        %v1378 = vadd.f32 %v1373, 1.0
        %v1379 = vadd.f32 %v1374, 1.0
        %v1380 = vadd.f32 %v1375, 1.0
        %v1381 = vadd.f32 %v1376, 1.0
        %v1382 = vmul.f32 %v1257, %v1377
        %v1383 = vmul.f32 %v1258, %v1378
        %v1384 = vmul.f32 %v1259, %v1379
        %v1385 = vmul.f32 %v1260, %v1380
        %v1386 = vmul.f32 %v1261, %v1381
        %v1387 = vpack.c.bf16 %v1383, %v1382
        %v1388 = vpack.c.bf16 %v1385, %v1384
        %v1389 = vpack.c.bf16 %v1386, %v1386
        %1391 = vset.pattern.permute.xlu0 0
        %1392 = vperm.xlu0 %1391, %v420
        %v1393 = vpop.permute.xlu0 %1392
        %1396 = vset.pattern.permute.xlu0 0
        %1397 = vperm.xlu0 %1396, %v421
        %v1398 = vpop.permute.xlu0 %1397
        %v1402 = vunpack.c.l.b16 %v1067
        %v1403 = vunpack.c.l.b16 %v1068
        %v1404 = vpack.c.b16 %v1403, %v1402
        %vm1405 = vcmask 326656
        %v1407 = vsel %vm1405, %v1404, 0
        %vm1409 = vcmask 1043456
        %v1411 = vsel %vm1409, %v1389, 0
        %1413 = vmatprep.subr.bf16.mxu0 0
        %1414 = vmatpush1.bf16.msra.mxu0 %v1387
        %1415 = vmatprep.subr.bf16.mxu0 0
        %1416 = vmatpush1.bf16.msra.mxu0 %v1388
        %1417 = vmatprep.subr.bf16.mxu0 0
        %1418 = vmatpush1.bf16.msra.mxu0 %v1411
        %1419 = vmatprep.subr.bf16.mxu0 0
        %1420 = vmatpush1.bf16.msra.mxu0 0
        %1421 = vmatprep.subr.bf16.mxu0 0
        %1422 = vmatpush1.bf16.msra.mxu0 0
        %1423 = vmatprep.subr.bf16.mxu0 0
        %1424 = vmatpush1.bf16.msra.mxu0 0
        %1425 = vmatprep.subr.bf16.mxu0 0
        %1426 = vmatpush1.bf16.msra.mxu0 0
        %1427 = vmatprep.subr.bf16.mxu0 0
        %1428 = vmatpush1.bf16.msra.mxu0 0
        %1429 = vmatprep.subr.bf16.mxu0 0
        %1430 = vmatpush1.bf16.msra.mxu0 0
        %1431 = vmatprep.subr.bf16.mxu0 0
        %1432 = vmatpush1.bf16.msra.mxu0 0
        %1433 = vmatprep.subr.bf16.mxu0 0
        %1434 = vmatpush1.bf16.msra.mxu0 0
        %1435 = vmatprep.subr.bf16.mxu0 0
        %1436 = vmatpush1.bf16.msra.mxu0 0
        %1437 = vmatprep.subr.bf16.mxu0 0
        %1438 = vmatpush1.bf16.msra.mxu0 0
        %1439 = vmatprep.subr.bf16.mxu0 0
        %1440 = vmatpush1.bf16.msra.mxu0 0
        %1441 = vmatprep.subr.bf16.mxu0 0
        %1442 = vmatpush1.bf16.msra.mxu0 0
        %1443 = vmatprep.subr.bf16.mxu0 0
        %1444 = vmatpush1.bf16.msra.mxu0 0
        %1445 = vmatprep.mubr.bf16.mxu0 0
        %1446 = vmatmul.mubr.bf16.gmra.mrb[0].mxu0 %v1407
        %v1447 = vpop.f32.mrb[0].mxu0
        %v1448 = vadd.f32 %v1393, %v1447
        %v1449 = vpop.f32.mrb[0].mxu0
        %v1450 = vpop.f32.mrb[0].mxu0
        %v1451 = vadd.f32 %v1398, %v1450
        %v1452 = vpop.f32.mrb[0].mxu0
        %1453 = vdwg.mxu0
        %v1456 = vcombine.high %v1448, %v1448
        %v1458 = vunpack.c.l.s4 1966171168
        %v1459 = vunpack.c.0.s8 %v1458
        %v1460 = vlaneseq
        %v1461 = vshrl.u32 %v1460, 7
        %v1462 = vsub.s32 %v1459, %v1461
        %v1463 = vrot.slane %v1448, %v1462
        %v1465 = vunpack.c.l.s4 1966171168
        %v1466 = vunpack.c.0.s8 %v1465
        %v1467 = vlaneseq
        %v1468 = vshrl.u32 %v1467, 7
        %v1469 = vsub.s32 %v1466, %v1468
        %v1470 = vrot.slane %v1456, %v1469
        %v1471 = vcombine.high %v1463, %v1463
        %v1472 = vcombine.high %v1470, %v1470
        %v1474 = vunpack.c.l.s4 1966171168
        %v1475 = vunpack.c.0.s8 %v1474
        %v1476 = vlaneseq
        %v1477 = vshrl.u32 %v1476, 7
        %v1478 = vsub.s32 %v1475, %v1477
        %v1479 = vrot.slane %v1463, %v1478
        %v1481 = vunpack.c.l.s4 1966171168
        %v1482 = vunpack.c.0.s8 %v1481
        %v1483 = vlaneseq
        %v1484 = vshrl.u32 %v1483, 7
        %v1485 = vsub.s32 %v1482, %v1484
        %v1486 = vrot.slane %v1470, %v1485
        %v1488 = vunpack.c.l.s4 1966171168
        %v1489 = vunpack.c.0.s8 %v1488
        %v1490 = vlaneseq
        %v1491 = vshrl.u32 %v1490, 7
        %v1492 = vsub.s32 %v1489, %v1491
        %v1493 = vrot.slane %v1471, %v1492
        %v1495 = vunpack.c.l.s4 1966171168
        %v1496 = vunpack.c.0.s8 %v1495
        %v1497 = vlaneseq
        %v1498 = vshrl.u32 %v1497, 7
        %v1499 = vsub.s32 %v1496, %v1498
        %v1500 = vrot.slane %v1472, %v1499
        %v1501 = vcombine.high %v1479, %v1479
        %v1502 = vcombine.high %v1486, %v1486
        %v1503 = vcombine.high %v1493, %v1493
        %v1504 = vcombine.high %v1500, %v1500
        %v1505 = vcombine.high %v1451, %v1451
        %v1507 = vunpack.c.l.s4 1966171168
        %v1508 = vunpack.c.0.s8 %v1507
        %v1509 = vlaneseq
        %v1510 = vshrl.u32 %v1509, 7
        %v1511 = vsub.s32 %v1508, %v1510
        %v1512 = vrot.slane %v1451, %v1511
        %v1514 = vunpack.c.l.s4 1966171168
        %v1515 = vunpack.c.0.s8 %v1514
        %v1516 = vlaneseq
        %v1517 = vshrl.u32 %v1516, 7
        %v1518 = vsub.s32 %v1515, %v1517
        %v1519 = vrot.slane %v1505, %v1518
        %v1520 = vcombine.high %v1512, %v1512
        %v1521 = vcombine.high %v1519, %v1519
        %v1523 = vunpack.c.l.s4 1966171168
        %v1524 = vunpack.c.0.s8 %v1523
        %v1525 = vlaneseq
        %v1526 = vshrl.u32 %v1525, 7
        %v1527 = vsub.s32 %v1524, %v1526
        %v1528 = vrot.slane %v1512, %v1527
        %v1530 = vunpack.c.l.s4 1966171168
        %v1531 = vunpack.c.0.s8 %v1530
        %v1532 = vlaneseq
        %v1533 = vshrl.u32 %v1532, 7
        %v1534 = vsub.s32 %v1531, %v1533
        %v1535 = vrot.slane %v1519, %v1534
        %v1537 = vunpack.c.l.s4 1966171168
        %v1538 = vunpack.c.0.s8 %v1537
        %v1539 = vlaneseq
        %v1540 = vshrl.u32 %v1539, 7
        %v1541 = vsub.s32 %v1538, %v1540
        %v1542 = vrot.slane %v1520, %v1541
        %v1544 = vunpack.c.l.s4 1966171168
        %v1545 = vunpack.c.0.s8 %v1544
        %v1546 = vlaneseq
        %v1547 = vshrl.u32 %v1546, 7
        %v1548 = vsub.s32 %v1545, %v1547
        %v1549 = vrot.slane %v1521, %v1548
        %v1550 = vcombine.high %v1528, %v1528
        %v1551 = vcombine.high %v1535, %v1535
        %v1552 = vcombine.high %v1542, %v1542
        %v1553 = vcombine.high %v1549, %v1549
        %v1554 = vcombine.low %v1479, %v1493
        %v1555 = vcombine.low %v1501, %v1503
        %v1556 = vcombine.low %v1486, %v1500
        %v1557 = vcombine.low %v1502, %v1504
        %v1559 = vunpack.c.l.s4 1966171168
        %v1560 = vunpack.c.0.s8 %v1559
        %v1561 = vlaneseq
        %v1562 = vshrl.u32 %v1561, 7
        %v1563 = vsub.s32 %v1560, %v1562
        %v1564 = vrot.slane %v1554, %v1563
        %v1566 = vunpack.c.l.s4 1966171168
        %v1567 = vunpack.c.0.s8 %v1566
        %v1568 = vlaneseq
        %v1569 = vshrl.u32 %v1568, 7
        %v1570 = vsub.s32 %v1567, %v1569
        %v1571 = vrot.slane %v1555, %v1570
        %v1573 = vunpack.c.l.s4 1966171168
        %v1574 = vunpack.c.0.s8 %v1573
        %v1575 = vlaneseq
        %v1576 = vshrl.u32 %v1575, 7
        %v1577 = vsub.s32 %v1574, %v1576
        %v1578 = vrot.slane %v1556, %v1577
        %v1580 = vunpack.c.l.s4 1966171168
        %v1581 = vunpack.c.0.s8 %v1580
        %v1582 = vlaneseq
        %v1583 = vshrl.u32 %v1582, 7
        %v1584 = vsub.s32 %v1581, %v1583
        %v1585 = vrot.slane %v1557, %v1584
        %v1586 = vcombine.low %v1564, %v1571
        %v1587 = vcombine.low %v1578, %v1585
        %v1589 = vunpack.c.l.s4 1966171168
        %v1590 = vunpack.c.0.s8 %v1589
        %v1591 = vlaneseq
        %v1592 = vshrl.u32 %v1591, 7
        %v1593 = vsub.s32 %v1590, %v1592
        %v1594 = vrot.slane %v1586, %v1593
        %v1596 = vunpack.c.l.s4 1966171168
        %v1597 = vunpack.c.0.s8 %v1596
        %v1598 = vlaneseq
        %v1599 = vshrl.u32 %v1598, 7
        %v1600 = vsub.s32 %v1597, %v1599
        %v1601 = vrot.slane %v1587, %v1600
        %v1602 = vcombine.low %v1594, %v1601
        %v1603 = vcombine.low %v1528, %v1542
        %v1604 = vcombine.low %v1550, %v1552
        %v1605 = vcombine.low %v1535, %v1549
        %v1606 = vcombine.low %v1551, %v1553
        %v1608 = vunpack.c.l.s4 1966171168
        %v1609 = vunpack.c.0.s8 %v1608
        %v1610 = vlaneseq
        %v1611 = vshrl.u32 %v1610, 7
        %v1612 = vsub.s32 %v1609, %v1611
        %v1613 = vrot.slane %v1603, %v1612
        %v1615 = vunpack.c.l.s4 1966171168
        %v1616 = vunpack.c.0.s8 %v1615
        %v1617 = vlaneseq
        %v1618 = vshrl.u32 %v1617, 7
        %v1619 = vsub.s32 %v1616, %v1618
        %v1620 = vrot.slane %v1604, %v1619
        %v1622 = vunpack.c.l.s4 1966171168
        %v1623 = vunpack.c.0.s8 %v1622
        %v1624 = vlaneseq
        %v1625 = vshrl.u32 %v1624, 7
        %v1626 = vsub.s32 %v1623, %v1625
        %v1627 = vrot.slane %v1605, %v1626
        %v1629 = vunpack.c.l.s4 1966171168
        %v1630 = vunpack.c.0.s8 %v1629
        %v1631 = vlaneseq
        %v1632 = vshrl.u32 %v1631, 7
        %v1633 = vsub.s32 %v1630, %v1632
        %v1634 = vrot.slane %v1606, %v1633
        %v1635 = vcombine.low %v1613, %v1620
        %v1636 = vcombine.low %v1627, %v1634
        %v1638 = vunpack.c.l.s4 1966171168
        %v1639 = vunpack.c.0.s8 %v1638
        %v1640 = vlaneseq
        %v1641 = vshrl.u32 %v1640, 7
        %v1642 = vsub.s32 %v1639, %v1641
        %v1643 = vrot.slane %v1635, %v1642
        %v1645 = vunpack.c.l.s4 1966171168
        %v1646 = vunpack.c.0.s8 %v1645
        %v1647 = vlaneseq
        %v1648 = vshrl.u32 %v1647, 7
        %v1649 = vsub.s32 %v1646, %v1648
        %v1650 = vrot.slane %v1636, %v1649
        %v1651 = vcombine.low %v1643, %v1650
        %v1654 = vadd.f32 %v924, %v1602
        %v1655 = vadd.f32 %v925, %v1651
        %v1656 = vsel %vm525, %v1654, 0.0
        %1657 = vadd.xlane.f32.xlu0 %v1656
        %v1658 = vpop.xlane.xlu0 %1657
        %v1659 = vsel %vm525, %v1655, 0.0
        %1660 = vadd.xlane.f32.xlu0 %v1659
        %v1661 = vpop.xlane.xlu0 %1660
        %v1662 = vmul.f32 %v1658, %v589
        %v1663 = vmul.f32 %v1661, %v589
        %v1664 = vsub.f32 %v1654, %v1662
        %v1665 = vsub.f32 %v1655, %v1663
        %v1666 = vmul.f32 %v1664, %v1664
        %v1667 = vmul.f32 %v1665, %v1665
        %v1668 = vsel %vm525, %v1666, 0.0
        %1669 = vadd.xlane.f32.xlu0 %v1668
        %v1670 = vpop.xlane.xlu0 %1669
        %v1671 = vsel %vm525, %v1667, 0.0
        %1672 = vadd.xlane.f32.xlu0 %v1671
        %v1673 = vpop.xlane.xlu0 %1672
        %v1674 = vmul.f32 %v1670, %v589
        %v1675 = vmul.f32 %v1673, %v589
        %v1676 = vadd.f32 %v1674, 1e-05
        %v1677 = vadd.f32 %v1675, 1e-05
        %v1678 = vrsqrt.pop %v1676
        %v1679 = vrsqrt.pop %v1677
        %v1680 = vmul.f32 %v1664, %v1678
        %v1681 = vmul.f32 %v1665, %v1679
        %v1682 = vlaneseq
        %v1683 = vshrl.u32 %v1682, 7
        %v1684 = vsub.s32 6, %v1683
        %v1685 = vrot.slane %v413, %v1684
        %v1686 = vmul.f32 %v1680, %v1685
        %v1687 = vmul.f32 %v1681, %v1685
        %v1688 = vlaneseq
        %v1689 = vshrl.u32 %v1688, 7
        %v1690 = vsub.s32 7, %v1689
        %v1691 = vrot.slane %v413, %v1690
        %v1692 = vadd.f32 %v1686, %v1691
        %v1693 = vadd.f32 %v1687, %v1691
        %v1694 = vld [vmem:[%s5] sm:$0xf]
        %v1695 = vld [vmem:[%s5 + $0x4] sm:$0xf]
        %v1696 = vpack.c.bf16 %v1693, %v1692
        %v1697 = vld [vmem:[%s10] sm:$0x1]
        %v1699 = vlaneseq
        %v1700 = vshrl.u32 %v1699, 7
        %v1701 = vsub.s32 0, %v1700
        %v1702 = vrot.slane %v1697, %v1701
        %v1706 = vunpack.c.l.b16 %v1694
        %v1707 = vunpack.c.l.b16 %v1695
        %v1708 = vpack.c.b16 %v1707, %v1706
        %v1711 = vsel %vm525, %v1696, 0
        %1713 = vmatprep.subr.bf16.mxu0 0
        %1714 = vmatpush1.bf16.msra.mxu0 %v1708
        %1715 = vmatprep.subr.bf16.mxu0 0
        %1716 = vmatpush1.bf16.msra.mxu0 0
        %1717 = vmatprep.subr.bf16.mxu0 0
        %1718 = vmatpush1.bf16.msra.mxu0 0
        %1719 = vmatprep.subr.bf16.mxu0 0
        %1720 = vmatpush1.bf16.msra.mxu0 0
        %1721 = vmatprep.subr.bf16.mxu0 0
        %1722 = vmatpush1.bf16.msra.mxu0 0
        %1723 = vmatprep.subr.bf16.mxu0 0
        %1724 = vmatpush1.bf16.msra.mxu0 0
        %1725 = vmatprep.subr.bf16.mxu0 0
        %1726 = vmatpush1.bf16.msra.mxu0 0
        %1727 = vmatprep.subr.bf16.mxu0 0
        %1728 = vmatpush1.bf16.msra.mxu0 0
        %1729 = vmatprep.subr.bf16.mxu0 0
        %1730 = vmatpush1.bf16.msra.mxu0 0
        %1731 = vmatprep.subr.bf16.mxu0 0
        %1732 = vmatpush1.bf16.msra.mxu0 0
        %1733 = vmatprep.subr.bf16.mxu0 0
        %1734 = vmatpush1.bf16.msra.mxu0 0
        %1735 = vmatprep.subr.bf16.mxu0 0
        %1736 = vmatpush1.bf16.msra.mxu0 0
        %1737 = vmatprep.subr.bf16.mxu0 0
        %1738 = vmatpush1.bf16.msra.mxu0 0
        %1739 = vmatprep.subr.bf16.mxu0 0
        %1740 = vmatpush1.bf16.msra.mxu0 0
        %1741 = vmatprep.subr.bf16.mxu0 0
        %1742 = vmatpush1.bf16.msra.mxu0 0
        %1743 = vmatprep.subr.bf16.mxu0 0
        %1744 = vmatpush1.bf16.msra.mxu0 0
        %1745 = vmatprep.mubr.bf16.mxu0 0
        %1746 = vmatmul.mubr.bf16.gmra.mrb[0].mxu0 %v1711
        %v1747 = vpop.f32.mrb[0].mxu0
        %v1748 = vadd.f32 %v1702, %v1747
        %v1749 = vpop.f32.mrb[0].mxu0
        %v1750 = vpop.f32.mrb[0].mxu0
        %v1751 = vadd.f32 %v1702, %v1750
        %v1752 = vpop.f32.mrb[0].mxu0
        %1753 = vdwg.mxu0
        %v1754 = vmul.f32 %v1748, 0.5
        %v1755 = vmul.f32 %v1751, 0.5
        %v1756 = vmul.f32 %v1748, 0.70710677
        %v1757 = vmul.f32 %v1751, 0.70710677
        %v1758 = vand.u32 2147483647, %v1756
        %v1759 = vand.u32 2147483647, %v1757
        %v1760 = vmul.f32 %v1758, 0.3275911
        %v1761 = vmul.f32 %v1759, 0.3275911
        %v1762 = vadd.f32 %v1760, 1.0
        %v1763 = vadd.f32 %v1761, 1.0
        %v1764 = vrcp.pop %v1762
        %v1765 = vrcp.pop %v1763
        %v1766 = vmul.f32 %v1764, 1.0614054
        %v1767 = vmul.f32 %v1765, 1.0614054
        %v1768 = vadd.f32 %v1766, -1.4531521
        %v1769 = vadd.f32 %v1767, -1.4531521
        %v1770 = vmul.f32 %v1768, %v1764
        %v1771 = vmul.f32 %v1769, %v1765
        %v1772 = vadd.f32 %v1770, 1.4214138
        %v1773 = vadd.f32 %v1771, 1.4214138
        %v1774 = vmul.f32 %v1772, %v1764
        %v1775 = vmul.f32 %v1773, %v1765
        %v1776 = vadd.f32 %v1774, -0.28449672
        %v1777 = vadd.f32 %v1775, -0.28449672
        %v1778 = vmul.f32 %v1776, %v1764
        %v1779 = vmul.f32 %v1777, %v1765
        %v1780 = vadd.f32 %v1778, 0.2548296
        %v1781 = vadd.f32 %v1779, 0.2548296
        %v1782 = vmul.f32 %v1780, %v1764
        %v1783 = vmul.f32 %v1781, %v1765
        %v1784 = vsub.f32 0.0, %v1758
        %v1785 = vsub.f32 0.0, %v1759
        %v1786 = vmul.f32 %v1784, %v1758
        %v1787 = vmul.f32 %v1785, %v1759
        %v1788 = vmul.f32 %v1786, 1.442695
        %v1789 = vpow.pop %v1788
        %v1790 = vmul.f32 %v1787, 1.442695
        %v1791 = vpow.pop %v1790
        %v1792 = vmul.f32 %v1782, %v1789
        %v1793 = vmul.f32 %v1783, %v1791
        %v1794 = vsub.f32 1.0, %v1792
        %v1795 = vsub.f32 1.0, %v1793
        %vm1796 = vcmp.ge.f32.partialorder %v1756, 0.0
        %vm1797 = vcmp.ge.f32.partialorder %v1757, 0.0
        %v1798 = vsub.f32 0.0, %v1794
        %v1799 = vsub.f32 0.0, %v1795
        %v1800 = vsel %vm1796, %v1794, %v1798
        %v1801 = vsel %vm1797, %v1795, %v1799
        %v1802 = vadd.f32 %v1800, 1.0
        %v1803 = vadd.f32 %v1801, 1.0
        %v1804 = vmul.f32 %v1754, %v1802
        %v1805 = vmul.f32 %v1755, %v1803
        %v1806 = vld [vmem:[%s6] sm:$0xf]
        %v1807 = vld [vmem:[%s6 + $0x4] sm:$0xf]
        %v1808 = vld [vmem:[%s6 + $0x8] sm:$0xf]
        %v1809 = vld [vmem:[%s6 + $0xc] sm:$0xf]
        %v1810 = vld [vmem:[%s6 + $0x10] sm:$0xf]
        %v1811 = vld [vmem:[%s6 + $0x14] sm:$0xf]
        %v1812 = vld [vmem:[%s6 + $0x18] sm:$0xf]
        %v1813 = vld [vmem:[%s6 + $0x1c] sm:$0xf]
        %v1814 = vld [vmem:[%s6 + $0x20] sm:$0xf]
        %v1815 = vld [vmem:[%s6 + $0x24] sm:$0xf]
        %v1816 = vld [vmem:[%s6 + $0x28] sm:$0xf]
        %v1817 = vld [vmem:[%s6 + $0x2c] sm:$0xf]
        %v1818 = vld [vmem:[%s6 + $0x30] sm:$0xf]
        %v1819 = vld [vmem:[%s6 + $0x34] sm:$0xf]
        %v1820 = vld [vmem:[%s6 + $0x38] sm:$0xf]
        %v1821 = vld [vmem:[%s6 + $0x3c] sm:$0xf]
        %v1822 = vpack.c.bf16 %v1805, %v1804
        %v1823 = vlaneseq
        %v1824 = vshrl.u32 %v1823, 7
        %v1825 = vsub.s32 0, %v1824
        %v1826 = vrot.slane %v414, %v1825
        %v1843 = vunpack.c.l.b16 %v1806
        %v1844 = vunpack.c.l.b16 %v1807
        %v1845 = vunpack.c.l.b16 %v1808
        %v1846 = vunpack.c.l.b16 %v1809
        %v1847 = vunpack.c.l.b16 %v1810
        %v1848 = vunpack.c.l.b16 %v1811
        %v1849 = vunpack.c.l.b16 %v1812
        %v1850 = vunpack.c.l.b16 %v1813
        %v1851 = vunpack.c.l.b16 %v1814
        %v1852 = vunpack.c.l.b16 %v1815
        %v1853 = vunpack.c.l.b16 %v1816
        %v1854 = vunpack.c.l.b16 %v1817
        %v1855 = vunpack.c.l.b16 %v1818
        %v1856 = vunpack.c.l.b16 %v1819
        %v1857 = vunpack.c.l.b16 %v1820
        %v1858 = vunpack.c.l.b16 %v1821
        %v1859 = vpack.c.b16 %v1844, %v1843
        %v1860 = vpack.c.b16 %v1846, %v1845
        %v1861 = vpack.c.b16 %v1848, %v1847
        %v1862 = vpack.c.b16 %v1850, %v1849
        %v1863 = vpack.c.b16 %v1852, %v1851
        %v1864 = vpack.c.b16 %v1854, %v1853
        %v1865 = vpack.c.b16 %v1856, %v1855
        %v1866 = vpack.c.b16 %v1858, %v1857
        %1875 = vmatprep.subr.bf16.mxu0 0
        %1876 = vmatpush1.bf16.msra.mxu0 %v1859
        %1877 = vmatprep.subr.bf16.mxu0 0
        %1878 = vmatpush1.bf16.msra.mxu0 %v1860
        %1879 = vmatprep.subr.bf16.mxu0 0
        %1880 = vmatpush1.bf16.msra.mxu0 %v1861
        %1881 = vmatprep.subr.bf16.mxu0 0
        %1882 = vmatpush1.bf16.msra.mxu0 %v1862
        %1883 = vmatprep.subr.bf16.mxu0 0
        %1884 = vmatpush1.bf16.msra.mxu0 %v1863
        %1885 = vmatprep.subr.bf16.mxu0 0
        %1886 = vmatpush1.bf16.msra.mxu0 %v1864
        %1887 = vmatprep.subr.bf16.mxu0 0
        %1888 = vmatpush1.bf16.msra.mxu0 %v1865
        %1889 = vmatprep.subr.bf16.mxu0 0
        %1890 = vmatpush1.bf16.msra.mxu0 %v1866
        %1891 = vmatprep.subr.bf16.mxu0 0
        %1892 = vmatpush1.bf16.msra.mxu0 0
        %1893 = vmatprep.subr.bf16.mxu0 0
        %1894 = vmatpush1.bf16.msra.mxu0 0
        %1895 = vmatprep.subr.bf16.mxu0 0
        %1896 = vmatpush1.bf16.msra.mxu0 0
        %1897 = vmatprep.subr.bf16.mxu0 0
        %1898 = vmatpush1.bf16.msra.mxu0 0
        %1899 = vmatprep.subr.bf16.mxu0 0
        %1900 = vmatpush1.bf16.msra.mxu0 0
        %1901 = vmatprep.subr.bf16.mxu0 0
        %1902 = vmatpush1.bf16.msra.mxu0 0
        %1903 = vmatprep.subr.bf16.mxu0 0
        %1904 = vmatpush1.bf16.msra.mxu0 0
        %1905 = vmatprep.subr.bf16.mxu0 0
        %1906 = vmatpush1.bf16.msra.mxu0 0
        %1907 = vmatprep.mubr.bf16.mxu0 0
        %1908 = vmatmul.mubr.bf16.gmra.mrb[0].mxu0 %v1822
        %v1909 = vpop.f32.mrb[0].mxu0
        %v1910 = vadd.f32 %v1826, %v1909
        %v1911 = vpop.f32.mrb[0].mxu0
        %v1912 = vpop.f32.mrb[0].mxu0
        %v1913 = vadd.f32 %v1826, %v1912
        %v1914 = vpop.f32.mrb[0].mxu0
        %1915 = vdwg.mxu0
        %v1916 = vadd.f32 %v1654, %v1910
        %v1917 = vadd.f32 %v1655, %v1913
        %1918 = vst.msk [vmem:[%s406] sm:$0xff] %vm525, %v1916
        %1919 = vst.msk [vmem:[%s406 + $0x8] sm:$0xff] %vm525, %v1917
        %s1920 = sand.u32 %s291, 1
        %s1921 = scalar_lea.sflag [#allocation3], %s1920
        %s1922 = sand.u32 %s291, 1
        %s1923 = smul.addr %s1922, 16
        %s1924 = scalar_lea.vmem [#allocation2], %s1923
        // Predicated region
        $region69: #{tpu_custom_call.1} parent=67 // pred_check
          %p1925 = pneg %p301
        $region70: #{tpu_custom_call.1} parent=67 // pred_check_branch
          %1927 = sbr.rel (%p1925) target = $region72
        $region71: #{tpu_custom_call.1} parent=67 // pred_region
          %s1929 = ssub.s32 256, 256
          %1930 = vsyncadd %s1921, %s1929
          %s1931 = smul.addr %s26, 2
          %s1932 = smul.addr %s1931, 128
          %s1933 = scalar_lea.hbm %s12, %s1932
          %s1934 = sshll.u32 %s1924, 4
          %s1935 = int_to_ptr.vmem [resolvable:$true] %s1934
          %1940 = dma.vmem_to_hbm [thread:$0]  %s1935, 256, %s1933, %s1921, 128, 128, 8
        $region72: #{tpu_custom_call.1} parent=67 // pred_fallthru
          _
      $region68: #{tpu_custom_call.1} parent=5 // pred_fallthru
        _
      %p1941 = scmp.le.s32.totalorder 2, %s21
      // Predicated region
      $region73: #{tpu_custom_call.1} parent=5 // pred_check
        %p1942 = pneg %p1941
      $region74: #{tpu_custom_call.1} parent=5 // pred_check_branch
        %1944 = sbr.rel (%p1942) target = $region76
      $region75: #{tpu_custom_call.1} parent=5 // pred_region
        %s1945 = ssub.s32 %s21, 2
        // Predicated region
        $region77: #{tpu_custom_call.1} parent=75 // pred_check
          %p1946 = pneg %p307
        $region78: #{tpu_custom_call.1} parent=75 // pred_check_branch
          %1948 = sbr.rel (%p1946) target = $region80
        $region79: #{tpu_custom_call.1} parent=75 // pred_region
          %s1949 = sand.u32 %s292, 1
          %s1950 = scalar_lea.sflag [#allocation3], %s1949
          %s1951 = sand.u32 %s292, 1
          %s1952 = smul.addr %s1951, 16
          %s1953 = scalar_lea.vmem [#allocation2], %s1952
          %1954 = dma.done %s1950, 256
        $region80: #{tpu_custom_call.1} parent=75 // pred_fallthru
          _
      $region76: #{tpu_custom_call.1} parent=5 // pred_fallthru
        _
    $region6: #{tpu_custom_call.1} parent=1 // loop_footer
      %s25 = sadd.s32 1, %s21
    $region7: #{tpu_custom_call.1} parent=1 // loop_footer_branch
      %20 = sbr.rel target = $region3
    $region8: #{tpu_custom_call.1} parent=1 // loop_exit
      _
    %1955 = vsyncpa [#allocation3], 1
    %s1956 = scalar_lea.sflag [#allocation3], 1
    %1957 = vsyncpa %s1956, 1

</llo_original>
